<compile_context>
chip_gen: v6e
topology: v6e:2x2x1
jax: 0.10.0
libtpu: 0.0.40
codegen_flags: <defaults>
</compile_context>

<pallas_src>
import jax
import jax.numpy as jnp
from jax.experimental import pallas as pl
from jax.experimental.pallas import tpu as pltpu


def stopandhop_kernel(vals_ref,
                      w_x3_ref, w_m3_ref, b3_ref,
                      wrz_h_ref, wh_h_ref,
                      wch_ref, bch_ref,
                      dx_ref, dh_ref, wt_ref,
                      logits_ref, halt_ref):
    f32 = jnp.float32
    bf16 = jnp.bfloat16
    T, TB, V = vals_ref.shape
    H = wrz_h_ref.shape[0]
    C = logits_ref.shape[1]

    # weights (bf16 matmul operands, f32 accumulation)
    w_x3 = w_x3_ref[...]        # (V, 3H)  [r|z|h] x-side blocks
    w_m3 = w_m3_ref[...]        # (V, 3H)  [r|z|h] m-side blocks
    wrz_h = wrz_h_ref[...]      # (H, 2H)  [r|z] recurrent blocks
    wh_h = wh_h_ref[...]        # (H, H)   h-tilde recurrent block
    wch = wch_ref[...]          # (H, C+1) classifier + folded halting head
    wt = wt_ref[0, 0]           # scalar (SMEM)

    # hoisted broadcasts (JAX does not CSE broadcast_in_dim inside the unrolled loop)
    b3 = jnp.broadcast_to(b3_ref[...], (TB, 3 * H))          # [br|bz|bh]
    bch = jnp.broadcast_to(bch_ref[...], (TB, C + 1))
    delta_x = jnp.broadcast_to(dx_ref[...], (TB, V))          # exp(-relu(b_gamma_x)), dt == 0
    delta_h = jnp.broadcast_to(dh_ref[...], (TB, H))          # exp(-relu(b_gamma_h)), dt == 0
    one_minus_dx = 1.0 - delta_x

    # recurrence state (all f32)
    h = jnp.zeros((TB, H), f32)
    x_prime = jnp.zeros((TB, V), f32)
    preds = jnp.full((TB, C), -1.0, f32)
    halt_pts = jnp.full((TB, 1), -1.0, f32)
    sum_mx = jnp.zeros((TB, V), f32)
    sum_m = jnp.zeros((TB, V), f32)
    last_logits = jnp.zeros((TB, C), f32)

    # statically unrolled time loop: T is a compile-time constant, so vals_ref[t] is a
    # free static slice and the whole recurrence schedule is visible to the compiler.
    for t in range(T):
        x = vals_ref[t]                                   # (TB, V)
        m = (x != 0.0).astype(f32)                        # masks[t]

        # running mean of observed values: (masks[:t+1]*vals[:t+1]).sum(0)/masks[:t+1].sum(0)
        sum_mx = sum_mx + m * x
        sum_m = sum_m + m
        observed = sum_m > 0.0
        x_mean = jnp.where(observed,
                           sum_mx / jnp.where(observed, sum_m, 1.0),
                           0.0)                           # NaN (0/0) -> 0.0

        # ---- decay_update (GRU-D cell) ----
        h_dec = delta_h * h
        x_prime = m * x + (1.0 - m) * x_prime
        x_hat = m * x + (1.0 - m) * (delta_x * x_prime + one_minus_dx * x_mean)

        # fused x/m contributions of all three gates (no lane concat): (TB, 3H)
        xm = (jnp.dot(x_hat.astype(bf16), w_x3, preferred_element_type=f32)
              + jnp.dot(m.astype(bf16), w_m3, preferred_element_type=f32)
              + b3)

        rz = jax.nn.sigmoid(
            xm[:, :2 * H]
            + jnp.dot(h_dec.astype(bf16), wrz_h, preferred_element_type=f32))
        r = rz[:, :H]
        z = rz[:, H:]
        h_tilde = jnp.tanh(
            xm[:, 2 * H:]
            + jnp.dot((r * h_dec).astype(bf16), wh_h, preferred_element_type=f32))
        h = (1.0 - z) * h_dec + z * h_tilde

        # ---- classifier + folded halting head: single H -> (C+1) matmul ----
        out = jnp.dot(h.astype(bf16), wch, preferred_element_type=f32) + bch
        logits = out[:, :C]
        hp_logit = out[:, C:] + wt * (t / T)              # pre-activation
        halt = hp_logit >= 0.0                            # sigmoid(x) >= 0.5  <=>  x >= 0

        # latch first-halt rows (row-level flag, robust to logits == -1.0)
        first_halt = halt & (halt_pts == -1.0)            # (TB, 1)
        preds = jnp.where(first_halt, logits, preds)
        halt_pts = jnp.where(first_halt, f32(t + 1), halt_pts)
        last_logits = logits

    not_halted = halt_pts == -1.0
    logits_ref[...] = jnp.where(not_halted, last_logits, preds)
    halt_ref[...] = jnp.where(not_halted, f32(T), halt_pts)


def init_params(key, V, H, C):
    """Deterministic synthetic weights; nn.Linear weights stored transposed (in, out)."""
    def lin(k, n_in, n_out, b_scale=0.1):
        k1, k2 = jax.random.split(k)
        w = jax.random.normal(k1, (n_in, n_out), jnp.float32) * 0.1
        b = jax.random.normal(k2, (1, n_out), jnp.float32) * b_scale
        return w, b

    ks = jax.random.split(key, 7)
    comb = H + 2 * V
    p = {}
    p["wz"], p["bz"] = lin(ks[0], comb, H)
    p["wr"], p["br"] = lin(ks[1], comb, H)
    p["wh"], p["bh"] = lin(ks[2], comb, H)
    p["wgx"], p["bgx"] = lin(ks[3], V, V)          # gamma_x
    p["wgh"], p["bgh"] = lin(ks[4], V, H)          # gamma_h
    p["wcls"], p["bcls"] = lin(ks[5], H, C)        # Classifier
    p["whp"], p["bhp"] = lin(ks[6], H + C, 1)      # halting policy
    p["wt"] = jnp.array([[2.0]], jnp.float32)      # time bias of halting policy
    return p


def prepare_params(params):
    """Host-side weight prep: split combined [x|h|m] Linear weights, fuse the r/z gates,
    fold the halting head into the classifier, precompute decay gates, cast to bf16."""
    bf16 = jnp.bfloat16
    V = params["wgx"].shape[0]
    H = params["wz"].shape[1]

    def split(w):   # combined layout is [x_hat (V), h (H), m (V)]
        return w[:V], w[V:V + H], w[V + H:]

    wr_x, wr_h, wr_m = split(params["wr"])
    wz_x, wz_h, wz_m = split(params["wz"])
    wh_x, wh_h, wh_m = split(params["wh"])

    w_x3 = jnp.concatenate([wr_x, wz_x, wh_x], axis=1)                     # (V, 3H)
    w_m3 = jnp.concatenate([wr_m, wz_m, wh_m], axis=1)                     # (V, 3H)
    b3 = jnp.concatenate([params["br"], params["bz"], params["bh"]], axis=1)  # (1, 3H)
    wrz_h = jnp.concatenate([wr_h, wz_h], axis=1)                          # (H, 2H)

    # fold halting policy into the classifier head:
    #   hp_logit = h@whp[:H] + (h@wcls + bcls)@whp[H:] + bhp
    wcls, bcls = params["wcls"], params["bcls"]
    whp, bhp = params["whp"], params["bhp"]
    whp_eff = whp[:H] + wcls @ whp[H:]                                     # (H, 1)
    bhp_eff = bhp + bcls @ whp[H:]                                         # (1, 1)
    wch = jnp.concatenate([wcls, whp_eff], axis=1)                         # (H, C+1)
    bch = jnp.concatenate([bcls, bhp_eff], axis=1)                         # (1, C+1)

    # decay gates with dt == 0: gamma(0) = bias, so delta = exp(-relu(bias))
    delta_x = jnp.exp(-jnp.maximum(0.0, params["bgx"]))                    # (1, V)
    delta_h = jnp.exp(-jnp.maximum(0.0, params["bgh"]))                    # (1, H)

    return dict(
        w_x3=w_x3.astype(bf16), w_m3=w_m3.astype(bf16), b3=b3,
        wrz_h=wrz_h.astype(bf16), wh_h=wh_h.astype(bf16),
        wch=wch.astype(bf16), bch=bch,
        delta_x=delta_x, delta_h=delta_h,
        wt=params["wt"],
    )


def stop_and_hop_forward(data_btv, params, *, batch_tile=None):
    """data_btv: (B, T, V) float32. Returns (logits, out_times_mean, halt_points)."""
    vals = jnp.transpose(data_btv, (1, 0, 2)).astype(jnp.float32)   # (T, B, V) time-major
    T, B, V = vals.shape
    C = params["wcls"].shape[1]
    prep = prepare_params(params)

    TB = B if batch_tile is None else batch_tile
    assert B % TB == 0
    nb = B // TB

    vmem = pltpu.MemorySpace.VMEM
    smem = pltpu.MemorySpace.SMEM
    wspec = pl.BlockSpec(memory_space=vmem)   # small weights: resident, untiled

    in_specs = [
        pl.BlockSpec((T, TB, V), lambda b: (0, b, 0)),   # vals, tiled on batch
        wspec,  # w_x3
        wspec,  # w_m3
        wspec,  # b3
        wspec,  # wrz_h
        wspec,  # wh_h
        wspec,  # wch
        wspec,  # bch
        wspec,  # delta_x
        wspec,  # delta_h
        pl.BlockSpec(memory_space=smem),                 # wt scalar -> SMEM
    ]
    out_specs = (pl.BlockSpec((TB, C), lambda b: (b, 0)),
                 pl.BlockSpec((TB, 1), lambda b: (b, 0)))

    logits, halt = pl.pallas_call(
        stopandhop_kernel,
        out_shape=(jax.ShapeDtypeStruct((B, C), jnp.float32),
                   jax.ShapeDtypeStruct((B, 1), jnp.float32)),
        grid=(nb,),
        in_specs=in_specs,
        out_specs=out_specs,
        compiler_params=pltpu.CompilerParams(
            dimension_semantics=("parallel",),           # batch-parallel (2nd TC on v7x)
            vmem_limit_bytes=32 * 1024 * 1024),
    )(vals, prep["w_x3"], prep["w_m3"], prep["b3"],
      prep["wrz_h"], prep["wh_h"], prep["wch"], prep["bch"],
      prep["delta_x"], prep["delta_h"], prep["wt"])

    # past == zeros in the reference forward, so past.cumsum(0)[:, :, 0].T is all zeros
    # and getTimes(...) / out_times.mean() is exactly 0.0.
    out_times_mean = jnp.float32(0.0)
    return logits, out_times_mean, halt[:, 0]


if __name__ == "__main__":
    # B=batch, T=nsteps, V=N_FEATURES, H=nhid, C=N_CLASSES.
    B, T, V, H, C = 8, 8, 8, 32, 4

    key = jax.random.PRNGKey(0)
    k_data, k_mask, k_param = jax.random.split(key, 3)

    data = jax.random.normal(k_data, (B, T, V), jnp.float32)
    # zero out ~30% of entries so the observation masks / running-mean path is exercised
    keep = (jax.random.uniform(k_mask, (B, T, V)) > 0.3).astype(jnp.float32)
    data = data * keep

    params = init_params(k_param, V, H, C)

    logits, out_times_mean, halt_points = stop_and_hop_forward(data, params)
    jax.block_until_ready((logits, out_times_mean, halt_points))

    assert logits.shape == (B, C)
    assert halt_points.shape == (B,)
    assert bool(jnp.all(jnp.isfinite(logits)))
    assert bool(jnp.all((halt_points >= 1.0) & (halt_points <= float(T))))
    print("KERNEL_OK")
</pallas_src>

<mosaic_0001>
module attributes {stable_mosaic.version = 11 : i64} {
  func.func @stopandhop_kernel(%arg0: i32, %arg1: memref<8x8x8xf32, #tpu.memory_space<vmem>>, %arg2: memref<8x96xbf16, #tpu.memory_space<vmem>>, %arg3: memref<8x96xbf16, #tpu.memory_space<vmem>>, %arg4: memref<1x96xf32, #tpu.memory_space<vmem>>, %arg5: memref<32x64xbf16, #tpu.memory_space<vmem>>, %arg6: memref<32x32xbf16, #tpu.memory_space<vmem>>, %arg7: memref<32x5xbf16, #tpu.memory_space<vmem>>, %arg8: memref<1x5xf32, #tpu.memory_space<vmem>>, %arg9: memref<1x8xf32, #tpu.memory_space<vmem>>, %arg10: memref<1x32xf32, #tpu.memory_space<vmem>>, %arg11: memref<1x1xf32, #tpu.memory_space<smem>>, %arg12: memref<8x4xf32, #tpu.memory_space<vmem>>, %arg13: memref<8x1xf32, #tpu.memory_space<vmem>>) attributes {dimension_semantics = [#tpu.dimension_semantics<parallel>], iteration_bounds = array<i64: 1>, scalar_prefetch = 0 : i64, scratch_operands = 0 : i64, tpu.core_type = #tpu.core_type<tc>, window_params = [{transform_indices = @transform_0, window_bounds = array<i64: 8, 8, 8>}, {pipeline_mode = #tpu.pipeline_mode<synchronous>, transform_indices = @transform_1, window_bounds = array<i64: 8, 96>}, {pipeline_mode = #tpu.pipeline_mode<synchronous>, transform_indices = @transform_2, window_bounds = array<i64: 8, 96>}, {pipeline_mode = #tpu.pipeline_mode<synchronous>, transform_indices = @transform_3, window_bounds = array<i64: 1, 96>}, {pipeline_mode = #tpu.pipeline_mode<synchronous>, transform_indices = @transform_4, window_bounds = array<i64: 32, 64>}, {pipeline_mode = #tpu.pipeline_mode<synchronous>, transform_indices = @transform_5, window_bounds = array<i64: 32, 32>}, {pipeline_mode = #tpu.pipeline_mode<synchronous>, transform_indices = @transform_6, window_bounds = array<i64: 32, 5>}, {pipeline_mode = #tpu.pipeline_mode<synchronous>, transform_indices = @transform_7, window_bounds = array<i64: 1, 5>}, {pipeline_mode = #tpu.pipeline_mode<synchronous>, transform_indices = @transform_8, window_bounds = array<i64: 1, 8>}, {pipeline_mode = #tpu.pipeline_mode<synchronous>, transform_indices = @transform_9, window_bounds = array<i64: 1, 32>}, {transform_indices = @transform_10, window_bounds = array<i64: 1, 1>}, {transform_indices = @transform_11, window_bounds = array<i64: 8, 4>}, {transform_indices = @transform_12, window_bounds = array<i64: 8, 1>}]} {
    %c0 = arith.constant 0 : index
    %c0_0 = arith.constant 0 : index
    %0 = vector.load %arg2[%c0, %c0_0] : memref<8x96xbf16, #tpu.memory_space<vmem>>, vector<8x96xbf16>
    %c0_1 = arith.constant 0 : index
    %c0_2 = arith.constant 0 : index
    %1 = vector.load %arg3[%c0_1, %c0_2] : memref<8x96xbf16, #tpu.memory_space<vmem>>, vector<8x96xbf16>
    %c0_3 = arith.constant 0 : index
    %c0_4 = arith.constant 0 : index
    %2 = vector.load %arg5[%c0_3, %c0_4] : memref<32x64xbf16, #tpu.memory_space<vmem>>, vector<32x64xbf16>
    %c0_5 = arith.constant 0 : index
    %c0_6 = arith.constant 0 : index
    %3 = vector.load %arg6[%c0_5, %c0_6] : memref<32x32xbf16, #tpu.memory_space<vmem>>, vector<32x32xbf16>
    %c0_7 = arith.constant 0 : index
    %c0_8 = arith.constant 0 : index
    %4 = vector.load %arg7[%c0_7, %c0_8] : memref<32x5xbf16, #tpu.memory_space<vmem>>, vector<32x5xbf16>
    %c0_9 = arith.constant 0 : index
    %c0_10 = arith.constant 0 : index
    %5 = memref.load %arg11[%c0_9, %c0_10] : memref<1x1xf32, #tpu.memory_space<smem>>
    %c0_11 = arith.constant 0 : index
    %c0_12 = arith.constant 0 : index
    %6 = vector.load %arg4[%c0_11, %c0_12] : memref<1x96xf32, #tpu.memory_space<vmem>>, vector<1x96xf32>
    %7 = vector.shape_cast %6 : vector<1x96xf32> to vector<1x96xf32>
    %8 = vector.broadcast %7 : vector<1x96xf32> to vector<8x96xf32>
    %c0_13 = arith.constant 0 : index
    %c0_14 = arith.constant 0 : index
    %9 = vector.load %arg8[%c0_13, %c0_14] : memref<1x5xf32, #tpu.memory_space<vmem>>, vector<1x5xf32>
    %10 = vector.shape_cast %9 : vector<1x5xf32> to vector<1x5xf32>
    %11 = vector.broadcast %10 : vector<1x5xf32> to vector<8x5xf32>
    %c0_15 = arith.constant 0 : index
    %c0_16 = arith.constant 0 : index
    %12 = vector.load %arg9[%c0_15, %c0_16] : memref<1x8xf32, #tpu.memory_space<vmem>>, vector<1x8xf32>
    %13 = vector.shape_cast %12 : vector<1x8xf32> to vector<1x8xf32>
    %14 = vector.broadcast %13 : vector<1x8xf32> to vector<8x8xf32>
    %c0_17 = arith.constant 0 : index
    %c0_18 = arith.constant 0 : index
    %15 = vector.load %arg10[%c0_17, %c0_18] : memref<1x32xf32, #tpu.memory_space<vmem>>, vector<1x32xf32>
    %16 = vector.shape_cast %15 : vector<1x32xf32> to vector<1x32xf32>
    %17 = vector.broadcast %16 : vector<1x32xf32> to vector<8x32xf32>
    %cst = arith.constant 1.000000e+00 : f32
    %18 = vector.broadcast %cst : f32 to vector<8x8xf32>
    %19 = arith.subf %18, %14 : vector<8x8xf32>
    %cst_19 = arith.constant 0.000000e+00 : f32
    %20 = vector.broadcast %cst_19 : f32 to vector<8x32xf32>
    %cst_20 = arith.constant 0.000000e+00 : f32
    %21 = vector.broadcast %cst_20 : f32 to vector<8x8xf32>
    %cst_21 = arith.constant -1.000000e+00 : f32
    %22 = vector.broadcast %cst_21 : f32 to vector<8x4xf32>
    %cst_22 = arith.constant -1.000000e+00 : f32
    %23 = vector.broadcast %cst_22 : f32 to vector<8x1xf32>
    %cst_23 = arith.constant 0.000000e+00 : f32
    %24 = vector.broadcast %cst_23 : f32 to vector<8x8xf32>
    %cst_24 = arith.constant 0.000000e+00 : f32
    %25 = vector.broadcast %cst_24 : f32 to vector<8x8xf32>
    %c0_25 = arith.constant 0 : index
    %c0_26 = arith.constant 0 : index
    %c0_27 = arith.constant 0 : index
    %26 = vector.load %arg1[%c0_25, %c0_26, %c0_27] : memref<8x8x8xf32, #tpu.memory_space<vmem>>, vector<1x8x8xf32>
    %27 = vector.shape_cast %26 : vector<1x8x8xf32> to vector<8x8xf32>
    %cst_28 = arith.constant 0.000000e+00 : f32
    %28 = vector.broadcast %cst_28 : f32 to vector<8x8xf32>
    %29 = arith.cmpf one, %27, %28 : vector<8x8xf32>
    %30 = arith.extui %29 : vector<8x8xi1> to vector<8x8xi32>
    %31 = arith.sitofp %30 : vector<8x8xi32> to vector<8x8xf32>
    %32 = arith.mulf %31, %27 : vector<8x8xf32>
    %33 = arith.addf %24, %32 : vector<8x8xf32>
    %34 = arith.addf %25, %31 : vector<8x8xf32>
    %cst_29 = arith.constant 0.000000e+00 : f32
    %35 = vector.broadcast %cst_29 : f32 to vector<8x8xf32>
    %36 = arith.cmpf ogt, %34, %35 : vector<8x8xf32>
    %cst_30 = arith.constant 1.000000e+00 : f32
    %37 = vector.broadcast %cst_30 : f32 to vector<8x8xf32>
    %38 = arith.select %36, %34, %37 : vector<8x8xi1>, vector<8x8xf32>
    %39 = arith.divf %33, %38 : vector<8x8xf32>
    %cst_31 = arith.constant 0.000000e+00 : f32
    %40 = vector.broadcast %cst_31 : f32 to vector<8x8xf32>
    %41 = arith.select %36, %39, %40 : vector<8x8xi1>, vector<8x8xf32>
    %42 = arith.mulf %17, %20 : vector<8x32xf32>
    %43 = arith.mulf %31, %27 : vector<8x8xf32>
    %cst_32 = arith.constant 1.000000e+00 : f32
    %44 = vector.broadcast %cst_32 : f32 to vector<8x8xf32>
    %45 = arith.subf %44, %31 : vector<8x8xf32>
    %46 = arith.mulf %45, %21 : vector<8x8xf32>
    %47 = arith.addf %43, %46 : vector<8x8xf32>
    %48 = arith.mulf %31, %27 : vector<8x8xf32>
    %cst_33 = arith.constant 1.000000e+00 : f32
    %49 = vector.broadcast %cst_33 : f32 to vector<8x8xf32>
    %50 = arith.subf %49, %31 : vector<8x8xf32>
    %51 = arith.mulf %14, %47 : vector<8x8xf32>
    %52 = arith.mulf %19, %41 : vector<8x8xf32>
    %53 = arith.addf %51, %52 : vector<8x8xf32>
    %54 = arith.mulf %50, %53 : vector<8x8xf32>
    %55 = arith.addf %48, %54 : vector<8x8xf32>
    %56 = arith.truncf %55 : vector<8x8xf32> to vector<8x8xbf16>
    %cst_34 = arith.constant dense<0.000000e+00> : vector<8x96xf32>
    %57 = tpu.matmul %56, %0, %cst_34 {dimension_numbers = #tpu.dot_dimension_numbers<[1], [0], [0], [1], [0, 0, 1, 1], [], []>} : vector<8x8xbf16>, vector<8x96xbf16>, vector<8x96xf32> -> vector<8x96xf32>
    %58 = arith.truncf %31 : vector<8x8xf32> to vector<8x8xbf16>
    %cst_35 = arith.constant dense<0.000000e+00> : vector<8x96xf32>
    %59 = tpu.matmul %58, %1, %cst_35 {dimension_numbers = #tpu.dot_dimension_numbers<[1], [0], [0], [1], [0, 0, 1, 1], [], []>} : vector<8x8xbf16>, vector<8x96xbf16>, vector<8x96xf32> -> vector<8x96xf32>
    %60 = arith.addf %57, %59 : vector<8x96xf32>
    %61 = arith.addf %60, %8 : vector<8x96xf32>
    %62 = vector.extract_strided_slice %61 {offsets = [0, 0], sizes = [8, 64], strides = [1, 1]} : vector<8x96xf32> to vector<8x64xf32>
    %63 = arith.truncf %42 : vector<8x32xf32> to vector<8x32xbf16>
    %cst_36 = arith.constant dense<0.000000e+00> : vector<8x64xf32>
    %64 = tpu.matmul %63, %2, %cst_36 {dimension_numbers = #tpu.dot_dimension_numbers<[1], [0], [0], [1], [0, 0, 1, 1], [], []>} : vector<8x32xbf16>, vector<32x64xbf16>, vector<8x64xf32> -> vector<8x64xf32>
    %65 = arith.addf %62, %64 : vector<8x64xf32>
    %66 = arith.negf %65 : vector<8x64xf32>
    %67 = math.exp %66 : vector<8x64xf32>
    %cst_37 = arith.constant 1.000000e+00 : f32
    %68 = vector.broadcast %cst_37 : f32 to vector<8x64xf32>
    %69 = arith.addf %68, %67 : vector<8x64xf32>
    %70 = arith.divf %68, %69 : vector<8x64xf32>
    %71 = vector.extract_strided_slice %70 {offsets = [0, 0], sizes = [8, 32], strides = [1, 1]} : vector<8x64xf32> to vector<8x32xf32>
    %72 = vector.extract_strided_slice %70 {offsets = [0, 32], sizes = [8, 32], strides = [1, 1]} : vector<8x64xf32> to vector<8x32xf32>
    %73 = vector.extract_strided_slice %61 {offsets = [0, 64], sizes = [8, 32], strides = [1, 1]} : vector<8x96xf32> to vector<8x32xf32>
    %74 = arith.mulf %71, %42 : vector<8x32xf32>
    %75 = arith.truncf %74 : vector<8x32xf32> to vector<8x32xbf16>
    %cst_38 = arith.constant dense<0.000000e+00> : vector<8x32xf32>
    %76 = tpu.matmul %75, %3, %cst_38 {dimension_numbers = #tpu.dot_dimension_numbers<[1], [0], [0], [1], [0, 0, 1, 1], [], []>} : vector<8x32xbf16>, vector<32x32xbf16>, vector<8x32xf32> -> vector<8x32xf32>
    %77 = arith.addf %73, %76 : vector<8x32xf32>
    %78 = math.tanh %77 : vector<8x32xf32>
    %cst_39 = arith.constant 1.000000e+00 : f32
    %79 = vector.broadcast %cst_39 : f32 to vector<8x32xf32>
    %80 = arith.subf %79, %72 : vector<8x32xf32>
    %81 = arith.mulf %80, %42 : vector<8x32xf32>
    %82 = arith.mulf %72, %78 : vector<8x32xf32>
    %83 = arith.addf %81, %82 : vector<8x32xf32>
    %84 = arith.truncf %83 : vector<8x32xf32> to vector<8x32xbf16>
    %cst_40 = arith.constant dense<0.000000e+00> : vector<8x5xf32>
    %85 = tpu.matmul %84, %4, %cst_40 {dimension_numbers = #tpu.dot_dimension_numbers<[1], [0], [0], [1], [0, 0, 1, 1], [], []>} : vector<8x32xbf16>, vector<32x5xbf16>, vector<8x5xf32> -> vector<8x5xf32>
    %86 = arith.addf %85, %11 : vector<8x5xf32>
    %87 = vector.extract_strided_slice %86 {offsets = [0, 0], sizes = [8, 4], strides = [1, 1]} : vector<8x5xf32> to vector<8x4xf32>
    %88 = vector.extract_strided_slice %86 {offsets = [0, 4], sizes = [8, 1], strides = [1, 1]} : vector<8x5xf32> to vector<8x1xf32>
    %cst_41 = arith.constant 0.000000e+00 : f32
    %89 = arith.mulf %5, %cst_41 : f32
    %90 = vector.broadcast %89 : f32 to vector<8x1xf32>
    %91 = arith.addf %88, %90 : vector<8x1xf32>
    %cst_42 = arith.constant 0.000000e+00 : f32
    %92 = vector.broadcast %cst_42 : f32 to vector<8x1xf32>
    %93 = arith.cmpf oge, %91, %92 : vector<8x1xf32>
    %cst_43 = arith.constant -1.000000e+00 : f32
    %94 = vector.broadcast %cst_43 : f32 to vector<8x1xf32>
    %95 = arith.cmpf oeq, %23, %94 : vector<8x1xf32>
    %96 = arith.andi %93, %95 : vector<8x1xi1>
    %97 = vector.shape_cast %96 : vector<8x1xi1> to vector<8x1xi1>
    %98 = vector.broadcast %97 : vector<8x1xi1> to vector<8x4xi1>
    %99 = arith.select %98, %87, %22 : vector<8x4xi1>, vector<8x4xf32>
    %cst_44 = arith.constant 1.000000e+00 : f32
    %100 = vector.broadcast %cst_44 : f32 to vector<8x1xf32>
    %101 = arith.select %96, %100, %23 : vector<8x1xi1>, vector<8x1xf32>
    %c1 = arith.constant 1 : index
    %c0_45 = arith.constant 0 : index
    %c0_46 = arith.constant 0 : index
    %102 = vector.load %arg1[%c1, %c0_45, %c0_46] : memref<8x8x8xf32, #tpu.memory_space<vmem>>, vector<1x8x8xf32>
    %103 = vector.shape_cast %102 : vector<1x8x8xf32> to vector<8x8xf32>
    %cst_47 = arith.constant 0.000000e+00 : f32
    %104 = vector.broadcast %cst_47 : f32 to vector<8x8xf32>
    %105 = arith.cmpf one, %103, %104 : vector<8x8xf32>
    %106 = arith.extui %105 : vector<8x8xi1> to vector<8x8xi32>
    %107 = arith.sitofp %106 : vector<8x8xi32> to vector<8x8xf32>
    %108 = arith.mulf %107, %103 : vector<8x8xf32>
    %109 = arith.addf %33, %108 : vector<8x8xf32>
    %110 = arith.addf %34, %107 : vector<8x8xf32>
    %cst_48 = arith.constant 0.000000e+00 : f32
    %111 = vector.broadcast %cst_48 : f32 to vector<8x8xf32>
    %112 = arith.cmpf ogt, %110, %111 : vector<8x8xf32>
    %cst_49 = arith.constant 1.000000e+00 : f32
    %113 = vector.broadcast %cst_49 : f32 to vector<8x8xf32>
    %114 = arith.select %112, %110, %113 : vector<8x8xi1>, vector<8x8xf32>
    %115 = arith.divf %109, %114 : vector<8x8xf32>
    %cst_50 = arith.constant 0.000000e+00 : f32
    %116 = vector.broadcast %cst_50 : f32 to vector<8x8xf32>
    %117 = arith.select %112, %115, %116 : vector<8x8xi1>, vector<8x8xf32>
    %118 = arith.mulf %17, %83 : vector<8x32xf32>
    %119 = arith.mulf %107, %103 : vector<8x8xf32>
    %cst_51 = arith.constant 1.000000e+00 : f32
    %120 = vector.broadcast %cst_51 : f32 to vector<8x8xf32>
    %121 = arith.subf %120, %107 : vector<8x8xf32>
    %122 = arith.mulf %121, %47 : vector<8x8xf32>
    %123 = arith.addf %119, %122 : vector<8x8xf32>
    %124 = arith.mulf %107, %103 : vector<8x8xf32>
    %cst_52 = arith.constant 1.000000e+00 : f32
    %125 = vector.broadcast %cst_52 : f32 to vector<8x8xf32>
    %126 = arith.subf %125, %107 : vector<8x8xf32>
    %127 = arith.mulf %14, %123 : vector<8x8xf32>
    %128 = arith.mulf %19, %117 : vector<8x8xf32>
    %129 = arith.addf %127, %128 : vector<8x8xf32>
    %130 = arith.mulf %126, %129 : vector<8x8xf32>
    %131 = arith.addf %124, %130 : vector<8x8xf32>
    %132 = arith.truncf %131 : vector<8x8xf32> to vector<8x8xbf16>
    %cst_53 = arith.constant dense<0.000000e+00> : vector<8x96xf32>
    %133 = tpu.matmul %132, %0, %cst_53 {dimension_numbers = #tpu.dot_dimension_numbers<[1], [0], [0], [1], [0, 0, 1, 1], [], []>} : vector<8x8xbf16>, vector<8x96xbf16>, vector<8x96xf32> -> vector<8x96xf32>
    %134 = arith.truncf %107 : vector<8x8xf32> to vector<8x8xbf16>
    %cst_54 = arith.constant dense<0.000000e+00> : vector<8x96xf32>
    %135 = tpu.matmul %134, %1, %cst_54 {dimension_numbers = #tpu.dot_dimension_numbers<[1], [0], [0], [1], [0, 0, 1, 1], [], []>} : vector<8x8xbf16>, vector<8x96xbf16>, vector<8x96xf32> -> vector<8x96xf32>
    %136 = arith.addf %133, %135 : vector<8x96xf32>
    %137 = arith.addf %136, %8 : vector<8x96xf32>
    %138 = vector.extract_strided_slice %137 {offsets = [0, 0], sizes = [8, 64], strides = [1, 1]} : vector<8x96xf32> to vector<8x64xf32>
    %139 = arith.truncf %118 : vector<8x32xf32> to vector<8x32xbf16>
    %cst_55 = arith.constant dense<0.000000e+00> : vector<8x64xf32>
    %140 = tpu.matmul %139, %2, %cst_55 {dimension_numbers = #tpu.dot_dimension_numbers<[1], [0], [0], [1], [0, 0, 1, 1], [], []>} : vector<8x32xbf16>, vector<32x64xbf16>, vector<8x64xf32> -> vector<8x64xf32>
    %141 = arith.addf %138, %140 : vector<8x64xf32>
    %142 = arith.negf %141 : vector<8x64xf32>
    %143 = math.exp %142 : vector<8x64xf32>
    %cst_56 = arith.constant 1.000000e+00 : f32
    %144 = vector.broadcast %cst_56 : f32 to vector<8x64xf32>
    %145 = arith.addf %144, %143 : vector<8x64xf32>
    %146 = arith.divf %144, %145 : vector<8x64xf32>
    %147 = vector.extract_strided_slice %146 {offsets = [0, 0], sizes = [8, 32], strides = [1, 1]} : vector<8x64xf32> to vector<8x32xf32>
    %148 = vector.extract_strided_slice %146 {offsets = [0, 32], sizes = [8, 32], strides = [1, 1]} : vector<8x64xf32> to vector<8x32xf32>
    %149 = vector.extract_strided_slice %137 {offsets = [0, 64], sizes = [8, 32], strides = [1, 1]} : vector<8x96xf32> to vector<8x32xf32>
    %150 = arith.mulf %147, %118 : vector<8x32xf32>
    %151 = arith.truncf %150 : vector<8x32xf32> to vector<8x32xbf16>
    %cst_57 = arith.constant dense<0.000000e+00> : vector<8x32xf32>
    %152 = tpu.matmul %151, %3, %cst_57 {dimension_numbers = #tpu.dot_dimension_numbers<[1], [0], [0], [1], [0, 0, 1, 1], [], []>} : vector<8x32xbf16>, vector<32x32xbf16>, vector<8x32xf32> -> vector<8x32xf32>
    %153 = arith.addf %149, %152 : vector<8x32xf32>
    %154 = math.tanh %153 : vector<8x32xf32>
    %cst_58 = arith.constant 1.000000e+00 : f32
    %155 = vector.broadcast %cst_58 : f32 to vector<8x32xf32>
    %156 = arith.subf %155, %148 : vector<8x32xf32>
    %157 = arith.mulf %156, %118 : vector<8x32xf32>
    %158 = arith.mulf %148, %154 : vector<8x32xf32>
    %159 = arith.addf %157, %158 : vector<8x32xf32>
    %160 = arith.truncf %159 : vector<8x32xf32> to vector<8x32xbf16>
    %cst_59 = arith.constant dense<0.000000e+00> : vector<8x5xf32>
    %161 = tpu.matmul %160, %4, %cst_59 {dimension_numbers = #tpu.dot_dimension_numbers<[1], [0], [0], [1], [0, 0, 1, 1], [], []>} : vector<8x32xbf16>, vector<32x5xbf16>, vector<8x5xf32> -> vector<8x5xf32>
    %162 = arith.addf %161, %11 : vector<8x5xf32>
    %163 = vector.extract_strided_slice %162 {offsets = [0, 0], sizes = [8, 4], strides = [1, 1]} : vector<8x5xf32> to vector<8x4xf32>
    %164 = vector.extract_strided_slice %162 {offsets = [0, 4], sizes = [8, 1], strides = [1, 1]} : vector<8x5xf32> to vector<8x1xf32>
    %cst_60 = arith.constant 1.250000e-01 : f32
    %165 = arith.mulf %5, %cst_60 : f32
    %166 = vector.broadcast %165 : f32 to vector<8x1xf32>
    %167 = arith.addf %164, %166 : vector<8x1xf32>
    %cst_61 = arith.constant 0.000000e+00 : f32
    %168 = vector.broadcast %cst_61 : f32 to vector<8x1xf32>
    %169 = arith.cmpf oge, %167, %168 : vector<8x1xf32>
    %cst_62 = arith.constant -1.000000e+00 : f32
    %170 = vector.broadcast %cst_62 : f32 to vector<8x1xf32>
    %171 = arith.cmpf oeq, %101, %170 : vector<8x1xf32>
    %172 = arith.andi %169, %171 : vector<8x1xi1>
    %173 = vector.shape_cast %172 : vector<8x1xi1> to vector<8x1xi1>
    %174 = vector.broadcast %173 : vector<8x1xi1> to vector<8x4xi1>
    %175 = arith.select %174, %163, %99 : vector<8x4xi1>, vector<8x4xf32>
    %cst_63 = arith.constant 2.000000e+00 : f32
    %176 = vector.broadcast %cst_63 : f32 to vector<8x1xf32>
    %177 = arith.select %172, %176, %101 : vector<8x1xi1>, vector<8x1xf32>
    %c2 = arith.constant 2 : index
    %c0_64 = arith.constant 0 : index
    %c0_65 = arith.constant 0 : index
    %178 = vector.load %arg1[%c2, %c0_64, %c0_65] : memref<8x8x8xf32, #tpu.memory_space<vmem>>, vector<1x8x8xf32>
    %179 = vector.shape_cast %178 : vector<1x8x8xf32> to vector<8x8xf32>
    %cst_66 = arith.constant 0.000000e+00 : f32
    %180 = vector.broadcast %cst_66 : f32 to vector<8x8xf32>
    %181 = arith.cmpf one, %179, %180 : vector<8x8xf32>
    %182 = arith.extui %181 : vector<8x8xi1> to vector<8x8xi32>
    %183 = arith.sitofp %182 : vector<8x8xi32> to vector<8x8xf32>
    %184 = arith.mulf %183, %179 : vector<8x8xf32>
    %185 = arith.addf %109, %184 : vector<8x8xf32>
    %186 = arith.addf %110, %183 : vector<8x8xf32>
    %cst_67 = arith.constant 0.000000e+00 : f32
    %187 = vector.broadcast %cst_67 : f32 to vector<8x8xf32>
    %188 = arith.cmpf ogt, %186, %187 : vector<8x8xf32>
    %cst_68 = arith.constant 1.000000e+00 : f32
    %189 = vector.broadcast %cst_68 : f32 to vector<8x8xf32>
    %190 = arith.select %188, %186, %189 : vector<8x8xi1>, vector<8x8xf32>
    %191 = arith.divf %185, %190 : vector<8x8xf32>
    %cst_69 = arith.constant 0.000000e+00 : f32
    %192 = vector.broadcast %cst_69 : f32 to vector<8x8xf32>
    %193 = arith.select %188, %191, %192 : vector<8x8xi1>, vector<8x8xf32>
    %194 = arith.mulf %17, %159 : vector<8x32xf32>
    %195 = arith.mulf %183, %179 : vector<8x8xf32>
    %cst_70 = arith.constant 1.000000e+00 : f32
    %196 = vector.broadcast %cst_70 : f32 to vector<8x8xf32>
    %197 = arith.subf %196, %183 : vector<8x8xf32>
    %198 = arith.mulf %197, %123 : vector<8x8xf32>
    %199 = arith.addf %195, %198 : vector<8x8xf32>
    %200 = arith.mulf %183, %179 : vector<8x8xf32>
    %cst_71 = arith.constant 1.000000e+00 : f32
    %201 = vector.broadcast %cst_71 : f32 to vector<8x8xf32>
    %202 = arith.subf %201, %183 : vector<8x8xf32>
    %203 = arith.mulf %14, %199 : vector<8x8xf32>
    %204 = arith.mulf %19, %193 : vector<8x8xf32>
    %205 = arith.addf %203, %204 : vector<8x8xf32>
    %206 = arith.mulf %202, %205 : vector<8x8xf32>
    %207 = arith.addf %200, %206 : vector<8x8xf32>
    %208 = arith.truncf %207 : vector<8x8xf32> to vector<8x8xbf16>
    %cst_72 = arith.constant dense<0.000000e+00> : vector<8x96xf32>
    %209 = tpu.matmul %208, %0, %cst_72 {dimension_numbers = #tpu.dot_dimension_numbers<[1], [0], [0], [1], [0, 0, 1, 1], [], []>} : vector<8x8xbf16>, vector<8x96xbf16>, vector<8x96xf32> -> vector<8x96xf32>
    %210 = arith.truncf %183 : vector<8x8xf32> to vector<8x8xbf16>
    %cst_73 = arith.constant dense<0.000000e+00> : vector<8x96xf32>
    %211 = tpu.matmul %210, %1, %cst_73 {dimension_numbers = #tpu.dot_dimension_numbers<[1], [0], [0], [1], [0, 0, 1, 1], [], []>} : vector<8x8xbf16>, vector<8x96xbf16>, vector<8x96xf32> -> vector<8x96xf32>
    %212 = arith.addf %209, %211 : vector<8x96xf32>
    %213 = arith.addf %212, %8 : vector<8x96xf32>
    %214 = vector.extract_strided_slice %213 {offsets = [0, 0], sizes = [8, 64], strides = [1, 1]} : vector<8x96xf32> to vector<8x64xf32>
    %215 = arith.truncf %194 : vector<8x32xf32> to vector<8x32xbf16>
    %cst_74 = arith.constant dense<0.000000e+00> : vector<8x64xf32>
    %216 = tpu.matmul %215, %2, %cst_74 {dimension_numbers = #tpu.dot_dimension_numbers<[1], [0], [0], [1], [0, 0, 1, 1], [], []>} : vector<8x32xbf16>, vector<32x64xbf16>, vector<8x64xf32> -> vector<8x64xf32>
    %217 = arith.addf %214, %216 : vector<8x64xf32>
    %218 = arith.negf %217 : vector<8x64xf32>
    %219 = math.exp %218 : vector<8x64xf32>
    %cst_75 = arith.constant 1.000000e+00 : f32
    %220 = vector.broadcast %cst_75 : f32 to vector<8x64xf32>
    %221 = arith.addf %220, %219 : vector<8x64xf32>
    %222 = arith.divf %220, %221 : vector<8x64xf32>
    %223 = vector.extract_strided_slice %222 {offsets = [0, 0], sizes = [8, 32], strides = [1, 1]} : vector<8x64xf32> to vector<8x32xf32>
    %224 = vector.extract_strided_slice %222 {offsets = [0, 32], sizes = [8, 32], strides = [1, 1]} : vector<8x64xf32> to vector<8x32xf32>
    %225 = vector.extract_strided_slice %213 {offsets = [0, 64], sizes = [8, 32], strides = [1, 1]} : vector<8x96xf32> to vector<8x32xf32>
    %226 = arith.mulf %223, %194 : vector<8x32xf32>
    %227 = arith.truncf %226 : vector<8x32xf32> to vector<8x32xbf16>
    %cst_76 = arith.constant dense<0.000000e+00> : vector<8x32xf32>
    %228 = tpu.matmul %227, %3, %cst_76 {dimension_numbers = #tpu.dot_dimension_numbers<[1], [0], [0], [1], [0, 0, 1, 1], [], []>} : vector<8x32xbf16>, vector<32x32xbf16>, vector<8x32xf32> -> vector<8x32xf32>
    %229 = arith.addf %225, %228 : vector<8x32xf32>
    %230 = math.tanh %229 : vector<8x32xf32>
    %cst_77 = arith.constant 1.000000e+00 : f32
    %231 = vector.broadcast %cst_77 : f32 to vector<8x32xf32>
    %232 = arith.subf %231, %224 : vector<8x32xf32>
    %233 = arith.mulf %232, %194 : vector<8x32xf32>
    %234 = arith.mulf %224, %230 : vector<8x32xf32>
    %235 = arith.addf %233, %234 : vector<8x32xf32>
    %236 = arith.truncf %235 : vector<8x32xf32> to vector<8x32xbf16>
    %cst_78 = arith.constant dense<0.000000e+00> : vector<8x5xf32>
    %237 = tpu.matmul %236, %4, %cst_78 {dimension_numbers = #tpu.dot_dimension_numbers<[1], [0], [0], [1], [0, 0, 1, 1], [], []>} : vector<8x32xbf16>, vector<32x5xbf16>, vector<8x5xf32> -> vector<8x5xf32>
    %238 = arith.addf %237, %11 : vector<8x5xf32>
    %239 = vector.extract_strided_slice %238 {offsets = [0, 0], sizes = [8, 4], strides = [1, 1]} : vector<8x5xf32> to vector<8x4xf32>
    %240 = vector.extract_strided_slice %238 {offsets = [0, 4], sizes = [8, 1], strides = [1, 1]} : vector<8x5xf32> to vector<8x1xf32>
    %cst_79 = arith.constant 2.500000e-01 : f32
    %241 = arith.mulf %5, %cst_79 : f32
    %242 = vector.broadcast %241 : f32 to vector<8x1xf32>
    %243 = arith.addf %240, %242 : vector<8x1xf32>
    %cst_80 = arith.constant 0.000000e+00 : f32
    %244 = vector.broadcast %cst_80 : f32 to vector<8x1xf32>
    %245 = arith.cmpf oge, %243, %244 : vector<8x1xf32>
    %cst_81 = arith.constant -1.000000e+00 : f32
    %246 = vector.broadcast %cst_81 : f32 to vector<8x1xf32>
    %247 = arith.cmpf oeq, %177, %246 : vector<8x1xf32>
    %248 = arith.andi %245, %247 : vector<8x1xi1>
    %249 = vector.shape_cast %248 : vector<8x1xi1> to vector<8x1xi1>
    %250 = vector.broadcast %249 : vector<8x1xi1> to vector<8x4xi1>
    %251 = arith.select %250, %239, %175 : vector<8x4xi1>, vector<8x4xf32>
    %cst_82 = arith.constant 3.000000e+00 : f32
    %252 = vector.broadcast %cst_82 : f32 to vector<8x1xf32>
    %253 = arith.select %248, %252, %177 : vector<8x1xi1>, vector<8x1xf32>
    %c3 = arith.constant 3 : index
    %c0_83 = arith.constant 0 : index
    %c0_84 = arith.constant 0 : index
    %254 = vector.load %arg1[%c3, %c0_83, %c0_84] : memref<8x8x8xf32, #tpu.memory_space<vmem>>, vector<1x8x8xf32>
    %255 = vector.shape_cast %254 : vector<1x8x8xf32> to vector<8x8xf32>
    %cst_85 = arith.constant 0.000000e+00 : f32
    %256 = vector.broadcast %cst_85 : f32 to vector<8x8xf32>
    %257 = arith.cmpf one, %255, %256 : vector<8x8xf32>
    %258 = arith.extui %257 : vector<8x8xi1> to vector<8x8xi32>
    %259 = arith.sitofp %258 : vector<8x8xi32> to vector<8x8xf32>
    %260 = arith.mulf %259, %255 : vector<8x8xf32>
    %261 = arith.addf %185, %260 : vector<8x8xf32>
    %262 = arith.addf %186, %259 : vector<8x8xf32>
    %cst_86 = arith.constant 0.000000e+00 : f32
    %263 = vector.broadcast %cst_86 : f32 to vector<8x8xf32>
    %264 = arith.cmpf ogt, %262, %263 : vector<8x8xf32>
    %cst_87 = arith.constant 1.000000e+00 : f32
    %265 = vector.broadcast %cst_87 : f32 to vector<8x8xf32>
    %266 = arith.select %264, %262, %265 : vector<8x8xi1>, vector<8x8xf32>
    %267 = arith.divf %261, %266 : vector<8x8xf32>
    %cst_88 = arith.constant 0.000000e+00 : f32
    %268 = vector.broadcast %cst_88 : f32 to vector<8x8xf32>
    %269 = arith.select %264, %267, %268 : vector<8x8xi1>, vector<8x8xf32>
    %270 = arith.mulf %17, %235 : vector<8x32xf32>
    %271 = arith.mulf %259, %255 : vector<8x8xf32>
    %cst_89 = arith.constant 1.000000e+00 : f32
    %272 = vector.broadcast %cst_89 : f32 to vector<8x8xf32>
    %273 = arith.subf %272, %259 : vector<8x8xf32>
    %274 = arith.mulf %273, %199 : vector<8x8xf32>
    %275 = arith.addf %271, %274 : vector<8x8xf32>
    %276 = arith.mulf %259, %255 : vector<8x8xf32>
    %cst_90 = arith.constant 1.000000e+00 : f32
    %277 = vector.broadcast %cst_90 : f32 to vector<8x8xf32>
    %278 = arith.subf %277, %259 : vector<8x8xf32>
    %279 = arith.mulf %14, %275 : vector<8x8xf32>
    %280 = arith.mulf %19, %269 : vector<8x8xf32>
    %281 = arith.addf %279, %280 : vector<8x8xf32>
    %282 = arith.mulf %278, %281 : vector<8x8xf32>
    %283 = arith.addf %276, %282 : vector<8x8xf32>
    %284 = arith.truncf %283 : vector<8x8xf32> to vector<8x8xbf16>
    %cst_91 = arith.constant dense<0.000000e+00> : vector<8x96xf32>
    %285 = tpu.matmul %284, %0, %cst_91 {dimension_numbers = #tpu.dot_dimension_numbers<[1], [0], [0], [1], [0, 0, 1, 1], [], []>} : vector<8x8xbf16>, vector<8x96xbf16>, vector<8x96xf32> -> vector<8x96xf32>
    %286 = arith.truncf %259 : vector<8x8xf32> to vector<8x8xbf16>
    %cst_92 = arith.constant dense<0.000000e+00> : vector<8x96xf32>
    %287 = tpu.matmul %286, %1, %cst_92 {dimension_numbers = #tpu.dot_dimension_numbers<[1], [0], [0], [1], [0, 0, 1, 1], [], []>} : vector<8x8xbf16>, vector<8x96xbf16>, vector<8x96xf32> -> vector<8x96xf32>
    %288 = arith.addf %285, %287 : vector<8x96xf32>
    %289 = arith.addf %288, %8 : vector<8x96xf32>
    %290 = vector.extract_strided_slice %289 {offsets = [0, 0], sizes = [8, 64], strides = [1, 1]} : vector<8x96xf32> to vector<8x64xf32>
    %291 = arith.truncf %270 : vector<8x32xf32> to vector<8x32xbf16>
    %cst_93 = arith.constant dense<0.000000e+00> : vector<8x64xf32>
    %292 = tpu.matmul %291, %2, %cst_93 {dimension_numbers = #tpu.dot_dimension_numbers<[1], [0], [0], [1], [0, 0, 1, 1], [], []>} : vector<8x32xbf16>, vector<32x64xbf16>, vector<8x64xf32> -> vector<8x64xf32>
    %293 = arith.addf %290, %292 : vector<8x64xf32>
    %294 = arith.negf %293 : vector<8x64xf32>
    %295 = math.exp %294 : vector<8x64xf32>
    %cst_94 = arith.constant 1.000000e+00 : f32
    %296 = vector.broadcast %cst_94 : f32 to vector<8x64xf32>
    %297 = arith.addf %296, %295 : vector<8x64xf32>
    %298 = arith.divf %296, %297 : vector<8x64xf32>
    %299 = vector.extract_strided_slice %298 {offsets = [0, 0], sizes = [8, 32], strides = [1, 1]} : vector<8x64xf32> to vector<8x32xf32>
    %300 = vector.extract_strided_slice %298 {offsets = [0, 32], sizes = [8, 32], strides = [1, 1]} : vector<8x64xf32> to vector<8x32xf32>
    %301 = vector.extract_strided_slice %289 {offsets = [0, 64], sizes = [8, 32], strides = [1, 1]} : vector<8x96xf32> to vector<8x32xf32>
    %302 = arith.mulf %299, %270 : vector<8x32xf32>
    %303 = arith.truncf %302 : vector<8x32xf32> to vector<8x32xbf16>
    %cst_95 = arith.constant dense<0.000000e+00> : vector<8x32xf32>
    %304 = tpu.matmul %303, %3, %cst_95 {dimension_numbers = #tpu.dot_dimension_numbers<[1], [0], [0], [1], [0, 0, 1, 1], [], []>} : vector<8x32xbf16>, vector<32x32xbf16>, vector<8x32xf32> -> vector<8x32xf32>
    %305 = arith.addf %301, %304 : vector<8x32xf32>
    %306 = math.tanh %305 : vector<8x32xf32>
    %cst_96 = arith.constant 1.000000e+00 : f32
    %307 = vector.broadcast %cst_96 : f32 to vector<8x32xf32>
    %308 = arith.subf %307, %300 : vector<8x32xf32>
    %309 = arith.mulf %308, %270 : vector<8x32xf32>
    %310 = arith.mulf %300, %306 : vector<8x32xf32>
    %311 = arith.addf %309, %310 : vector<8x32xf32>
    %312 = arith.truncf %311 : vector<8x32xf32> to vector<8x32xbf16>
    %cst_97 = arith.constant dense<0.000000e+00> : vector<8x5xf32>
    %313 = tpu.matmul %312, %4, %cst_97 {dimension_numbers = #tpu.dot_dimension_numbers<[1], [0], [0], [1], [0, 0, 1, 1], [], []>} : vector<8x32xbf16>, vector<32x5xbf16>, vector<8x5xf32> -> vector<8x5xf32>
    %314 = arith.addf %313, %11 : vector<8x5xf32>
    %315 = vector.extract_strided_slice %314 {offsets = [0, 0], sizes = [8, 4], strides = [1, 1]} : vector<8x5xf32> to vector<8x4xf32>
    %316 = vector.extract_strided_slice %314 {offsets = [0, 4], sizes = [8, 1], strides = [1, 1]} : vector<8x5xf32> to vector<8x1xf32>
    %cst_98 = arith.constant 3.750000e-01 : f32
    %317 = arith.mulf %5, %cst_98 : f32
    %318 = vector.broadcast %317 : f32 to vector<8x1xf32>
    %319 = arith.addf %316, %318 : vector<8x1xf32>
    %cst_99 = arith.constant 0.000000e+00 : f32
    %320 = vector.broadcast %cst_99 : f32 to vector<8x1xf32>
    %321 = arith.cmpf oge, %319, %320 : vector<8x1xf32>
    %cst_100 = arith.constant -1.000000e+00 : f32
    %322 = vector.broadcast %cst_100 : f32 to vector<8x1xf32>
    %323 = arith.cmpf oeq, %253, %322 : vector<8x1xf32>
    %324 = arith.andi %321, %323 : vector<8x1xi1>
    %325 = vector.shape_cast %324 : vector<8x1xi1> to vector<8x1xi1>
    %326 = vector.broadcast %325 : vector<8x1xi1> to vector<8x4xi1>
    %327 = arith.select %326, %315, %251 : vector<8x4xi1>, vector<8x4xf32>
    %cst_101 = arith.constant 4.000000e+00 : f32
    %328 = vector.broadcast %cst_101 : f32 to vector<8x1xf32>
    %329 = arith.select %324, %328, %253 : vector<8x1xi1>, vector<8x1xf32>
    %c4 = arith.constant 4 : index
    %c0_102 = arith.constant 0 : index
    %c0_103 = arith.constant 0 : index
    %330 = vector.load %arg1[%c4, %c0_102, %c0_103] : memref<8x8x8xf32, #tpu.memory_space<vmem>>, vector<1x8x8xf32>
    %331 = vector.shape_cast %330 : vector<1x8x8xf32> to vector<8x8xf32>
    %cst_104 = arith.constant 0.000000e+00 : f32
    %332 = vector.broadcast %cst_104 : f32 to vector<8x8xf32>
    %333 = arith.cmpf one, %331, %332 : vector<8x8xf32>
    %334 = arith.extui %333 : vector<8x8xi1> to vector<8x8xi32>
    %335 = arith.sitofp %334 : vector<8x8xi32> to vector<8x8xf32>
    %336 = arith.mulf %335, %331 : vector<8x8xf32>
    %337 = arith.addf %261, %336 : vector<8x8xf32>
    %338 = arith.addf %262, %335 : vector<8x8xf32>
    %cst_105 = arith.constant 0.000000e+00 : f32
    %339 = vector.broadcast %cst_105 : f32 to vector<8x8xf32>
    %340 = arith.cmpf ogt, %338, %339 : vector<8x8xf32>
    %cst_106 = arith.constant 1.000000e+00 : f32
    %341 = vector.broadcast %cst_106 : f32 to vector<8x8xf32>
    %342 = arith.select %340, %338, %341 : vector<8x8xi1>, vector<8x8xf32>
    %343 = arith.divf %337, %342 : vector<8x8xf32>
    %cst_107 = arith.constant 0.000000e+00 : f32
    %344 = vector.broadcast %cst_107 : f32 to vector<8x8xf32>
    %345 = arith.select %340, %343, %344 : vector<8x8xi1>, vector<8x8xf32>
    %346 = arith.mulf %17, %311 : vector<8x32xf32>
    %347 = arith.mulf %335, %331 : vector<8x8xf32>
    %cst_108 = arith.constant 1.000000e+00 : f32
    %348 = vector.broadcast %cst_108 : f32 to vector<8x8xf32>
    %349 = arith.subf %348, %335 : vector<8x8xf32>
    %350 = arith.mulf %349, %275 : vector<8x8xf32>
    %351 = arith.addf %347, %350 : vector<8x8xf32>
    %352 = arith.mulf %335, %331 : vector<8x8xf32>
    %cst_109 = arith.constant 1.000000e+00 : f32
    %353 = vector.broadcast %cst_109 : f32 to vector<8x8xf32>
    %354 = arith.subf %353, %335 : vector<8x8xf32>
    %355 = arith.mulf %14, %351 : vector<8x8xf32>
    %356 = arith.mulf %19, %345 : vector<8x8xf32>
    %357 = arith.addf %355, %356 : vector<8x8xf32>
    %358 = arith.mulf %354, %357 : vector<8x8xf32>
    %359 = arith.addf %352, %358 : vector<8x8xf32>
    %360 = arith.truncf %359 : vector<8x8xf32> to vector<8x8xbf16>
    %cst_110 = arith.constant dense<0.000000e+00> : vector<8x96xf32>
    %361 = tpu.matmul %360, %0, %cst_110 {dimension_numbers = #tpu.dot_dimension_numbers<[1], [0], [0], [1], [0, 0, 1, 1], [], []>} : vector<8x8xbf16>, vector<8x96xbf16>, vector<8x96xf32> -> vector<8x96xf32>
    %362 = arith.truncf %335 : vector<8x8xf32> to vector<8x8xbf16>
    %cst_111 = arith.constant dense<0.000000e+00> : vector<8x96xf32>
    %363 = tpu.matmul %362, %1, %cst_111 {dimension_numbers = #tpu.dot_dimension_numbers<[1], [0], [0], [1], [0, 0, 1, 1], [], []>} : vector<8x8xbf16>, vector<8x96xbf16>, vector<8x96xf32> -> vector<8x96xf32>
    %364 = arith.addf %361, %363 : vector<8x96xf32>
    %365 = arith.addf %364, %8 : vector<8x96xf32>
    %366 = vector.extract_strided_slice %365 {offsets = [0, 0], sizes = [8, 64], strides = [1, 1]} : vector<8x96xf32> to vector<8x64xf32>
    %367 = arith.truncf %346 : vector<8x32xf32> to vector<8x32xbf16>
    %cst_112 = arith.constant dense<0.000000e+00> : vector<8x64xf32>
    %368 = tpu.matmul %367, %2, %cst_112 {dimension_numbers = #tpu.dot_dimension_numbers<[1], [0], [0], [1], [0, 0, 1, 1], [], []>} : vector<8x32xbf16>, vector<32x64xbf16>, vector<8x64xf32> -> vector<8x64xf32>
    %369 = arith.addf %366, %368 : vector<8x64xf32>
    %370 = arith.negf %369 : vector<8x64xf32>
    %371 = math.exp %370 : vector<8x64xf32>
    %cst_113 = arith.constant 1.000000e+00 : f32
    %372 = vector.broadcast %cst_113 : f32 to vector<8x64xf32>
    %373 = arith.addf %372, %371 : vector<8x64xf32>
    %374 = arith.divf %372, %373 : vector<8x64xf32>
    %375 = vector.extract_strided_slice %374 {offsets = [0, 0], sizes = [8, 32], strides = [1, 1]} : vector<8x64xf32> to vector<8x32xf32>
    %376 = vector.extract_strided_slice %374 {offsets = [0, 32], sizes = [8, 32], strides = [1, 1]} : vector<8x64xf32> to vector<8x32xf32>
    %377 = vector.extract_strided_slice %365 {offsets = [0, 64], sizes = [8, 32], strides = [1, 1]} : vector<8x96xf32> to vector<8x32xf32>
    %378 = arith.mulf %375, %346 : vector<8x32xf32>
    %379 = arith.truncf %378 : vector<8x32xf32> to vector<8x32xbf16>
    %cst_114 = arith.constant dense<0.000000e+00> : vector<8x32xf32>
    %380 = tpu.matmul %379, %3, %cst_114 {dimension_numbers = #tpu.dot_dimension_numbers<[1], [0], [0], [1], [0, 0, 1, 1], [], []>} : vector<8x32xbf16>, vector<32x32xbf16>, vector<8x32xf32> -> vector<8x32xf32>
    %381 = arith.addf %377, %380 : vector<8x32xf32>
    %382 = math.tanh %381 : vector<8x32xf32>
    %cst_115 = arith.constant 1.000000e+00 : f32
    %383 = vector.broadcast %cst_115 : f32 to vector<8x32xf32>
    %384 = arith.subf %383, %376 : vector<8x32xf32>
    %385 = arith.mulf %384, %346 : vector<8x32xf32>
    %386 = arith.mulf %376, %382 : vector<8x32xf32>
    %387 = arith.addf %385, %386 : vector<8x32xf32>
    %388 = arith.truncf %387 : vector<8x32xf32> to vector<8x32xbf16>
    %cst_116 = arith.constant dense<0.000000e+00> : vector<8x5xf32>
    %389 = tpu.matmul %388, %4, %cst_116 {dimension_numbers = #tpu.dot_dimension_numbers<[1], [0], [0], [1], [0, 0, 1, 1], [], []>} : vector<8x32xbf16>, vector<32x5xbf16>, vector<8x5xf32> -> vector<8x5xf32>
    %390 = arith.addf %389, %11 : vector<8x5xf32>
    %391 = vector.extract_strided_slice %390 {offsets = [0, 0], sizes = [8, 4], strides = [1, 1]} : vector<8x5xf32> to vector<8x4xf32>
    %392 = vector.extract_strided_slice %390 {offsets = [0, 4], sizes = [8, 1], strides = [1, 1]} : vector<8x5xf32> to vector<8x1xf32>
    %cst_117 = arith.constant 5.000000e-01 : f32
    %393 = arith.mulf %5, %cst_117 : f32
    %394 = vector.broadcast %393 : f32 to vector<8x1xf32>
    %395 = arith.addf %392, %394 : vector<8x1xf32>
    %cst_118 = arith.constant 0.000000e+00 : f32
    %396 = vector.broadcast %cst_118 : f32 to vector<8x1xf32>
    %397 = arith.cmpf oge, %395, %396 : vector<8x1xf32>
    %cst_119 = arith.constant -1.000000e+00 : f32
    %398 = vector.broadcast %cst_119 : f32 to vector<8x1xf32>
    %399 = arith.cmpf oeq, %329, %398 : vector<8x1xf32>
    %400 = arith.andi %397, %399 : vector<8x1xi1>
    %401 = vector.shape_cast %400 : vector<8x1xi1> to vector<8x1xi1>
    %402 = vector.broadcast %401 : vector<8x1xi1> to vector<8x4xi1>
    %403 = arith.select %402, %391, %327 : vector<8x4xi1>, vector<8x4xf32>
    %cst_120 = arith.constant 5.000000e+00 : f32
    %404 = vector.broadcast %cst_120 : f32 to vector<8x1xf32>
    %405 = arith.select %400, %404, %329 : vector<8x1xi1>, vector<8x1xf32>
    %c5 = arith.constant 5 : index
    %c0_121 = arith.constant 0 : index
    %c0_122 = arith.constant 0 : index
    %406 = vector.load %arg1[%c5, %c0_121, %c0_122] : memref<8x8x8xf32, #tpu.memory_space<vmem>>, vector<1x8x8xf32>
    %407 = vector.shape_cast %406 : vector<1x8x8xf32> to vector<8x8xf32>
    %cst_123 = arith.constant 0.000000e+00 : f32
    %408 = vector.broadcast %cst_123 : f32 to vector<8x8xf32>
    %409 = arith.cmpf one, %407, %408 : vector<8x8xf32>
    %410 = arith.extui %409 : vector<8x8xi1> to vector<8x8xi32>
    %411 = arith.sitofp %410 : vector<8x8xi32> to vector<8x8xf32>
    %412 = arith.mulf %411, %407 : vector<8x8xf32>
    %413 = arith.addf %337, %412 : vector<8x8xf32>
    %414 = arith.addf %338, %411 : vector<8x8xf32>
    %cst_124 = arith.constant 0.000000e+00 : f32
    %415 = vector.broadcast %cst_124 : f32 to vector<8x8xf32>
    %416 = arith.cmpf ogt, %414, %415 : vector<8x8xf32>
    %cst_125 = arith.constant 1.000000e+00 : f32
    %417 = vector.broadcast %cst_125 : f32 to vector<8x8xf32>
    %418 = arith.select %416, %414, %417 : vector<8x8xi1>, vector<8x8xf32>
    %419 = arith.divf %413, %418 : vector<8x8xf32>
    %cst_126 = arith.constant 0.000000e+00 : f32
    %420 = vector.broadcast %cst_126 : f32 to vector<8x8xf32>
    %421 = arith.select %416, %419, %420 : vector<8x8xi1>, vector<8x8xf32>
    %422 = arith.mulf %17, %387 : vector<8x32xf32>
    %423 = arith.mulf %411, %407 : vector<8x8xf32>
    %cst_127 = arith.constant 1.000000e+00 : f32
    %424 = vector.broadcast %cst_127 : f32 to vector<8x8xf32>
    %425 = arith.subf %424, %411 : vector<8x8xf32>
    %426 = arith.mulf %425, %351 : vector<8x8xf32>
    %427 = arith.addf %423, %426 : vector<8x8xf32>
    %428 = arith.mulf %411, %407 : vector<8x8xf32>
    %cst_128 = arith.constant 1.000000e+00 : f32
    %429 = vector.broadcast %cst_128 : f32 to vector<8x8xf32>
    %430 = arith.subf %429, %411 : vector<8x8xf32>
    %431 = arith.mulf %14, %427 : vector<8x8xf32>
    %432 = arith.mulf %19, %421 : vector<8x8xf32>
    %433 = arith.addf %431, %432 : vector<8x8xf32>
    %434 = arith.mulf %430, %433 : vector<8x8xf32>
    %435 = arith.addf %428, %434 : vector<8x8xf32>
    %436 = arith.truncf %435 : vector<8x8xf32> to vector<8x8xbf16>
    %cst_129 = arith.constant dense<0.000000e+00> : vector<8x96xf32>
    %437 = tpu.matmul %436, %0, %cst_129 {dimension_numbers = #tpu.dot_dimension_numbers<[1], [0], [0], [1], [0, 0, 1, 1], [], []>} : vector<8x8xbf16>, vector<8x96xbf16>, vector<8x96xf32> -> vector<8x96xf32>
    %438 = arith.truncf %411 : vector<8x8xf32> to vector<8x8xbf16>
    %cst_130 = arith.constant dense<0.000000e+00> : vector<8x96xf32>
    %439 = tpu.matmul %438, %1, %cst_130 {dimension_numbers = #tpu.dot_dimension_numbers<[1], [0], [0], [1], [0, 0, 1, 1], [], []>} : vector<8x8xbf16>, vector<8x96xbf16>, vector<8x96xf32> -> vector<8x96xf32>
    %440 = arith.addf %437, %439 : vector<8x96xf32>
    %441 = arith.addf %440, %8 : vector<8x96xf32>
    %442 = vector.extract_strided_slice %441 {offsets = [0, 0], sizes = [8, 64], strides = [1, 1]} : vector<8x96xf32> to vector<8x64xf32>
    %443 = arith.truncf %422 : vector<8x32xf32> to vector<8x32xbf16>
    %cst_131 = arith.constant dense<0.000000e+00> : vector<8x64xf32>
    %444 = tpu.matmul %443, %2, %cst_131 {dimension_numbers = #tpu.dot_dimension_numbers<[1], [0], [0], [1], [0, 0, 1, 1], [], []>} : vector<8x32xbf16>, vector<32x64xbf16>, vector<8x64xf32> -> vector<8x64xf32>
    %445 = arith.addf %442, %444 : vector<8x64xf32>
    %446 = arith.negf %445 : vector<8x64xf32>
    %447 = math.exp %446 : vector<8x64xf32>
    %cst_132 = arith.constant 1.000000e+00 : f32
    %448 = vector.broadcast %cst_132 : f32 to vector<8x64xf32>
    %449 = arith.addf %448, %447 : vector<8x64xf32>
    %450 = arith.divf %448, %449 : vector<8x64xf32>
    %451 = vector.extract_strided_slice %450 {offsets = [0, 0], sizes = [8, 32], strides = [1, 1]} : vector<8x64xf32> to vector<8x32xf32>
    %452 = vector.extract_strided_slice %450 {offsets = [0, 32], sizes = [8, 32], strides = [1, 1]} : vector<8x64xf32> to vector<8x32xf32>
    %453 = vector.extract_strided_slice %441 {offsets = [0, 64], sizes = [8, 32], strides = [1, 1]} : vector<8x96xf32> to vector<8x32xf32>
    %454 = arith.mulf %451, %422 : vector<8x32xf32>
    %455 = arith.truncf %454 : vector<8x32xf32> to vector<8x32xbf16>
    %cst_133 = arith.constant dense<0.000000e+00> : vector<8x32xf32>
    %456 = tpu.matmul %455, %3, %cst_133 {dimension_numbers = #tpu.dot_dimension_numbers<[1], [0], [0], [1], [0, 0, 1, 1], [], []>} : vector<8x32xbf16>, vector<32x32xbf16>, vector<8x32xf32> -> vector<8x32xf32>
    %457 = arith.addf %453, %456 : vector<8x32xf32>
    %458 = math.tanh %457 : vector<8x32xf32>
    %cst_134 = arith.constant 1.000000e+00 : f32
    %459 = vector.broadcast %cst_134 : f32 to vector<8x32xf32>
    %460 = arith.subf %459, %452 : vector<8x32xf32>
    %461 = arith.mulf %460, %422 : vector<8x32xf32>
    %462 = arith.mulf %452, %458 : vector<8x32xf32>
    %463 = arith.addf %461, %462 : vector<8x32xf32>
    %464 = arith.truncf %463 : vector<8x32xf32> to vector<8x32xbf16>
    %cst_135 = arith.constant dense<0.000000e+00> : vector<8x5xf32>
    %465 = tpu.matmul %464, %4, %cst_135 {dimension_numbers = #tpu.dot_dimension_numbers<[1], [0], [0], [1], [0, 0, 1, 1], [], []>} : vector<8x32xbf16>, vector<32x5xbf16>, vector<8x5xf32> -> vector<8x5xf32>
    %466 = arith.addf %465, %11 : vector<8x5xf32>
    %467 = vector.extract_strided_slice %466 {offsets = [0, 0], sizes = [8, 4], strides = [1, 1]} : vector<8x5xf32> to vector<8x4xf32>
    %468 = vector.extract_strided_slice %466 {offsets = [0, 4], sizes = [8, 1], strides = [1, 1]} : vector<8x5xf32> to vector<8x1xf32>
    %cst_136 = arith.constant 6.250000e-01 : f32
    %469 = arith.mulf %5, %cst_136 : f32
    %470 = vector.broadcast %469 : f32 to vector<8x1xf32>
    %471 = arith.addf %468, %470 : vector<8x1xf32>
    %cst_137 = arith.constant 0.000000e+00 : f32
    %472 = vector.broadcast %cst_137 : f32 to vector<8x1xf32>
    %473 = arith.cmpf oge, %471, %472 : vector<8x1xf32>
    %cst_138 = arith.constant -1.000000e+00 : f32
    %474 = vector.broadcast %cst_138 : f32 to vector<8x1xf32>
    %475 = arith.cmpf oeq, %405, %474 : vector<8x1xf32>
    %476 = arith.andi %473, %475 : vector<8x1xi1>
    %477 = vector.shape_cast %476 : vector<8x1xi1> to vector<8x1xi1>
    %478 = vector.broadcast %477 : vector<8x1xi1> to vector<8x4xi1>
    %479 = arith.select %478, %467, %403 : vector<8x4xi1>, vector<8x4xf32>
    %cst_139 = arith.constant 6.000000e+00 : f32
    %480 = vector.broadcast %cst_139 : f32 to vector<8x1xf32>
    %481 = arith.select %476, %480, %405 : vector<8x1xi1>, vector<8x1xf32>
    %c6 = arith.constant 6 : index
    %c0_140 = arith.constant 0 : index
    %c0_141 = arith.constant 0 : index
    %482 = vector.load %arg1[%c6, %c0_140, %c0_141] : memref<8x8x8xf32, #tpu.memory_space<vmem>>, vector<1x8x8xf32>
    %483 = vector.shape_cast %482 : vector<1x8x8xf32> to vector<8x8xf32>
    %cst_142 = arith.constant 0.000000e+00 : f32
    %484 = vector.broadcast %cst_142 : f32 to vector<8x8xf32>
    %485 = arith.cmpf one, %483, %484 : vector<8x8xf32>
    %486 = arith.extui %485 : vector<8x8xi1> to vector<8x8xi32>
    %487 = arith.sitofp %486 : vector<8x8xi32> to vector<8x8xf32>
    %488 = arith.mulf %487, %483 : vector<8x8xf32>
    %489 = arith.addf %413, %488 : vector<8x8xf32>
    %490 = arith.addf %414, %487 : vector<8x8xf32>
    %cst_143 = arith.constant 0.000000e+00 : f32
    %491 = vector.broadcast %cst_143 : f32 to vector<8x8xf32>
    %492 = arith.cmpf ogt, %490, %491 : vector<8x8xf32>
    %cst_144 = arith.constant 1.000000e+00 : f32
    %493 = vector.broadcast %cst_144 : f32 to vector<8x8xf32>
    %494 = arith.select %492, %490, %493 : vector<8x8xi1>, vector<8x8xf32>
    %495 = arith.divf %489, %494 : vector<8x8xf32>
    %cst_145 = arith.constant 0.000000e+00 : f32
    %496 = vector.broadcast %cst_145 : f32 to vector<8x8xf32>
    %497 = arith.select %492, %495, %496 : vector<8x8xi1>, vector<8x8xf32>
    %498 = arith.mulf %17, %463 : vector<8x32xf32>
    %499 = arith.mulf %487, %483 : vector<8x8xf32>
    %cst_146 = arith.constant 1.000000e+00 : f32
    %500 = vector.broadcast %cst_146 : f32 to vector<8x8xf32>
    %501 = arith.subf %500, %487 : vector<8x8xf32>
    %502 = arith.mulf %501, %427 : vector<8x8xf32>
    %503 = arith.addf %499, %502 : vector<8x8xf32>
    %504 = arith.mulf %487, %483 : vector<8x8xf32>
    %cst_147 = arith.constant 1.000000e+00 : f32
    %505 = vector.broadcast %cst_147 : f32 to vector<8x8xf32>
    %506 = arith.subf %505, %487 : vector<8x8xf32>
    %507 = arith.mulf %14, %503 : vector<8x8xf32>
    %508 = arith.mulf %19, %497 : vector<8x8xf32>
    %509 = arith.addf %507, %508 : vector<8x8xf32>
    %510 = arith.mulf %506, %509 : vector<8x8xf32>
    %511 = arith.addf %504, %510 : vector<8x8xf32>
    %512 = arith.truncf %511 : vector<8x8xf32> to vector<8x8xbf16>
    %cst_148 = arith.constant dense<0.000000e+00> : vector<8x96xf32>
    %513 = tpu.matmul %512, %0, %cst_148 {dimension_numbers = #tpu.dot_dimension_numbers<[1], [0], [0], [1], [0, 0, 1, 1], [], []>} : vector<8x8xbf16>, vector<8x96xbf16>, vector<8x96xf32> -> vector<8x96xf32>
    %514 = arith.truncf %487 : vector<8x8xf32> to vector<8x8xbf16>
    %cst_149 = arith.constant dense<0.000000e+00> : vector<8x96xf32>
    %515 = tpu.matmul %514, %1, %cst_149 {dimension_numbers = #tpu.dot_dimension_numbers<[1], [0], [0], [1], [0, 0, 1, 1], [], []>} : vector<8x8xbf16>, vector<8x96xbf16>, vector<8x96xf32> -> vector<8x96xf32>
    %516 = arith.addf %513, %515 : vector<8x96xf32>
    %517 = arith.addf %516, %8 : vector<8x96xf32>
    %518 = vector.extract_strided_slice %517 {offsets = [0, 0], sizes = [8, 64], strides = [1, 1]} : vector<8x96xf32> to vector<8x64xf32>
    %519 = arith.truncf %498 : vector<8x32xf32> to vector<8x32xbf16>
    %cst_150 = arith.constant dense<0.000000e+00> : vector<8x64xf32>
    %520 = tpu.matmul %519, %2, %cst_150 {dimension_numbers = #tpu.dot_dimension_numbers<[1], [0], [0], [1], [0, 0, 1, 1], [], []>} : vector<8x32xbf16>, vector<32x64xbf16>, vector<8x64xf32> -> vector<8x64xf32>
    %521 = arith.addf %518, %520 : vector<8x64xf32>
    %522 = arith.negf %521 : vector<8x64xf32>
    %523 = math.exp %522 : vector<8x64xf32>
    %cst_151 = arith.constant 1.000000e+00 : f32
    %524 = vector.broadcast %cst_151 : f32 to vector<8x64xf32>
    %525 = arith.addf %524, %523 : vector<8x64xf32>
    %526 = arith.divf %524, %525 : vector<8x64xf32>
    %527 = vector.extract_strided_slice %526 {offsets = [0, 0], sizes = [8, 32], strides = [1, 1]} : vector<8x64xf32> to vector<8x32xf32>
    %528 = vector.extract_strided_slice %526 {offsets = [0, 32], sizes = [8, 32], strides = [1, 1]} : vector<8x64xf32> to vector<8x32xf32>
    %529 = vector.extract_strided_slice %517 {offsets = [0, 64], sizes = [8, 32], strides = [1, 1]} : vector<8x96xf32> to vector<8x32xf32>
    %530 = arith.mulf %527, %498 : vector<8x32xf32>
    %531 = arith.truncf %530 : vector<8x32xf32> to vector<8x32xbf16>
    %cst_152 = arith.constant dense<0.000000e+00> : vector<8x32xf32>
    %532 = tpu.matmul %531, %3, %cst_152 {dimension_numbers = #tpu.dot_dimension_numbers<[1], [0], [0], [1], [0, 0, 1, 1], [], []>} : vector<8x32xbf16>, vector<32x32xbf16>, vector<8x32xf32> -> vector<8x32xf32>
    %533 = arith.addf %529, %532 : vector<8x32xf32>
    %534 = math.tanh %533 : vector<8x32xf32>
    %cst_153 = arith.constant 1.000000e+00 : f32
    %535 = vector.broadcast %cst_153 : f32 to vector<8x32xf32>
    %536 = arith.subf %535, %528 : vector<8x32xf32>
    %537 = arith.mulf %536, %498 : vector<8x32xf32>
    %538 = arith.mulf %528, %534 : vector<8x32xf32>
    %539 = arith.addf %537, %538 : vector<8x32xf32>
    %540 = arith.truncf %539 : vector<8x32xf32> to vector<8x32xbf16>
    %cst_154 = arith.constant dense<0.000000e+00> : vector<8x5xf32>
    %541 = tpu.matmul %540, %4, %cst_154 {dimension_numbers = #tpu.dot_dimension_numbers<[1], [0], [0], [1], [0, 0, 1, 1], [], []>} : vector<8x32xbf16>, vector<32x5xbf16>, vector<8x5xf32> -> vector<8x5xf32>
    %542 = arith.addf %541, %11 : vector<8x5xf32>
    %543 = vector.extract_strided_slice %542 {offsets = [0, 0], sizes = [8, 4], strides = [1, 1]} : vector<8x5xf32> to vector<8x4xf32>
    %544 = vector.extract_strided_slice %542 {offsets = [0, 4], sizes = [8, 1], strides = [1, 1]} : vector<8x5xf32> to vector<8x1xf32>
    %cst_155 = arith.constant 7.500000e-01 : f32
    %545 = arith.mulf %5, %cst_155 : f32
    %546 = vector.broadcast %545 : f32 to vector<8x1xf32>
    %547 = arith.addf %544, %546 : vector<8x1xf32>
    %cst_156 = arith.constant 0.000000e+00 : f32
    %548 = vector.broadcast %cst_156 : f32 to vector<8x1xf32>
    %549 = arith.cmpf oge, %547, %548 : vector<8x1xf32>
    %cst_157 = arith.constant -1.000000e+00 : f32
    %550 = vector.broadcast %cst_157 : f32 to vector<8x1xf32>
    %551 = arith.cmpf oeq, %481, %550 : vector<8x1xf32>
    %552 = arith.andi %549, %551 : vector<8x1xi1>
    %553 = vector.shape_cast %552 : vector<8x1xi1> to vector<8x1xi1>
    %554 = vector.broadcast %553 : vector<8x1xi1> to vector<8x4xi1>
    %555 = arith.select %554, %543, %479 : vector<8x4xi1>, vector<8x4xf32>
    %cst_158 = arith.constant 7.000000e+00 : f32
    %556 = vector.broadcast %cst_158 : f32 to vector<8x1xf32>
    %557 = arith.select %552, %556, %481 : vector<8x1xi1>, vector<8x1xf32>
    %c7 = arith.constant 7 : index
    %c0_159 = arith.constant 0 : index
    %c0_160 = arith.constant 0 : index
    %558 = vector.load %arg1[%c7, %c0_159, %c0_160] : memref<8x8x8xf32, #tpu.memory_space<vmem>>, vector<1x8x8xf32>
    %559 = vector.shape_cast %558 : vector<1x8x8xf32> to vector<8x8xf32>
    %cst_161 = arith.constant 0.000000e+00 : f32
    %560 = vector.broadcast %cst_161 : f32 to vector<8x8xf32>
    %561 = arith.cmpf one, %559, %560 : vector<8x8xf32>
    %562 = arith.extui %561 : vector<8x8xi1> to vector<8x8xi32>
    %563 = arith.sitofp %562 : vector<8x8xi32> to vector<8x8xf32>
    %564 = arith.mulf %563, %559 : vector<8x8xf32>
    %565 = arith.addf %489, %564 : vector<8x8xf32>
    %566 = arith.addf %490, %563 : vector<8x8xf32>
    %cst_162 = arith.constant 0.000000e+00 : f32
    %567 = vector.broadcast %cst_162 : f32 to vector<8x8xf32>
    %568 = arith.cmpf ogt, %566, %567 : vector<8x8xf32>
    %cst_163 = arith.constant 1.000000e+00 : f32
    %569 = vector.broadcast %cst_163 : f32 to vector<8x8xf32>
    %570 = arith.select %568, %566, %569 : vector<8x8xi1>, vector<8x8xf32>
    %571 = arith.divf %565, %570 : vector<8x8xf32>
    %cst_164 = arith.constant 0.000000e+00 : f32
    %572 = vector.broadcast %cst_164 : f32 to vector<8x8xf32>
    %573 = arith.select %568, %571, %572 : vector<8x8xi1>, vector<8x8xf32>
    %574 = arith.mulf %17, %539 : vector<8x32xf32>
    %575 = arith.mulf %563, %559 : vector<8x8xf32>
    %cst_165 = arith.constant 1.000000e+00 : f32
    %576 = vector.broadcast %cst_165 : f32 to vector<8x8xf32>
    %577 = arith.subf %576, %563 : vector<8x8xf32>
    %578 = arith.mulf %577, %503 : vector<8x8xf32>
    %579 = arith.addf %575, %578 : vector<8x8xf32>
    %580 = arith.mulf %563, %559 : vector<8x8xf32>
    %cst_166 = arith.constant 1.000000e+00 : f32
    %581 = vector.broadcast %cst_166 : f32 to vector<8x8xf32>
    %582 = arith.subf %581, %563 : vector<8x8xf32>
    %583 = arith.mulf %14, %579 : vector<8x8xf32>
    %584 = arith.mulf %19, %573 : vector<8x8xf32>
    %585 = arith.addf %583, %584 : vector<8x8xf32>
    %586 = arith.mulf %582, %585 : vector<8x8xf32>
    %587 = arith.addf %580, %586 : vector<8x8xf32>
    %588 = arith.truncf %587 : vector<8x8xf32> to vector<8x8xbf16>
    %cst_167 = arith.constant dense<0.000000e+00> : vector<8x96xf32>
    %589 = tpu.matmul %588, %0, %cst_167 {dimension_numbers = #tpu.dot_dimension_numbers<[1], [0], [0], [1], [0, 0, 1, 1], [], []>} : vector<8x8xbf16>, vector<8x96xbf16>, vector<8x96xf32> -> vector<8x96xf32>
    %590 = arith.truncf %563 : vector<8x8xf32> to vector<8x8xbf16>
    %cst_168 = arith.constant dense<0.000000e+00> : vector<8x96xf32>
    %591 = tpu.matmul %590, %1, %cst_168 {dimension_numbers = #tpu.dot_dimension_numbers<[1], [0], [0], [1], [0, 0, 1, 1], [], []>} : vector<8x8xbf16>, vector<8x96xbf16>, vector<8x96xf32> -> vector<8x96xf32>
    %592 = arith.addf %589, %591 : vector<8x96xf32>
    %593 = arith.addf %592, %8 : vector<8x96xf32>
    %594 = vector.extract_strided_slice %593 {offsets = [0, 0], sizes = [8, 64], strides = [1, 1]} : vector<8x96xf32> to vector<8x64xf32>
    %595 = arith.truncf %574 : vector<8x32xf32> to vector<8x32xbf16>
    %cst_169 = arith.constant dense<0.000000e+00> : vector<8x64xf32>
    %596 = tpu.matmul %595, %2, %cst_169 {dimension_numbers = #tpu.dot_dimension_numbers<[1], [0], [0], [1], [0, 0, 1, 1], [], []>} : vector<8x32xbf16>, vector<32x64xbf16>, vector<8x64xf32> -> vector<8x64xf32>
    %597 = arith.addf %594, %596 : vector<8x64xf32>
    %598 = arith.negf %597 : vector<8x64xf32>
    %599 = math.exp %598 : vector<8x64xf32>
    %cst_170 = arith.constant 1.000000e+00 : f32
    %600 = vector.broadcast %cst_170 : f32 to vector<8x64xf32>
    %601 = arith.addf %600, %599 : vector<8x64xf32>
    %602 = arith.divf %600, %601 : vector<8x64xf32>
    %603 = vector.extract_strided_slice %602 {offsets = [0, 0], sizes = [8, 32], strides = [1, 1]} : vector<8x64xf32> to vector<8x32xf32>
    %604 = vector.extract_strided_slice %602 {offsets = [0, 32], sizes = [8, 32], strides = [1, 1]} : vector<8x64xf32> to vector<8x32xf32>
    %605 = vector.extract_strided_slice %593 {offsets = [0, 64], sizes = [8, 32], strides = [1, 1]} : vector<8x96xf32> to vector<8x32xf32>
    %606 = arith.mulf %603, %574 : vector<8x32xf32>
    %607 = arith.truncf %606 : vector<8x32xf32> to vector<8x32xbf16>
    %cst_171 = arith.constant dense<0.000000e+00> : vector<8x32xf32>
    %608 = tpu.matmul %607, %3, %cst_171 {dimension_numbers = #tpu.dot_dimension_numbers<[1], [0], [0], [1], [0, 0, 1, 1], [], []>} : vector<8x32xbf16>, vector<32x32xbf16>, vector<8x32xf32> -> vector<8x32xf32>
    %609 = arith.addf %605, %608 : vector<8x32xf32>
    %610 = math.tanh %609 : vector<8x32xf32>
    %cst_172 = arith.constant 1.000000e+00 : f32
    %611 = vector.broadcast %cst_172 : f32 to vector<8x32xf32>
    %612 = arith.subf %611, %604 : vector<8x32xf32>
    %613 = arith.mulf %612, %574 : vector<8x32xf32>
    %614 = arith.mulf %604, %610 : vector<8x32xf32>
    %615 = arith.addf %613, %614 : vector<8x32xf32>
    %616 = arith.truncf %615 : vector<8x32xf32> to vector<8x32xbf16>
    %cst_173 = arith.constant dense<0.000000e+00> : vector<8x5xf32>
    %617 = tpu.matmul %616, %4, %cst_173 {dimension_numbers = #tpu.dot_dimension_numbers<[1], [0], [0], [1], [0, 0, 1, 1], [], []>} : vector<8x32xbf16>, vector<32x5xbf16>, vector<8x5xf32> -> vector<8x5xf32>
    %618 = arith.addf %617, %11 : vector<8x5xf32>
    %619 = vector.extract_strided_slice %618 {offsets = [0, 0], sizes = [8, 4], strides = [1, 1]} : vector<8x5xf32> to vector<8x4xf32>
    %620 = vector.extract_strided_slice %618 {offsets = [0, 4], sizes = [8, 1], strides = [1, 1]} : vector<8x5xf32> to vector<8x1xf32>
    %cst_174 = arith.constant 8.750000e-01 : f32
    %621 = arith.mulf %5, %cst_174 : f32
    %622 = vector.broadcast %621 : f32 to vector<8x1xf32>
    %623 = arith.addf %620, %622 : vector<8x1xf32>
    %cst_175 = arith.constant 0.000000e+00 : f32
    %624 = vector.broadcast %cst_175 : f32 to vector<8x1xf32>
    %625 = arith.cmpf oge, %623, %624 : vector<8x1xf32>
    %cst_176 = arith.constant -1.000000e+00 : f32
    %626 = vector.broadcast %cst_176 : f32 to vector<8x1xf32>
    %627 = arith.cmpf oeq, %557, %626 : vector<8x1xf32>
    %628 = arith.andi %625, %627 : vector<8x1xi1>
    %629 = vector.shape_cast %628 : vector<8x1xi1> to vector<8x1xi1>
    %630 = vector.broadcast %629 : vector<8x1xi1> to vector<8x4xi1>
    %631 = arith.select %630, %619, %555 : vector<8x4xi1>, vector<8x4xf32>
    %cst_177 = arith.constant 8.000000e+00 : f32
    %632 = vector.broadcast %cst_177 : f32 to vector<8x1xf32>
    %633 = arith.select %628, %632, %557 : vector<8x1xi1>, vector<8x1xf32>
    %cst_178 = arith.constant -1.000000e+00 : f32
    %634 = vector.broadcast %cst_178 : f32 to vector<8x1xf32>
    %635 = arith.cmpf oeq, %633, %634 : vector<8x1xf32>
    %636 = vector.shape_cast %635 : vector<8x1xi1> to vector<8x1xi1>
    %637 = vector.broadcast %636 : vector<8x1xi1> to vector<8x4xi1>
    %638 = arith.select %637, %619, %631 : vector<8x4xi1>, vector<8x4xf32>
    %c0_179 = arith.constant 0 : index
    %c0_180 = arith.constant 0 : index
    %639 = vector.load %arg12[%c0_179, %c0_180] : memref<8x4xf32, #tpu.memory_space<vmem>>, vector<8x4xf32>
    tpu.vector_store %arg12[%c0_179, %c0_180], %638 {strides = array<i32>} : memref<8x4xf32, #tpu.memory_space<vmem>>, vector<8x4xf32>,
    %cst_181 = arith.constant 8.000000e+00 : f32
    %640 = vector.broadcast %cst_181 : f32 to vector<8x1xf32>
    %641 = arith.select %635, %640, %633 : vector<8x1xi1>, vector<8x1xf32>
    %c0_182 = arith.constant 0 : index
    %c0_183 = arith.constant 0 : index
    %642 = vector.load %arg13[%c0_182, %c0_183] : memref<8x1xf32, #tpu.memory_space<vmem>>, vector<8x1xf32>
    tpu.vector_store %arg13[%c0_182, %c0_183], %641 {strides = array<i32>} : memref<8x1xf32, #tpu.memory_space<vmem>>, vector<8x1xf32>,
    return
  }
  func.func @transform_0(%arg0: i32) -> (i32, i32, i32) {
    %c0_i32 = arith.constant 0 : i32
    %c0_i32_0 = arith.constant 0 : i32
    %c0_i32_1 = arith.constant 0 : i32
    return %c0_i32, %arg0, %c0_i32_0 : i32, i32, i32
  }
  func.func @transform_1(%arg0: i32) -> (i32, i32) {
    %c0_i32 = arith.constant 0 : i32
    %c0_i32_0 = arith.constant 0 : i32
    %c0_i32_1 = arith.constant 0 : i32
    return %c0_i32, %c0_i32_0 : i32, i32
  }
  func.func @transform_2(%arg0: i32) -> (i32, i32) {
    %c0_i32 = arith.constant 0 : i32
    %c0_i32_0 = arith.constant 0 : i32
    %c0_i32_1 = arith.constant 0 : i32
    return %c0_i32, %c0_i32_0 : i32, i32
  }
  func.func @transform_3(%arg0: i32) -> (i32, i32) {
    %c0_i32 = arith.constant 0 : i32
    %c0_i32_0 = arith.constant 0 : i32
    %c0_i32_1 = arith.constant 0 : i32
    return %c0_i32, %c0_i32_0 : i32, i32
  }
  func.func @transform_4(%arg0: i32) -> (i32, i32) {
    %c0_i32 = arith.constant 0 : i32
    %c0_i32_0 = arith.constant 0 : i32
    %c0_i32_1 = arith.constant 0 : i32
    return %c0_i32, %c0_i32_0 : i32, i32
  }
  func.func @transform_5(%arg0: i32) -> (i32, i32) {
    %c0_i32 = arith.constant 0 : i32
    %c0_i32_0 = arith.constant 0 : i32
    %c0_i32_1 = arith.constant 0 : i32
    return %c0_i32, %c0_i32_0 : i32, i32
  }
  func.func @transform_6(%arg0: i32) -> (i32, i32) {
    %c0_i32 = arith.constant 0 : i32
    %c0_i32_0 = arith.constant 0 : i32
    %c0_i32_1 = arith.constant 0 : i32
    return %c0_i32, %c0_i32_0 : i32, i32
  }
  func.func @transform_7(%arg0: i32) -> (i32, i32) {
    %c0_i32 = arith.constant 0 : i32
    %c0_i32_0 = arith.constant 0 : i32
    %c0_i32_1 = arith.constant 0 : i32
    return %c0_i32, %c0_i32_0 : i32, i32
  }
  func.func @transform_8(%arg0: i32) -> (i32, i32) {
    %c0_i32 = arith.constant 0 : i32
    %c0_i32_0 = arith.constant 0 : i32
    %c0_i32_1 = arith.constant 0 : i32
    return %c0_i32, %c0_i32_0 : i32, i32
  }
  func.func @transform_9(%arg0: i32) -> (i32, i32) {
    %c0_i32 = arith.constant 0 : i32
    %c0_i32_0 = arith.constant 0 : i32
    %c0_i32_1 = arith.constant 0 : i32
    return %c0_i32, %c0_i32_0 : i32, i32
  }
  func.func @transform_10(%arg0: i32) -> (i32, i32) {
    %c0_i32 = arith.constant 0 : i32
    %c0_i32_0 = arith.constant 0 : i32
    %c0_i32_1 = arith.constant 0 : i32
    return %c0_i32, %c0_i32_0 : i32, i32
  }
  func.func @transform_11(%arg0: i32) -> (i32, i32) {
    %c0_i32 = arith.constant 0 : i32
    %c0_i32_0 = arith.constant 0 : i32
    return %arg0, %c0_i32 : i32, i32
  }
  func.func @transform_12(%arg0: i32) -> (i32, i32) {
    %c0_i32 = arith.constant 0 : i32
    %c0_i32_0 = arith.constant 0 : i32
    return %arg0, %c0_i32 : i32, i32
  }
}

</mosaic_0001>

<llo_original>
// kernel: tpu_custom_call.1
$region0: #{tpu_custom_call.1}
  #allocation0 [shape = 'u32[]', space=smem, size = 0x4, offset = 0x4, fixed_abs, tag = 'smem constant byte address 0x4 - core index']
  #allocation1 [shape = 'u32[144,128]{1,0:T(1,128)}', space=vmem, size = 0x12000, scoped, tag = 'internal scratch']
  #allocation2 [shape = 'f32[1,1]{1,0:T(1,128)S(6)}', space=smem, size = 0x200, scoped, tag = 'scoped memory for tpu_custom_call.1']
  %s0 = inlined_call_operand.hbm [shape: f32[8,8,8], index: 0, kind: input, shape index: {}]
  %s1 = inlined_call_operand.vmem [shape: bf16[8,96], index: 1, kind: input, shape index: {}]
  %s2 = inlined_call_operand.vmem [shape: bf16[8,96], index: 2, kind: input, shape index: {}]
  %s3 = inlined_call_operand.vmem [shape: f32[1,96], index: 3, kind: input, shape index: {}]
  %s4 = inlined_call_operand.vmem [shape: bf16[32,64], index: 4, kind: input, shape index: {}]
  %s5 = inlined_call_operand.hbm [shape: bf16[32,32], index: 5, kind: input, shape index: {}]
  %s6 = inlined_call_operand.vmem [shape: bf16[32,5], index: 6, kind: input, shape index: {}]
  %s7 = inlined_call_operand.vmem [shape: f32[1,5], index: 7, kind: input, shape index: {}]
  %s8 = inlined_call_operand.vmem [shape: f32[1,8], index: 8, kind: input, shape index: {}]
  %s9 = inlined_call_operand.vmem [shape: f32[1,32], index: 9, kind: input, shape index: {}]
  %s10 = inlined_call_operand.<no memory space> [shape: f32[1,1], index: 10, kind: input, shape index: {}]
  %s11 = inlined_call_operand.vmem [shape: f32[8,4], index: 11, kind: output, shape index: {0}]
  %s12 = inlined_call_operand.vmem [shape: f32[8,1], index: 12, kind: output, shape index: {1}]
  %13 = xla_tuple %s11, %s12
  %s14 = sld [smem:[#allocation0]]
  $region70: #{tpu_custom_call.1} parent=0
    _
  %s16 = ssub.s32 1, %s14
  %s17 = scalar_select 0, %s16, %s14
  %18 = sst [smem:[#allocation2]] %s10
  $region1: #{tpu_custom_call.1} parent=0
    #allocation3 [shape = 'u8[32768]{0}', space=vmem, size = 0x8000, scoped, tag = 'input window, operand 0, single buffered']
    #allocation4 [shape = 's32[1]{0}', space=sflag, size = 0x4, scoped, tag = 'scoped memory for tpu_custom_call.1']
    #allocation5 [shape = 'u8[8192]{0}', space=vmem, size = 0x2000, scoped, tag = 'input window, operand 5, single buffered']
    #allocation6 [shape = 's32[1]{0}', space=sflag, size = 0x4, scoped, tag = 'scoped memory for tpu_custom_call.1']
    %19 = vsyncpa [#allocation4], 0
    %20 = vsyncpa [#allocation6], 0
    // Predicated region
    $region2: #{tpu_custom_call.1} parent=1 // pred_check
      _
    $region3: #{tpu_custom_call.1} parent=1 // pred_check_branch
      %22 = sbr.rel (0) target = $region5
    $region4: #{tpu_custom_call.1} parent=1 // pred_region
      %s24 = ssub.s32 1024, 1024
      %25 = vsyncadd [#allocation4], %s24
      %s26 = sshll.u32 [#allocation3], 4
      %s27 = int_to_ptr.vmem [resolvable:$true] %s26
      %32 = dma.hbm_to_vmem [thread:$0]  %s0, 1024, %s27, [#allocation4], 128, 128, 8
    $region5: #{tpu_custom_call.1} parent=1 // pred_fallthru
      _
    // Predicated region
    $region6: #{tpu_custom_call.1} parent=1 // pred_check
      _
    $region7: #{tpu_custom_call.1} parent=1 // pred_check_branch
      %34 = sbr.rel (0) target = $region9
    $region8: #{tpu_custom_call.1} parent=1 // pred_region
      _
    $region9: #{tpu_custom_call.1} parent=1 // pred_fallthru
      _
    // Predicated region
    $region10: #{tpu_custom_call.1} parent=1 // pred_check
      _
    $region11: #{tpu_custom_call.1} parent=1 // pred_check_branch
      %36 = sbr.rel (0) target = $region13
    $region12: #{tpu_custom_call.1} parent=1 // pred_region
      _
    $region13: #{tpu_custom_call.1} parent=1 // pred_fallthru
      _
    // Predicated region
    $region14: #{tpu_custom_call.1} parent=1 // pred_check
      _
    $region15: #{tpu_custom_call.1} parent=1 // pred_check_branch
      %38 = sbr.rel (0) target = $region17
    $region16: #{tpu_custom_call.1} parent=1 // pred_region
      _
    $region17: #{tpu_custom_call.1} parent=1 // pred_fallthru
      _
    // Predicated region
    $region18: #{tpu_custom_call.1} parent=1 // pred_check
      _
    $region19: #{tpu_custom_call.1} parent=1 // pred_check_branch
      %40 = sbr.rel (0) target = $region21
    $region20: #{tpu_custom_call.1} parent=1 // pred_region
      _
    $region21: #{tpu_custom_call.1} parent=1 // pred_fallthru
      _
    // Predicated region
    $region22: #{tpu_custom_call.1} parent=1 // pred_check
      _
    $region23: #{tpu_custom_call.1} parent=1 // pred_check_branch
      %42 = sbr.rel (0) target = $region25
    $region24: #{tpu_custom_call.1} parent=1 // pred_region
      %s44 = ssub.s32 256, 256
      %45 = vsyncadd [#allocation6], %s44
      %s46 = sshll.u32 [#allocation5], 4
      %s47 = int_to_ptr.vmem [resolvable:$true] %s46
      %52 = dma.hbm_to_vmem [thread:$0]  %s5, 256, %s47, [#allocation6], 64, 64, 4
    $region25: #{tpu_custom_call.1} parent=1 // pred_fallthru
      _
    // Predicated region
    $region26: #{tpu_custom_call.1} parent=1 // pred_check
      _
    $region27: #{tpu_custom_call.1} parent=1 // pred_check_branch
      %54 = sbr.rel (0) target = $region29
    $region28: #{tpu_custom_call.1} parent=1 // pred_region
      _
    $region29: #{tpu_custom_call.1} parent=1 // pred_fallthru
      _
    // Predicated region
    $region30: #{tpu_custom_call.1} parent=1 // pred_check
      _
    $region31: #{tpu_custom_call.1} parent=1 // pred_check_branch
      %56 = sbr.rel (0) target = $region33
    $region32: #{tpu_custom_call.1} parent=1 // pred_region
      _
    $region33: #{tpu_custom_call.1} parent=1 // pred_fallthru
      _
    // Predicated region
    $region34: #{tpu_custom_call.1} parent=1 // pred_check
      _
    $region35: #{tpu_custom_call.1} parent=1 // pred_check_branch
      %58 = sbr.rel (0) target = $region37
    $region36: #{tpu_custom_call.1} parent=1 // pred_region
      _
    $region37: #{tpu_custom_call.1} parent=1 // pred_fallthru
      _
    // Predicated region
    $region38: #{tpu_custom_call.1} parent=1 // pred_check
      _
    $region39: #{tpu_custom_call.1} parent=1 // pred_check_branch
      %60 = sbr.rel (0) target = $region41
    $region40: #{tpu_custom_call.1} parent=1 // pred_region
      _
    $region41: #{tpu_custom_call.1} parent=1 // pred_fallthru
      _
    // Predicated region
    $region42: #{tpu_custom_call.1} parent=1 // pred_check
      _
    $region43: #{tpu_custom_call.1} parent=1 // pred_check_branch
      %62 = sbr.rel (0) target = $region45
    $region44: #{tpu_custom_call.1} parent=1 // pred_region
      _
    $region45: #{tpu_custom_call.1} parent=1 // pred_fallthru
      _
    // Predicated region
    $region46: #{tpu_custom_call.1} parent=1 // pred_check
      _
    $region47: #{tpu_custom_call.1} parent=1 // pred_check_branch
      %64 = sbr.rel (0) target = $region49
    $region48: #{tpu_custom_call.1} parent=1 // pred_region
      %65 = dma.done [#allocation4], 1024
    $region49: #{tpu_custom_call.1} parent=1 // pred_fallthru
      _
    // Predicated region
    $region50: #{tpu_custom_call.1} parent=1 // pred_check
      _
    $region51: #{tpu_custom_call.1} parent=1 // pred_check_branch
      %67 = sbr.rel (0) target = $region53
    $region52: #{tpu_custom_call.1} parent=1 // pred_region
      %68 = dma.done [#allocation6], 256
    $region53: #{tpu_custom_call.1} parent=1 // pred_fallthru
      _
    %v70 = vld [vmem:[%s1] sm:$0xf]
    %v71 = vld [vmem:[%s2] sm:$0xf]
    %v72 = vld [vmem:[%s4] sm:$0xf]
    %v73 = vld [vmem:[%s4 + $0x4] sm:$0xf]
    %v74 = vld [vmem:[%s4 + $0x8] sm:$0xf]
    %v75 = vld [vmem:[%s4 + $0xc] sm:$0xf]
    %v76 = vld [vmem:[#allocation5] sm:$0xf]
    %v77 = vld [vmem:[#allocation5 + $0x4] sm:$0xf]
    %v78 = vld [vmem:[#allocation5 + $0x8] sm:$0xf]
    %v79 = vld [vmem:[#allocation5 + $0xc] sm:$0xf]
    %v80 = vld [vmem:[%s6] sm:$0xf]
    %v81 = vld [vmem:[%s6 + $0x4] sm:$0xf]
    %v82 = vld [vmem:[%s6 + $0x8] sm:$0xf]
    %v83 = vld [vmem:[%s6 + $0xc] sm:$0xf]
    %s84 = sld [smem:[#allocation2]]
    %v85 = vld [vmem:[%s3] sm:$0x1]
    %v87 = vlaneseq
    %v88 = vshrl.u32 %v87, 7
    %v89 = vsub.s32 0, %v88
    %v90 = vrot.slane %v85, %v89
    %v92 = vld [vmem:[%s7] sm:$0x1]
    %v94 = vlaneseq
    %v95 = vshrl.u32 %v94, 7
    %v96 = vsub.s32 0, %v95
    %v97 = vrot.slane %v92, %v96
    %v99 = vld [vmem:[%s8] sm:$0x1]
    %v101 = vlaneseq
    %v102 = vshrl.u32 %v101, 7
    %v103 = vsub.s32 0, %v102
    %v104 = vrot.slane %v99, %v103
    %v106 = vld [vmem:[%s9] sm:$0x1]
    %v108 = vlaneseq
    %v109 = vshrl.u32 %v108, 7
    %v110 = vsub.s32 0, %v109
    %v111 = vrot.slane %v106, %v110
    %v113 = vsub.f32 1.0, %v104
    %v114 = vld [vmem:[#allocation3] sm:$0xff]
    %vm115 = vcmp.ne.f32.partialorder %v114, 0.0
    %v116 = vsel %vm115, 1, 0
    %v117 = vcvt.s32.f32 %v116
    %v118 = vmul.f32 %v117, %v114
    %v119 = vadd.f32 %v118, 0.0
    %v120 = vadd.f32 %v117, 0.0
    %vm121 = vcmp.gt.f32.partialorder %v120, 0.0
    %v122 = vsel %vm121, %v120, 1.0
    %v123 = vrcp.pop %v122
    %v124 = vmul.f32 %v119, %v123
    %v125 = vsel %vm121, %v124, 0.0
    %v126 = vmul.f32 %v111, 0.0
    %v127 = vsub.f32 1.0, %v117
    %v128 = vmul.f32 %v127, 0.0
    %v129 = vadd.f32 %v118, %v128
    %v130 = vmul.f32 %v104, %v129
    %v131 = vmul.f32 %v113, %v125
    %v132 = vadd.f32 %v130, %v131
    %v133 = vmul.f32 %v127, %v132
    %v134 = vadd.f32 %v118, %v133
    %v135 = vpack.c.bf16 %v134, %v134
    %v136 = vpack.c.bf16 %v117, %v117
    %vm137 = vcmask 64512
    %v139 = vsel %vm137, %v136, 0
    %vm141 = vcmask 1043456
    %v143 = vsel %vm141, %v71, 0
    %145 = vmatprep.subr.bf16.mxu0 0
    %146 = vmatpush1.bf16.msra.mxu0 0
    %147 = vmatprep.subr.bf16.mxu0 0
    %148 = vmatpush1.bf16.msra.mxu0 0
    %149 = vmatprep.subr.bf16.mxu0 0
    %150 = vmatpush1.bf16.msra.mxu0 0
    %151 = vmatprep.subr.bf16.mxu0 0
    %152 = vmatpush1.bf16.msra.mxu0 0
    %153 = vmatprep.subr.bf16.mxu0 0
    %154 = vmatpush1.bf16.msra.mxu0 0
    %155 = vmatprep.subr.bf16.mxu0 0
    %156 = vmatpush1.bf16.msra.mxu0 0
    %157 = vmatprep.subr.bf16.mxu0 0
    %158 = vmatpush1.bf16.msra.mxu0 0
    %159 = vmatprep.subr.bf16.mxu0 0
    %160 = vmatpush1.bf16.msra.mxu0 %v143
    %161 = vmatprep.subr.bf16.mxu0 0
    %162 = vmatpush2.bf16.msra.mxu0 0
    %163 = vmatprep.subr.bf16.mxu0 0
    %164 = vmatpush2.bf16.msra.mxu0 0
    %165 = vmatprep.subr.bf16.mxu0 0
    %166 = vmatpush2.bf16.msra.mxu0 0
    %167 = vmatprep.subr.bf16.mxu0 0
    %168 = vmatpush2.bf16.msra.mxu0 0
    %169 = vmatprep.subr.bf16.mxu0 0
    %170 = vmatpush2.bf16.msra.mxu0 0
    %171 = vmatprep.subr.bf16.mxu0 0
    %172 = vmatpush2.bf16.msra.mxu0 0
    %173 = vmatprep.subr.bf16.mxu0 0
    %174 = vmatpush2.bf16.msra.mxu0 0
    %175 = vmatprep.subr.bf16.mxu0 0
    %176 = vmatpush2.bf16.msra.mxu0 0
    %177 = vmatprep.mubr.bf16.mxu0 0
    %178 = vmatmul.mubr.bf16.gmra.mxu0 %v139
    %v179 = vpop.f32.mrf.mxu0
    %v180 = vadd.f32 0.0, %v179
    %v181 = vpop.f32.mrf.mxu0
    %v182 = vpop.f32.mrf.mxu0
    %v183 = vpop.f32.mrf.mxu0
    %184 = vdwg.mxu0
    %v186 = vsel %vm137, %v135, 0
    %v189 = vsel %vm141, %v70, 0
    %191 = vmatprep.subr.bf16.mxu0 0
    %192 = vmatpush1.bf16.msra.mxu0 0
    %193 = vmatprep.subr.bf16.mxu0 0
    %194 = vmatpush1.bf16.msra.mxu0 0
    %195 = vmatprep.subr.bf16.mxu0 0
    %196 = vmatpush1.bf16.msra.mxu0 0
    %197 = vmatprep.subr.bf16.mxu0 0
    %198 = vmatpush1.bf16.msra.mxu0 0
    %199 = vmatprep.subr.bf16.mxu0 0
    %200 = vmatpush1.bf16.msra.mxu0 0
    %201 = vmatprep.subr.bf16.mxu0 0
    %202 = vmatpush1.bf16.msra.mxu0 0
    %203 = vmatprep.subr.bf16.mxu0 0
    %204 = vmatpush1.bf16.msra.mxu0 0
    %205 = vmatprep.subr.bf16.mxu0 0
    %206 = vmatpush1.bf16.msra.mxu0 %v189
    %207 = vmatprep.subr.bf16.mxu0 0
    %208 = vmatpush2.bf16.msra.mxu0 0
    %209 = vmatprep.subr.bf16.mxu0 0
    %210 = vmatpush2.bf16.msra.mxu0 0
    %211 = vmatprep.subr.bf16.mxu0 0
    %212 = vmatpush2.bf16.msra.mxu0 0
    %213 = vmatprep.subr.bf16.mxu0 0
    %214 = vmatpush2.bf16.msra.mxu0 0
    %215 = vmatprep.subr.bf16.mxu0 0
    %216 = vmatpush2.bf16.msra.mxu0 0
    %217 = vmatprep.subr.bf16.mxu0 0
    %218 = vmatpush2.bf16.msra.mxu0 0
    %219 = vmatprep.subr.bf16.mxu0 0
    %220 = vmatpush2.bf16.msra.mxu0 0
    %221 = vmatprep.subr.bf16.mxu0 0
    %222 = vmatpush2.bf16.msra.mxu0 0
    %223 = vmatprep.mubr.bf16.mxu0 0
    %224 = vmatmul.mubr.bf16.gmra.mxu0 %v186
    %v225 = vpop.f32.mrf.mxu0
    %v226 = vadd.f32 %v180, %v225
    %v227 = vpop.f32.mrf.mxu0
    %v228 = vpop.f32.mrf.mxu0
    %v229 = vpop.f32.mrf.mxu0
    %230 = vdwg.mxu0
    %v231 = vadd.f32 %v226, %v90
    %v232 = vpack.c.bf16 %v126, %v126
    %v237 = vunpack.c.l.b16 %v72
    %v238 = vunpack.c.l.b16 %v73
    %v239 = vunpack.c.l.b16 %v74
    %v240 = vunpack.c.l.b16 %v75
    %v241 = vpack.c.b16 %v238, %v237
    %v242 = vpack.c.b16 %v240, %v239
    %vm245 = vcmask 261120
    %v247 = vsel %vm245, %v232, 0
    %249 = vmatprep.subr.bf16.mxu0 0
    %250 = vmatpush1.bf16.msra.mxu0 0
    %251 = vmatprep.subr.bf16.mxu0 0
    %252 = vmatpush1.bf16.msra.mxu0 0
    %253 = vmatprep.subr.bf16.mxu0 0
    %254 = vmatpush1.bf16.msra.mxu0 0
    %255 = vmatprep.subr.bf16.mxu0 0
    %256 = vmatpush1.bf16.msra.mxu0 0
    %257 = vmatprep.subr.bf16.mxu0 0
    %258 = vmatpush1.bf16.msra.mxu0 0
    %259 = vmatprep.subr.bf16.mxu0 0
    %260 = vmatpush1.bf16.msra.mxu0 0
    %261 = vmatprep.subr.bf16.mxu0 0
    %262 = vmatpush1.bf16.msra.mxu0 %v242
    %263 = vmatprep.subr.bf16.mxu0 0
    %264 = vmatpush1.bf16.msra.mxu0 %v241
    %265 = vmatprep.subr.bf16.mxu0 0
    %266 = vmatpush2.bf16.msra.mxu0 0
    %267 = vmatprep.subr.bf16.mxu0 0
    %268 = vmatpush2.bf16.msra.mxu0 0
    %269 = vmatprep.subr.bf16.mxu0 0
    %270 = vmatpush2.bf16.msra.mxu0 0
    %271 = vmatprep.subr.bf16.mxu0 0
    %272 = vmatpush2.bf16.msra.mxu0 0
    %273 = vmatprep.subr.bf16.mxu0 0
    %274 = vmatpush2.bf16.msra.mxu0 0
    %275 = vmatprep.subr.bf16.mxu0 0
    %276 = vmatpush2.bf16.msra.mxu0 0
    %277 = vmatprep.subr.bf16.mxu0 0
    %278 = vmatpush2.bf16.msra.mxu0 0
    %279 = vmatprep.subr.bf16.mxu0 0
    %280 = vmatpush2.bf16.msra.mxu0 0
    %281 = vmatprep.mubr.bf16.mxu0 0
    %282 = vmatmul.mubr.bf16.gmra.mxu0 %v247
    %v283 = vpop.f32.mrf.mxu0
    %v284 = vadd.f32 0.0, %v283
    %v285 = vpop.f32.mrf.mxu0
    %v286 = vpop.f32.mrf.mxu0
    %v287 = vpop.f32.mrf.mxu0
    %288 = vdwg.mxu0
    %v289 = vadd.f32 %v231, %v284
    %v290 = vxor.u32 %v289, 2147483648
    %v291 = vmul.f32 %v290, 1.442695
    %v292 = vpow.pop %v291
    %v293 = vadd.f32 %v292, 1.0
    %v294 = vrcp.pop %v293
    %v295 = vmul.f32 1.0, %v294
    %v296 = vmul.f32 %v295, %v126
    %v297 = vpack.c.bf16 %v296, %v296
    %v302 = vunpack.c.l.b16 %v76
    %v303 = vunpack.c.l.b16 %v77
    %v304 = vunpack.c.l.b16 %v78
    %v305 = vunpack.c.l.b16 %v79
    %v306 = vpack.c.b16 %v303, %v302
    %v307 = vpack.c.b16 %v305, %v304
    %v311 = vsel %vm245, %v297, 0
    %313 = vmatprep.subr.bf16.mxu0 0
    %314 = vmatpush1.bf16.msra.mxu0 0
    %315 = vmatprep.subr.bf16.mxu0 0
    %316 = vmatpush1.bf16.msra.mxu0 0
    %317 = vmatprep.subr.bf16.mxu0 0
    %318 = vmatpush1.bf16.msra.mxu0 0
    %319 = vmatprep.subr.bf16.mxu0 0
    %320 = vmatpush1.bf16.msra.mxu0 0
    %321 = vmatprep.subr.bf16.mxu0 0
    %322 = vmatpush1.bf16.msra.mxu0 0
    %323 = vmatprep.subr.bf16.mxu0 0
    %324 = vmatpush1.bf16.msra.mxu0 0
    %325 = vmatprep.subr.bf16.mxu0 0
    %326 = vmatpush1.bf16.msra.mxu0 %v307
    %327 = vmatprep.subr.bf16.mxu0 0
    %328 = vmatpush1.bf16.msra.mxu0 %v306
    %329 = vmatprep.subr.bf16.mxu0 0
    %330 = vmatpush2.bf16.msra.mxu0 0
    %331 = vmatprep.subr.bf16.mxu0 0
    %332 = vmatpush2.bf16.msra.mxu0 0
    %333 = vmatprep.subr.bf16.mxu0 0
    %334 = vmatpush2.bf16.msra.mxu0 0
    %335 = vmatprep.subr.bf16.mxu0 0
    %336 = vmatpush2.bf16.msra.mxu0 0
    %337 = vmatprep.subr.bf16.mxu0 0
    %338 = vmatpush2.bf16.msra.mxu0 0
    %339 = vmatprep.subr.bf16.mxu0 0
    %340 = vmatpush2.bf16.msra.mxu0 0
    %341 = vmatprep.subr.bf16.mxu0 0
    %342 = vmatpush2.bf16.msra.mxu0 0
    %343 = vmatprep.subr.bf16.mxu0 0
    %344 = vmatpush2.bf16.msra.mxu0 0
    %345 = vmatprep.mubr.bf16.mxu0 0
    %346 = vmatmul.mubr.bf16.gmra.mxu0 %v311
    %v347 = vpop.f32.mrf.mxu0
    %v348 = vadd.f32 0.0, %v347
    %v349 = vpop.f32.mrf.mxu0
    %v350 = vpop.f32.mrf.mxu0
    %v351 = vpop.f32.mrf.mxu0
    %352 = vdwg.mxu0
    %354 = vrot.lane.b32.xlu0 %v348, 64
    %v355 = vpop.permute.xlu0 %354
    %v357 = vadd.f32 %v231, %v355
    %v358 = vtanh.pop %v357
    %v359 = vsub.f32 1.0, %v295
    %361 = vrot.lane.b32.xlu0 %v126, 32
    %v362 = vpop.permute.xlu0 %361
    %v364 = vmul.f32 %v359, %v362
    %366 = vrot.lane.b32.xlu0 %v358, 96
    %v367 = vpop.permute.xlu0 %366
    %v369 = vmul.f32 %v295, %v367
    %v370 = vadd.f32 %v364, %v369
    %v371 = vpack.c.bf16 %v370, %v370
    %373 = vrot.lane.b32.xlu0 %v371, 96
    %v374 = vpop.permute.xlu0 %373
    %v379 = vunpack.c.l.b16 %v80
    %v380 = vunpack.c.l.b16 %v81
    %v381 = vunpack.c.l.b16 %v82
    %v382 = vunpack.c.l.b16 %v83
    %v383 = vpack.c.b16 %v380, %v379
    %v384 = vpack.c.b16 %v382, %v381
    %v388 = vsel %vm245, %v374, 0
    %390 = vmatprep.subr.bf16.mxu0 0
    %391 = vmatpush1.bf16.msra.mxu0 0
    %392 = vmatprep.subr.bf16.mxu0 0
    %393 = vmatpush1.bf16.msra.mxu0 0
    %394 = vmatprep.subr.bf16.mxu0 0
    %395 = vmatpush1.bf16.msra.mxu0 0
    %396 = vmatprep.subr.bf16.mxu0 0
    %397 = vmatpush1.bf16.msra.mxu0 0
    %398 = vmatprep.subr.bf16.mxu0 0
    %399 = vmatpush1.bf16.msra.mxu0 0
    %400 = vmatprep.subr.bf16.mxu0 0
    %401 = vmatpush1.bf16.msra.mxu0 0
    %402 = vmatprep.subr.bf16.mxu0 0
    %403 = vmatpush1.bf16.msra.mxu0 %v384
    %404 = vmatprep.subr.bf16.mxu0 0
    %405 = vmatpush1.bf16.msra.mxu0 %v383
    %406 = vmatprep.subr.bf16.mxu0 0
    %407 = vmatpush2.bf16.msra.mxu0 0
    %408 = vmatprep.subr.bf16.mxu0 0
    %409 = vmatpush2.bf16.msra.mxu0 0
    %410 = vmatprep.subr.bf16.mxu0 0
    %411 = vmatpush2.bf16.msra.mxu0 0
    %412 = vmatprep.subr.bf16.mxu0 0
    %413 = vmatpush2.bf16.msra.mxu0 0
    %414 = vmatprep.subr.bf16.mxu0 0
    %415 = vmatpush2.bf16.msra.mxu0 0
    %416 = vmatprep.subr.bf16.mxu0 0
    %417 = vmatpush2.bf16.msra.mxu0 0
    %418 = vmatprep.subr.bf16.mxu0 0
    %419 = vmatpush2.bf16.msra.mxu0 0
    %420 = vmatprep.subr.bf16.mxu0 0
    %421 = vmatpush2.bf16.msra.mxu0 0
    %422 = vmatprep.mubr.bf16.mxu0 0
    %423 = vmatmul.mubr.bf16.gmra.mxu0 %v388
    %v424 = vpop.f32.mrf.mxu0
    %v425 = vadd.f32 %v97, %v424
    %v426 = vpop.f32.mrf.mxu0
    %v427 = vpop.f32.mrf.mxu0
    %v428 = vpop.f32.mrf.mxu0
    %429 = vdwg.mxu0
    %s430 = smul.f32 %s84, 0.0
    %v431 = vstv %s430
    %v432 = vadd.f32 %v425, %v431
    %vm433 = vcmp.ge.f32.partialorder %v432, 0.0
    %vm434 = vcmp.eq.f32.partialorder -1.0, -1.0
    %vm435 = vmand %vm433, %vm434
    %v436 = vsel %vm435, 1, 0
    %437 = vset.pattern.permute.xlu0 4
    %438 = vperm.xlu0 %437, %v436
    %v439 = vpop.permute.xlu0 %438
    %vm440 = vcmp.eq.s32.totalorder %v439, 1
    %v441 = vsel %vm440, %v425, -1.0
    %v442 = vsel %vm435, 1.0, -1.0
    %s443 = scalar_lea.vmem [#allocation3], 8
    %v444 = vld [vmem:[%s443] sm:$0xff]
    %vm445 = vcmp.ne.f32.partialorder %v444, 0.0
    %v446 = vsel %vm445, 1, 0
    %v447 = vcvt.s32.f32 %v446
    %v448 = vmul.f32 %v447, %v444
    %v449 = vadd.f32 %v119, %v448
    %v450 = vadd.f32 %v120, %v447
    %vm451 = vcmp.gt.f32.partialorder %v450, 0.0
    %v452 = vsel %vm451, %v450, 1.0
    %v453 = vrcp.pop %v452
    %v454 = vmul.f32 %v449, %v453
    %v455 = vsel %vm451, %v454, 0.0
    %457 = vrot.lane.b32.xlu0 %v370, 96
    %v458 = vpop.permute.xlu0 %457
    %v460 = vmul.f32 %v111, %v458
    %v461 = vsub.f32 1.0, %v447
    %v462 = vmul.f32 %v461, %v129
    %v463 = vadd.f32 %v448, %v462
    %v464 = vmul.f32 %v104, %v463
    %v465 = vmul.f32 %v113, %v455
    %v466 = vadd.f32 %v464, %v465
    %v467 = vmul.f32 %v461, %v466
    %v468 = vadd.f32 %v448, %v467
    %v469 = vpack.c.bf16 %v468, %v468
    %v470 = vpack.c.bf16 %v447, %v447
    %v472 = vsel %vm137, %v470, 0
    %474 = vmatprep.subr.bf16.mxu0 0
    %475 = vmatpush1.bf16.msra.mxu0 0
    %476 = vmatprep.subr.bf16.mxu0 0
    %477 = vmatpush1.bf16.msra.mxu0 0
    %478 = vmatprep.subr.bf16.mxu0 0
    %479 = vmatpush1.bf16.msra.mxu0 0
    %480 = vmatprep.subr.bf16.mxu0 0
    %481 = vmatpush1.bf16.msra.mxu0 0
    %482 = vmatprep.subr.bf16.mxu0 0
    %483 = vmatpush1.bf16.msra.mxu0 0
    %484 = vmatprep.subr.bf16.mxu0 0
    %485 = vmatpush1.bf16.msra.mxu0 0
    %486 = vmatprep.subr.bf16.mxu0 0
    %487 = vmatpush1.bf16.msra.mxu0 0
    %488 = vmatprep.subr.bf16.mxu0 0
    %489 = vmatpush1.bf16.msra.mxu0 %v143
    %490 = vmatprep.subr.bf16.mxu0 0
    %491 = vmatpush2.bf16.msra.mxu0 0
    %492 = vmatprep.subr.bf16.mxu0 0
    %493 = vmatpush2.bf16.msra.mxu0 0
    %494 = vmatprep.subr.bf16.mxu0 0
    %495 = vmatpush2.bf16.msra.mxu0 0
    %496 = vmatprep.subr.bf16.mxu0 0
    %497 = vmatpush2.bf16.msra.mxu0 0
    %498 = vmatprep.subr.bf16.mxu0 0
    %499 = vmatpush2.bf16.msra.mxu0 0
    %500 = vmatprep.subr.bf16.mxu0 0
    %501 = vmatpush2.bf16.msra.mxu0 0
    %502 = vmatprep.subr.bf16.mxu0 0
    %503 = vmatpush2.bf16.msra.mxu0 0
    %504 = vmatprep.subr.bf16.mxu0 0
    %505 = vmatpush2.bf16.msra.mxu0 0
    %506 = vmatprep.mubr.bf16.mxu0 0
    %507 = vmatmul.mubr.bf16.gmra.mxu0 %v472
    %v508 = vpop.f32.mrf.mxu0
    %v509 = vadd.f32 0.0, %v508
    %v510 = vpop.f32.mrf.mxu0
    %v511 = vpop.f32.mrf.mxu0
    %v512 = vpop.f32.mrf.mxu0
    %513 = vdwg.mxu0
    %v515 = vsel %vm137, %v469, 0
    %517 = vmatprep.subr.bf16.mxu0 0
    %518 = vmatpush1.bf16.msra.mxu0 0
    %519 = vmatprep.subr.bf16.mxu0 0
    %520 = vmatpush1.bf16.msra.mxu0 0
    %521 = vmatprep.subr.bf16.mxu0 0
    %522 = vmatpush1.bf16.msra.mxu0 0
    %523 = vmatprep.subr.bf16.mxu0 0
    %524 = vmatpush1.bf16.msra.mxu0 0
    %525 = vmatprep.subr.bf16.mxu0 0
    %526 = vmatpush1.bf16.msra.mxu0 0
    %527 = vmatprep.subr.bf16.mxu0 0
    %528 = vmatpush1.bf16.msra.mxu0 0
    %529 = vmatprep.subr.bf16.mxu0 0
    %530 = vmatpush1.bf16.msra.mxu0 0
    %531 = vmatprep.subr.bf16.mxu0 0
    %532 = vmatpush1.bf16.msra.mxu0 %v189
    %533 = vmatprep.subr.bf16.mxu0 0
    %534 = vmatpush2.bf16.msra.mxu0 0
    %535 = vmatprep.subr.bf16.mxu0 0
    %536 = vmatpush2.bf16.msra.mxu0 0
    %537 = vmatprep.subr.bf16.mxu0 0
    %538 = vmatpush2.bf16.msra.mxu0 0
    %539 = vmatprep.subr.bf16.mxu0 0
    %540 = vmatpush2.bf16.msra.mxu0 0
    %541 = vmatprep.subr.bf16.mxu0 0
    %542 = vmatpush2.bf16.msra.mxu0 0
    %543 = vmatprep.subr.bf16.mxu0 0
    %544 = vmatpush2.bf16.msra.mxu0 0
    %545 = vmatprep.subr.bf16.mxu0 0
    %546 = vmatpush2.bf16.msra.mxu0 0
    %547 = vmatprep.subr.bf16.mxu0 0
    %548 = vmatpush2.bf16.msra.mxu0 0
    %549 = vmatprep.mubr.bf16.mxu0 0
    %550 = vmatmul.mubr.bf16.gmra.mxu0 %v515
    %v551 = vpop.f32.mrf.mxu0
    %v552 = vadd.f32 %v509, %v551
    %v553 = vpop.f32.mrf.mxu0
    %v554 = vpop.f32.mrf.mxu0
    %v555 = vpop.f32.mrf.mxu0
    %556 = vdwg.mxu0
    %v557 = vadd.f32 %v552, %v90
    %v558 = vpack.c.bf16 %v460, %v460
    %v560 = vsel %vm245, %v558, 0
    %562 = vmatprep.subr.bf16.mxu0 0
    %563 = vmatpush1.bf16.msra.mxu0 0
    %564 = vmatprep.subr.bf16.mxu0 0
    %565 = vmatpush1.bf16.msra.mxu0 0
    %566 = vmatprep.subr.bf16.mxu0 0
    %567 = vmatpush1.bf16.msra.mxu0 0
    %568 = vmatprep.subr.bf16.mxu0 0
    %569 = vmatpush1.bf16.msra.mxu0 0
    %570 = vmatprep.subr.bf16.mxu0 0
    %571 = vmatpush1.bf16.msra.mxu0 0
    %572 = vmatprep.subr.bf16.mxu0 0
    %573 = vmatpush1.bf16.msra.mxu0 0
    %574 = vmatprep.subr.bf16.mxu0 0
    %575 = vmatpush1.bf16.msra.mxu0 %v242
    %576 = vmatprep.subr.bf16.mxu0 0
    %577 = vmatpush1.bf16.msra.mxu0 %v241
    %578 = vmatprep.subr.bf16.mxu0 0
    %579 = vmatpush2.bf16.msra.mxu0 0
    %580 = vmatprep.subr.bf16.mxu0 0
    %581 = vmatpush2.bf16.msra.mxu0 0
    %582 = vmatprep.subr.bf16.mxu0 0
    %583 = vmatpush2.bf16.msra.mxu0 0
    %584 = vmatprep.subr.bf16.mxu0 0
    %585 = vmatpush2.bf16.msra.mxu0 0
    %586 = vmatprep.subr.bf16.mxu0 0
    %587 = vmatpush2.bf16.msra.mxu0 0
    %588 = vmatprep.subr.bf16.mxu0 0
    %589 = vmatpush2.bf16.msra.mxu0 0
    %590 = vmatprep.subr.bf16.mxu0 0
    %591 = vmatpush2.bf16.msra.mxu0 0
    %592 = vmatprep.subr.bf16.mxu0 0
    %593 = vmatpush2.bf16.msra.mxu0 0
    %594 = vmatprep.mubr.bf16.mxu0 0
    %595 = vmatmul.mubr.bf16.gmra.mxu0 %v560
    %v596 = vpop.f32.mrf.mxu0
    %v597 = vadd.f32 0.0, %v596
    %v598 = vpop.f32.mrf.mxu0
    %v599 = vpop.f32.mrf.mxu0
    %v600 = vpop.f32.mrf.mxu0
    %601 = vdwg.mxu0
    %v602 = vadd.f32 %v557, %v597
    %v603 = vxor.u32 %v602, 2147483648
    %v604 = vmul.f32 %v603, 1.442695
    %v605 = vpow.pop %v604
    %v606 = vadd.f32 %v605, 1.0
    %v607 = vrcp.pop %v606
    %v608 = vmul.f32 1.0, %v607
    %v609 = vmul.f32 %v608, %v460
    %v610 = vpack.c.bf16 %v609, %v609
    %v612 = vsel %vm245, %v610, 0
    %614 = vmatprep.subr.bf16.mxu0 0
    %615 = vmatpush1.bf16.msra.mxu0 0
    %616 = vmatprep.subr.bf16.mxu0 0
    %617 = vmatpush1.bf16.msra.mxu0 0
    %618 = vmatprep.subr.bf16.mxu0 0
    %619 = vmatpush1.bf16.msra.mxu0 0
    %620 = vmatprep.subr.bf16.mxu0 0
    %621 = vmatpush1.bf16.msra.mxu0 0
    %622 = vmatprep.subr.bf16.mxu0 0
    %623 = vmatpush1.bf16.msra.mxu0 0
    %624 = vmatprep.subr.bf16.mxu0 0
    %625 = vmatpush1.bf16.msra.mxu0 0
    %626 = vmatprep.subr.bf16.mxu0 0
    %627 = vmatpush1.bf16.msra.mxu0 %v307
    %628 = vmatprep.subr.bf16.mxu0 0
    %629 = vmatpush1.bf16.msra.mxu0 %v306
    %630 = vmatprep.subr.bf16.mxu0 0
    %631 = vmatpush2.bf16.msra.mxu0 0
    %632 = vmatprep.subr.bf16.mxu0 0
    %633 = vmatpush2.bf16.msra.mxu0 0
    %634 = vmatprep.subr.bf16.mxu0 0
    %635 = vmatpush2.bf16.msra.mxu0 0
    %636 = vmatprep.subr.bf16.mxu0 0
    %637 = vmatpush2.bf16.msra.mxu0 0
    %638 = vmatprep.subr.bf16.mxu0 0
    %639 = vmatpush2.bf16.msra.mxu0 0
    %640 = vmatprep.subr.bf16.mxu0 0
    %641 = vmatpush2.bf16.msra.mxu0 0
    %642 = vmatprep.subr.bf16.mxu0 0
    %643 = vmatpush2.bf16.msra.mxu0 0
    %644 = vmatprep.subr.bf16.mxu0 0
    %645 = vmatpush2.bf16.msra.mxu0 0
    %646 = vmatprep.mubr.bf16.mxu0 0
    %647 = vmatmul.mubr.bf16.gmra.mxu0 %v612
    %v648 = vpop.f32.mrf.mxu0
    %v649 = vadd.f32 0.0, %v648
    %v650 = vpop.f32.mrf.mxu0
    %v651 = vpop.f32.mrf.mxu0
    %v652 = vpop.f32.mrf.mxu0
    %653 = vdwg.mxu0
    %655 = vrot.lane.b32.xlu0 %v649, 64
    %v656 = vpop.permute.xlu0 %655
    %v658 = vadd.f32 %v557, %v656
    %v659 = vtanh.pop %v658
    %v660 = vsub.f32 1.0, %v608
    %662 = vrot.lane.b32.xlu0 %v460, 32
    %v663 = vpop.permute.xlu0 %662
    %v665 = vmul.f32 %v660, %v663
    %667 = vrot.lane.b32.xlu0 %v659, 96
    %v668 = vpop.permute.xlu0 %667
    %v670 = vmul.f32 %v608, %v668
    %v671 = vadd.f32 %v665, %v670
    %v672 = vpack.c.bf16 %v671, %v671
    %674 = vrot.lane.b32.xlu0 %v672, 96
    %v675 = vpop.permute.xlu0 %674
    %v677 = vsel %vm245, %v675, 0
    %679 = vmatprep.subr.bf16.mxu0 0
    %680 = vmatpush1.bf16.msra.mxu0 0
    %681 = vmatprep.subr.bf16.mxu0 0
    %682 = vmatpush1.bf16.msra.mxu0 0
    %683 = vmatprep.subr.bf16.mxu0 0
    %684 = vmatpush1.bf16.msra.mxu0 0
    %685 = vmatprep.subr.bf16.mxu0 0
    %686 = vmatpush1.bf16.msra.mxu0 0
    %687 = vmatprep.subr.bf16.mxu0 0
    %688 = vmatpush1.bf16.msra.mxu0 0
    %689 = vmatprep.subr.bf16.mxu0 0
    %690 = vmatpush1.bf16.msra.mxu0 0
    %691 = vmatprep.subr.bf16.mxu0 0
    %692 = vmatpush1.bf16.msra.mxu0 %v384
    %693 = vmatprep.subr.bf16.mxu0 0
    %694 = vmatpush1.bf16.msra.mxu0 %v383
    %695 = vmatprep.subr.bf16.mxu0 0
    %696 = vmatpush2.bf16.msra.mxu0 0
    %697 = vmatprep.subr.bf16.mxu0 0
    %698 = vmatpush2.bf16.msra.mxu0 0
    %699 = vmatprep.subr.bf16.mxu0 0
    %700 = vmatpush2.bf16.msra.mxu0 0
    %701 = vmatprep.subr.bf16.mxu0 0
    %702 = vmatpush2.bf16.msra.mxu0 0
    %703 = vmatprep.subr.bf16.mxu0 0
    %704 = vmatpush2.bf16.msra.mxu0 0
    %705 = vmatprep.subr.bf16.mxu0 0
    %706 = vmatpush2.bf16.msra.mxu0 0
    %707 = vmatprep.subr.bf16.mxu0 0
    %708 = vmatpush2.bf16.msra.mxu0 0
    %709 = vmatprep.subr.bf16.mxu0 0
    %710 = vmatpush2.bf16.msra.mxu0 0
    %711 = vmatprep.mubr.bf16.mxu0 0
    %712 = vmatmul.mubr.bf16.gmra.mxu0 %v677
    %v713 = vpop.f32.mrf.mxu0
    %v714 = vadd.f32 %v97, %v713
    %v715 = vpop.f32.mrf.mxu0
    %v716 = vpop.f32.mrf.mxu0
    %v717 = vpop.f32.mrf.mxu0
    %718 = vdwg.mxu0
    %s719 = smul.f32 %s84, 0.125
    %v720 = vstv %s719
    %v721 = vadd.f32 %v714, %v720
    %vm722 = vcmp.ge.f32.partialorder %v721, 0.0
    %vm723 = vcmp.eq.f32.partialorder %v442, -1.0
    %vm724 = vmand %vm722, %vm723
    %v725 = vsel %vm724, 1, 0
    %726 = vset.pattern.permute.xlu0 4
    %727 = vperm.xlu0 %726, %v725
    %v728 = vpop.permute.xlu0 %727
    %vm729 = vcmp.eq.s32.totalorder %v728, 1
    %v730 = vsel %vm729, %v714, %v441
    %v731 = vsel %vm724, 2.0, %v442
    %s732 = scalar_lea.vmem [#allocation3], 16
    %v733 = vld [vmem:[%s732] sm:$0xff]
    %vm734 = vcmp.ne.f32.partialorder %v733, 0.0
    %v735 = vsel %vm734, 1, 0
    %v736 = vcvt.s32.f32 %v735
    %v737 = vmul.f32 %v736, %v733
    %v738 = vadd.f32 %v449, %v737
    %v739 = vadd.f32 %v450, %v736
    %vm740 = vcmp.gt.f32.partialorder %v739, 0.0
    %v741 = vsel %vm740, %v739, 1.0
    %v742 = vrcp.pop %v741
    %v743 = vmul.f32 %v738, %v742
    %v744 = vsel %vm740, %v743, 0.0
    %746 = vrot.lane.b32.xlu0 %v671, 96
    %v747 = vpop.permute.xlu0 %746
    %v749 = vmul.f32 %v111, %v747
    %v750 = vsub.f32 1.0, %v736
    %v751 = vmul.f32 %v750, %v463
    %v752 = vadd.f32 %v737, %v751
    %v753 = vmul.f32 %v104, %v752
    %v754 = vmul.f32 %v113, %v744
    %v755 = vadd.f32 %v753, %v754
    %v756 = vmul.f32 %v750, %v755
    %v757 = vadd.f32 %v737, %v756
    %v758 = vpack.c.bf16 %v757, %v757
    %v759 = vpack.c.bf16 %v736, %v736
    %v761 = vsel %vm137, %v759, 0
    %763 = vmatprep.subr.bf16.mxu0 0
    %764 = vmatpush1.bf16.msra.mxu0 0
    %765 = vmatprep.subr.bf16.mxu0 0
    %766 = vmatpush1.bf16.msra.mxu0 0
    %767 = vmatprep.subr.bf16.mxu0 0
    %768 = vmatpush1.bf16.msra.mxu0 0
    %769 = vmatprep.subr.bf16.mxu0 0
    %770 = vmatpush1.bf16.msra.mxu0 0
    %771 = vmatprep.subr.bf16.mxu0 0
    %772 = vmatpush1.bf16.msra.mxu0 0
    %773 = vmatprep.subr.bf16.mxu0 0
    %774 = vmatpush1.bf16.msra.mxu0 0
    %775 = vmatprep.subr.bf16.mxu0 0
    %776 = vmatpush1.bf16.msra.mxu0 0
    %777 = vmatprep.subr.bf16.mxu0 0
    %778 = vmatpush1.bf16.msra.mxu0 %v143
    %779 = vmatprep.subr.bf16.mxu0 0
    %780 = vmatpush2.bf16.msra.mxu0 0
    %781 = vmatprep.subr.bf16.mxu0 0
    %782 = vmatpush2.bf16.msra.mxu0 0
    %783 = vmatprep.subr.bf16.mxu0 0
    %784 = vmatpush2.bf16.msra.mxu0 0
    %785 = vmatprep.subr.bf16.mxu0 0
    %786 = vmatpush2.bf16.msra.mxu0 0
    %787 = vmatprep.subr.bf16.mxu0 0
    %788 = vmatpush2.bf16.msra.mxu0 0
    %789 = vmatprep.subr.bf16.mxu0 0
    %790 = vmatpush2.bf16.msra.mxu0 0
    %791 = vmatprep.subr.bf16.mxu0 0
    %792 = vmatpush2.bf16.msra.mxu0 0
    %793 = vmatprep.subr.bf16.mxu0 0
    %794 = vmatpush2.bf16.msra.mxu0 0
    %795 = vmatprep.mubr.bf16.mxu0 0
    %796 = vmatmul.mubr.bf16.gmra.mxu0 %v761
    %v797 = vpop.f32.mrf.mxu0
    %v798 = vadd.f32 0.0, %v797
    %v799 = vpop.f32.mrf.mxu0
    %v800 = vpop.f32.mrf.mxu0
    %v801 = vpop.f32.mrf.mxu0
    %802 = vdwg.mxu0
    %v804 = vsel %vm137, %v758, 0
    %806 = vmatprep.subr.bf16.mxu0 0
    %807 = vmatpush1.bf16.msra.mxu0 0
    %808 = vmatprep.subr.bf16.mxu0 0
    %809 = vmatpush1.bf16.msra.mxu0 0
    %810 = vmatprep.subr.bf16.mxu0 0
    %811 = vmatpush1.bf16.msra.mxu0 0
    %812 = vmatprep.subr.bf16.mxu0 0
    %813 = vmatpush1.bf16.msra.mxu0 0
    %814 = vmatprep.subr.bf16.mxu0 0
    %815 = vmatpush1.bf16.msra.mxu0 0
    %816 = vmatprep.subr.bf16.mxu0 0
    %817 = vmatpush1.bf16.msra.mxu0 0
    %818 = vmatprep.subr.bf16.mxu0 0
    %819 = vmatpush1.bf16.msra.mxu0 0
    %820 = vmatprep.subr.bf16.mxu0 0
    %821 = vmatpush1.bf16.msra.mxu0 %v189
    %822 = vmatprep.subr.bf16.mxu0 0
    %823 = vmatpush2.bf16.msra.mxu0 0
    %824 = vmatprep.subr.bf16.mxu0 0
    %825 = vmatpush2.bf16.msra.mxu0 0
    %826 = vmatprep.subr.bf16.mxu0 0
    %827 = vmatpush2.bf16.msra.mxu0 0
    %828 = vmatprep.subr.bf16.mxu0 0
    %829 = vmatpush2.bf16.msra.mxu0 0
    %830 = vmatprep.subr.bf16.mxu0 0
    %831 = vmatpush2.bf16.msra.mxu0 0
    %832 = vmatprep.subr.bf16.mxu0 0
    %833 = vmatpush2.bf16.msra.mxu0 0
    %834 = vmatprep.subr.bf16.mxu0 0
    %835 = vmatpush2.bf16.msra.mxu0 0
    %836 = vmatprep.subr.bf16.mxu0 0
    %837 = vmatpush2.bf16.msra.mxu0 0
    %838 = vmatprep.mubr.bf16.mxu0 0
    %839 = vmatmul.mubr.bf16.gmra.mxu0 %v804
    %v840 = vpop.f32.mrf.mxu0
    %v841 = vadd.f32 %v798, %v840
    %v842 = vpop.f32.mrf.mxu0
    %v843 = vpop.f32.mrf.mxu0
    %v844 = vpop.f32.mrf.mxu0
    %845 = vdwg.mxu0
    %v846 = vadd.f32 %v841, %v90
    %v847 = vpack.c.bf16 %v749, %v749
    %v849 = vsel %vm245, %v847, 0
    %851 = vmatprep.subr.bf16.mxu0 0
    %852 = vmatpush1.bf16.msra.mxu0 0
    %853 = vmatprep.subr.bf16.mxu0 0
    %854 = vmatpush1.bf16.msra.mxu0 0
    %855 = vmatprep.subr.bf16.mxu0 0
    %856 = vmatpush1.bf16.msra.mxu0 0
    %857 = vmatprep.subr.bf16.mxu0 0
    %858 = vmatpush1.bf16.msra.mxu0 0
    %859 = vmatprep.subr.bf16.mxu0 0
    %860 = vmatpush1.bf16.msra.mxu0 0
    %861 = vmatprep.subr.bf16.mxu0 0
    %862 = vmatpush1.bf16.msra.mxu0 0
    %863 = vmatprep.subr.bf16.mxu0 0
    %864 = vmatpush1.bf16.msra.mxu0 %v242
    %865 = vmatprep.subr.bf16.mxu0 0
    %866 = vmatpush1.bf16.msra.mxu0 %v241
    %867 = vmatprep.subr.bf16.mxu0 0
    %868 = vmatpush2.bf16.msra.mxu0 0
    %869 = vmatprep.subr.bf16.mxu0 0
    %870 = vmatpush2.bf16.msra.mxu0 0
    %871 = vmatprep.subr.bf16.mxu0 0
    %872 = vmatpush2.bf16.msra.mxu0 0
    %873 = vmatprep.subr.bf16.mxu0 0
    %874 = vmatpush2.bf16.msra.mxu0 0
    %875 = vmatprep.subr.bf16.mxu0 0
    %876 = vmatpush2.bf16.msra.mxu0 0
    %877 = vmatprep.subr.bf16.mxu0 0
    %878 = vmatpush2.bf16.msra.mxu0 0
    %879 = vmatprep.subr.bf16.mxu0 0
    %880 = vmatpush2.bf16.msra.mxu0 0
    %881 = vmatprep.subr.bf16.mxu0 0
    %882 = vmatpush2.bf16.msra.mxu0 0
    %883 = vmatprep.mubr.bf16.mxu0 0
    %884 = vmatmul.mubr.bf16.gmra.mxu0 %v849
    %v885 = vpop.f32.mrf.mxu0
    %v886 = vadd.f32 0.0, %v885
    %v887 = vpop.f32.mrf.mxu0
    %v888 = vpop.f32.mrf.mxu0
    %v889 = vpop.f32.mrf.mxu0
    %890 = vdwg.mxu0
    %v891 = vadd.f32 %v846, %v886
    %v892 = vxor.u32 %v891, 2147483648
    %v893 = vmul.f32 %v892, 1.442695
    %v894 = vpow.pop %v893
    %v895 = vadd.f32 %v894, 1.0
    %v896 = vrcp.pop %v895
    %v897 = vmul.f32 1.0, %v896
    %v898 = vmul.f32 %v897, %v749
    %v899 = vpack.c.bf16 %v898, %v898
    %v901 = vsel %vm245, %v899, 0
    %903 = vmatprep.subr.bf16.mxu0 0
    %904 = vmatpush1.bf16.msra.mxu0 0
    %905 = vmatprep.subr.bf16.mxu0 0
    %906 = vmatpush1.bf16.msra.mxu0 0
    %907 = vmatprep.subr.bf16.mxu0 0
    %908 = vmatpush1.bf16.msra.mxu0 0
    %909 = vmatprep.subr.bf16.mxu0 0
    %910 = vmatpush1.bf16.msra.mxu0 0
    %911 = vmatprep.subr.bf16.mxu0 0
    %912 = vmatpush1.bf16.msra.mxu0 0
    %913 = vmatprep.subr.bf16.mxu0 0
    %914 = vmatpush1.bf16.msra.mxu0 0
    %915 = vmatprep.subr.bf16.mxu0 0
    %916 = vmatpush1.bf16.msra.mxu0 %v307
    %917 = vmatprep.subr.bf16.mxu0 0
    %918 = vmatpush1.bf16.msra.mxu0 %v306
    %919 = vmatprep.subr.bf16.mxu0 0
    %920 = vmatpush2.bf16.msra.mxu0 0
    %921 = vmatprep.subr.bf16.mxu0 0
    %922 = vmatpush2.bf16.msra.mxu0 0
    %923 = vmatprep.subr.bf16.mxu0 0
    %924 = vmatpush2.bf16.msra.mxu0 0
    %925 = vmatprep.subr.bf16.mxu0 0
    %926 = vmatpush2.bf16.msra.mxu0 0
    %927 = vmatprep.subr.bf16.mxu0 0
    %928 = vmatpush2.bf16.msra.mxu0 0
    %929 = vmatprep.subr.bf16.mxu0 0
    %930 = vmatpush2.bf16.msra.mxu0 0
    %931 = vmatprep.subr.bf16.mxu0 0
    %932 = vmatpush2.bf16.msra.mxu0 0
    %933 = vmatprep.subr.bf16.mxu0 0
    %934 = vmatpush2.bf16.msra.mxu0 0
    %935 = vmatprep.mubr.bf16.mxu0 0
    %936 = vmatmul.mubr.bf16.gmra.mxu0 %v901
    %v937 = vpop.f32.mrf.mxu0
    %v938 = vadd.f32 0.0, %v937
    %v939 = vpop.f32.mrf.mxu0
    %v940 = vpop.f32.mrf.mxu0
    %v941 = vpop.f32.mrf.mxu0
    %942 = vdwg.mxu0
    %944 = vrot.lane.b32.xlu0 %v938, 64
    %v945 = vpop.permute.xlu0 %944
    %v947 = vadd.f32 %v846, %v945
    %v948 = vtanh.pop %v947
    %v949 = vsub.f32 1.0, %v897
    %951 = vrot.lane.b32.xlu0 %v749, 32
    %v952 = vpop.permute.xlu0 %951
    %v954 = vmul.f32 %v949, %v952
    %956 = vrot.lane.b32.xlu0 %v948, 96
    %v957 = vpop.permute.xlu0 %956
    %v959 = vmul.f32 %v897, %v957
    %v960 = vadd.f32 %v954, %v959
    %v961 = vpack.c.bf16 %v960, %v960
    %963 = vrot.lane.b32.xlu0 %v961, 96
    %v964 = vpop.permute.xlu0 %963
    %v966 = vsel %vm245, %v964, 0
    %968 = vmatprep.subr.bf16.mxu0 0
    %969 = vmatpush1.bf16.msra.mxu0 0
    %970 = vmatprep.subr.bf16.mxu0 0
    %971 = vmatpush1.bf16.msra.mxu0 0
    %972 = vmatprep.subr.bf16.mxu0 0
    %973 = vmatpush1.bf16.msra.mxu0 0
    %974 = vmatprep.subr.bf16.mxu0 0
    %975 = vmatpush1.bf16.msra.mxu0 0
    %976 = vmatprep.subr.bf16.mxu0 0
    %977 = vmatpush1.bf16.msra.mxu0 0
    %978 = vmatprep.subr.bf16.mxu0 0
    %979 = vmatpush1.bf16.msra.mxu0 0
    %980 = vmatprep.subr.bf16.mxu0 0
    %981 = vmatpush1.bf16.msra.mxu0 %v384
    %982 = vmatprep.subr.bf16.mxu0 0
    %983 = vmatpush1.bf16.msra.mxu0 %v383
    %984 = vmatprep.subr.bf16.mxu0 0
    %985 = vmatpush2.bf16.msra.mxu0 0
    %986 = vmatprep.subr.bf16.mxu0 0
    %987 = vmatpush2.bf16.msra.mxu0 0
    %988 = vmatprep.subr.bf16.mxu0 0
    %989 = vmatpush2.bf16.msra.mxu0 0
    %990 = vmatprep.subr.bf16.mxu0 0
    %991 = vmatpush2.bf16.msra.mxu0 0
    %992 = vmatprep.subr.bf16.mxu0 0
    %993 = vmatpush2.bf16.msra.mxu0 0
    %994 = vmatprep.subr.bf16.mxu0 0
    %995 = vmatpush2.bf16.msra.mxu0 0
    %996 = vmatprep.subr.bf16.mxu0 0
    %997 = vmatpush2.bf16.msra.mxu0 0
    %998 = vmatprep.subr.bf16.mxu0 0
    %999 = vmatpush2.bf16.msra.mxu0 0
    %1000 = vmatprep.mubr.bf16.mxu0 0
    %1001 = vmatmul.mubr.bf16.gmra.mxu0 %v966
    %v1002 = vpop.f32.mrf.mxu0
    %v1003 = vadd.f32 %v97, %v1002
    %v1004 = vpop.f32.mrf.mxu0
    %v1005 = vpop.f32.mrf.mxu0
    %v1006 = vpop.f32.mrf.mxu0
    %1007 = vdwg.mxu0
    %s1008 = smul.f32 %s84, 0.25
    %v1009 = vstv %s1008
    %v1010 = vadd.f32 %v1003, %v1009
    %vm1011 = vcmp.ge.f32.partialorder %v1010, 0.0
    %vm1012 = vcmp.eq.f32.partialorder %v731, -1.0
    %vm1013 = vmand %vm1011, %vm1012
    %v1014 = vsel %vm1013, 1, 0
    %1015 = vset.pattern.permute.xlu0 4
    %1016 = vperm.xlu0 %1015, %v1014
    %v1017 = vpop.permute.xlu0 %1016
    %vm1018 = vcmp.eq.s32.totalorder %v1017, 1
    %v1019 = vsel %vm1018, %v1003, %v730
    %v1020 = vsel %vm1013, 3.0, %v731
    %s1021 = scalar_lea.vmem [#allocation3], 24
    %v1022 = vld [vmem:[%s1021] sm:$0xff]
    %vm1023 = vcmp.ne.f32.partialorder %v1022, 0.0
    %v1024 = vsel %vm1023, 1, 0
    %v1025 = vcvt.s32.f32 %v1024
    %v1026 = vmul.f32 %v1025, %v1022
    %v1027 = vadd.f32 %v738, %v1026
    %v1028 = vadd.f32 %v739, %v1025
    %vm1029 = vcmp.gt.f32.partialorder %v1028, 0.0
    %v1030 = vsel %vm1029, %v1028, 1.0
    %v1031 = vrcp.pop %v1030
    %v1032 = vmul.f32 %v1027, %v1031
    %v1033 = vsel %vm1029, %v1032, 0.0
    %1035 = vrot.lane.b32.xlu0 %v960, 96
    %v1036 = vpop.permute.xlu0 %1035
    %v1038 = vmul.f32 %v111, %v1036
    %v1039 = vsub.f32 1.0, %v1025
    %v1040 = vmul.f32 %v1039, %v752
    %v1041 = vadd.f32 %v1026, %v1040
    %v1042 = vmul.f32 %v104, %v1041
    %v1043 = vmul.f32 %v113, %v1033
    %v1044 = vadd.f32 %v1042, %v1043
    %v1045 = vmul.f32 %v1039, %v1044
    %v1046 = vadd.f32 %v1026, %v1045
    %v1047 = vpack.c.bf16 %v1046, %v1046
    %v1048 = vpack.c.bf16 %v1025, %v1025
    %v1050 = vsel %vm137, %v1048, 0
    %1052 = vmatprep.subr.bf16.mxu0 0
    %1053 = vmatpush1.bf16.msra.mxu0 0
    %1054 = vmatprep.subr.bf16.mxu0 0
    %1055 = vmatpush1.bf16.msra.mxu0 0
    %1056 = vmatprep.subr.bf16.mxu0 0
    %1057 = vmatpush1.bf16.msra.mxu0 0
    %1058 = vmatprep.subr.bf16.mxu0 0
    %1059 = vmatpush1.bf16.msra.mxu0 0
    %1060 = vmatprep.subr.bf16.mxu0 0
    %1061 = vmatpush1.bf16.msra.mxu0 0
    %1062 = vmatprep.subr.bf16.mxu0 0
    %1063 = vmatpush1.bf16.msra.mxu0 0
    %1064 = vmatprep.subr.bf16.mxu0 0
    %1065 = vmatpush1.bf16.msra.mxu0 0
    %1066 = vmatprep.subr.bf16.mxu0 0
    %1067 = vmatpush1.bf16.msra.mxu0 %v143
    %1068 = vmatprep.subr.bf16.mxu0 0
    %1069 = vmatpush2.bf16.msra.mxu0 0
    %1070 = vmatprep.subr.bf16.mxu0 0
    %1071 = vmatpush2.bf16.msra.mxu0 0
    %1072 = vmatprep.subr.bf16.mxu0 0
    %1073 = vmatpush2.bf16.msra.mxu0 0
    %1074 = vmatprep.subr.bf16.mxu0 0
    %1075 = vmatpush2.bf16.msra.mxu0 0
    %1076 = vmatprep.subr.bf16.mxu0 0
    %1077 = vmatpush2.bf16.msra.mxu0 0
    %1078 = vmatprep.subr.bf16.mxu0 0
    %1079 = vmatpush2.bf16.msra.mxu0 0
    %1080 = vmatprep.subr.bf16.mxu0 0
    %1081 = vmatpush2.bf16.msra.mxu0 0
    %1082 = vmatprep.subr.bf16.mxu0 0
    %1083 = vmatpush2.bf16.msra.mxu0 0
    %1084 = vmatprep.mubr.bf16.mxu0 0
    %1085 = vmatmul.mubr.bf16.gmra.mxu0 %v1050
    %v1086 = vpop.f32.mrf.mxu0
    %v1087 = vadd.f32 0.0, %v1086
    %v1088 = vpop.f32.mrf.mxu0
    %v1089 = vpop.f32.mrf.mxu0
    %v1090 = vpop.f32.mrf.mxu0
    %1091 = vdwg.mxu0
    %v1093 = vsel %vm137, %v1047, 0
    %1095 = vmatprep.subr.bf16.mxu0 0
    %1096 = vmatpush1.bf16.msra.mxu0 0
    %1097 = vmatprep.subr.bf16.mxu0 0
    %1098 = vmatpush1.bf16.msra.mxu0 0
    %1099 = vmatprep.subr.bf16.mxu0 0
    %1100 = vmatpush1.bf16.msra.mxu0 0
    %1101 = vmatprep.subr.bf16.mxu0 0
    %1102 = vmatpush1.bf16.msra.mxu0 0
    %1103 = vmatprep.subr.bf16.mxu0 0
    %1104 = vmatpush1.bf16.msra.mxu0 0
    %1105 = vmatprep.subr.bf16.mxu0 0
    %1106 = vmatpush1.bf16.msra.mxu0 0
    %1107 = vmatprep.subr.bf16.mxu0 0
    %1108 = vmatpush1.bf16.msra.mxu0 0
    %1109 = vmatprep.subr.bf16.mxu0 0
    %1110 = vmatpush1.bf16.msra.mxu0 %v189
    %1111 = vmatprep.subr.bf16.mxu0 0
    %1112 = vmatpush2.bf16.msra.mxu0 0
    %1113 = vmatprep.subr.bf16.mxu0 0
    %1114 = vmatpush2.bf16.msra.mxu0 0
    %1115 = vmatprep.subr.bf16.mxu0 0
    %1116 = vmatpush2.bf16.msra.mxu0 0
    %1117 = vmatprep.subr.bf16.mxu0 0
    %1118 = vmatpush2.bf16.msra.mxu0 0
    %1119 = vmatprep.subr.bf16.mxu0 0
    %1120 = vmatpush2.bf16.msra.mxu0 0
    %1121 = vmatprep.subr.bf16.mxu0 0
    %1122 = vmatpush2.bf16.msra.mxu0 0
    %1123 = vmatprep.subr.bf16.mxu0 0
    %1124 = vmatpush2.bf16.msra.mxu0 0
    %1125 = vmatprep.subr.bf16.mxu0 0
    %1126 = vmatpush2.bf16.msra.mxu0 0
    %1127 = vmatprep.mubr.bf16.mxu0 0
    %1128 = vmatmul.mubr.bf16.gmra.mxu0 %v1093
    %v1129 = vpop.f32.mrf.mxu0
    %v1130 = vadd.f32 %v1087, %v1129
    %v1131 = vpop.f32.mrf.mxu0
    %v1132 = vpop.f32.mrf.mxu0
    %v1133 = vpop.f32.mrf.mxu0
    %1134 = vdwg.mxu0
    %v1135 = vadd.f32 %v1130, %v90
    %v1136 = vpack.c.bf16 %v1038, %v1038
    %v1138 = vsel %vm245, %v1136, 0
    %1140 = vmatprep.subr.bf16.mxu0 0
    %1141 = vmatpush1.bf16.msra.mxu0 0
    %1142 = vmatprep.subr.bf16.mxu0 0
    %1143 = vmatpush1.bf16.msra.mxu0 0
    %1144 = vmatprep.subr.bf16.mxu0 0
    %1145 = vmatpush1.bf16.msra.mxu0 0
    %1146 = vmatprep.subr.bf16.mxu0 0
    %1147 = vmatpush1.bf16.msra.mxu0 0
    %1148 = vmatprep.subr.bf16.mxu0 0
    %1149 = vmatpush1.bf16.msra.mxu0 0
    %1150 = vmatprep.subr.bf16.mxu0 0
    %1151 = vmatpush1.bf16.msra.mxu0 0
    %1152 = vmatprep.subr.bf16.mxu0 0
    %1153 = vmatpush1.bf16.msra.mxu0 %v242
    %1154 = vmatprep.subr.bf16.mxu0 0
    %1155 = vmatpush1.bf16.msra.mxu0 %v241
    %1156 = vmatprep.subr.bf16.mxu0 0
    %1157 = vmatpush2.bf16.msra.mxu0 0
    %1158 = vmatprep.subr.bf16.mxu0 0
    %1159 = vmatpush2.bf16.msra.mxu0 0
    %1160 = vmatprep.subr.bf16.mxu0 0
    %1161 = vmatpush2.bf16.msra.mxu0 0
    %1162 = vmatprep.subr.bf16.mxu0 0
    %1163 = vmatpush2.bf16.msra.mxu0 0
    %1164 = vmatprep.subr.bf16.mxu0 0
    %1165 = vmatpush2.bf16.msra.mxu0 0
    %1166 = vmatprep.subr.bf16.mxu0 0
    %1167 = vmatpush2.bf16.msra.mxu0 0
    %1168 = vmatprep.subr.bf16.mxu0 0
    %1169 = vmatpush2.bf16.msra.mxu0 0
    %1170 = vmatprep.subr.bf16.mxu0 0
    %1171 = vmatpush2.bf16.msra.mxu0 0
    %1172 = vmatprep.mubr.bf16.mxu0 0
    %1173 = vmatmul.mubr.bf16.gmra.mxu0 %v1138
    %v1174 = vpop.f32.mrf.mxu0
    %v1175 = vadd.f32 0.0, %v1174
    %v1176 = vpop.f32.mrf.mxu0
    %v1177 = vpop.f32.mrf.mxu0
    %v1178 = vpop.f32.mrf.mxu0
    %1179 = vdwg.mxu0
    %v1180 = vadd.f32 %v1135, %v1175
    %v1181 = vxor.u32 %v1180, 2147483648
    %v1182 = vmul.f32 %v1181, 1.442695
    %v1183 = vpow.pop %v1182
    %v1184 = vadd.f32 %v1183, 1.0
    %v1185 = vrcp.pop %v1184
    %v1186 = vmul.f32 1.0, %v1185
    %v1187 = vmul.f32 %v1186, %v1038
    %v1188 = vpack.c.bf16 %v1187, %v1187
    %v1190 = vsel %vm245, %v1188, 0
    %1192 = vmatprep.subr.bf16.mxu0 0
    %1193 = vmatpush1.bf16.msra.mxu0 0
    %1194 = vmatprep.subr.bf16.mxu0 0
    %1195 = vmatpush1.bf16.msra.mxu0 0
    %1196 = vmatprep.subr.bf16.mxu0 0
    %1197 = vmatpush1.bf16.msra.mxu0 0
    %1198 = vmatprep.subr.bf16.mxu0 0
    %1199 = vmatpush1.bf16.msra.mxu0 0
    %1200 = vmatprep.subr.bf16.mxu0 0
    %1201 = vmatpush1.bf16.msra.mxu0 0
    %1202 = vmatprep.subr.bf16.mxu0 0
    %1203 = vmatpush1.bf16.msra.mxu0 0
    %1204 = vmatprep.subr.bf16.mxu0 0
    %1205 = vmatpush1.bf16.msra.mxu0 %v307
    %1206 = vmatprep.subr.bf16.mxu0 0
    %1207 = vmatpush1.bf16.msra.mxu0 %v306
    %1208 = vmatprep.subr.bf16.mxu0 0
    %1209 = vmatpush2.bf16.msra.mxu0 0
    %1210 = vmatprep.subr.bf16.mxu0 0
    %1211 = vmatpush2.bf16.msra.mxu0 0
    %1212 = vmatprep.subr.bf16.mxu0 0
    %1213 = vmatpush2.bf16.msra.mxu0 0
    %1214 = vmatprep.subr.bf16.mxu0 0
    %1215 = vmatpush2.bf16.msra.mxu0 0
    %1216 = vmatprep.subr.bf16.mxu0 0
    %1217 = vmatpush2.bf16.msra.mxu0 0
    %1218 = vmatprep.subr.bf16.mxu0 0
    %1219 = vmatpush2.bf16.msra.mxu0 0
    %1220 = vmatprep.subr.bf16.mxu0 0
    %1221 = vmatpush2.bf16.msra.mxu0 0
    %1222 = vmatprep.subr.bf16.mxu0 0
    %1223 = vmatpush2.bf16.msra.mxu0 0
    %1224 = vmatprep.mubr.bf16.mxu0 0
    %1225 = vmatmul.mubr.bf16.gmra.mxu0 %v1190
    %v1226 = vpop.f32.mrf.mxu0
    %v1227 = vadd.f32 0.0, %v1226
    %v1228 = vpop.f32.mrf.mxu0
    %v1229 = vpop.f32.mrf.mxu0
    %v1230 = vpop.f32.mrf.mxu0
    %1231 = vdwg.mxu0
    %1233 = vrot.lane.b32.xlu0 %v1227, 64
    %v1234 = vpop.permute.xlu0 %1233
    %v1236 = vadd.f32 %v1135, %v1234
    %v1237 = vtanh.pop %v1236
    %v1238 = vsub.f32 1.0, %v1186
    %1240 = vrot.lane.b32.xlu0 %v1038, 32
    %v1241 = vpop.permute.xlu0 %1240
    %v1243 = vmul.f32 %v1238, %v1241
    %1245 = vrot.lane.b32.xlu0 %v1237, 96
    %v1246 = vpop.permute.xlu0 %1245
    %v1248 = vmul.f32 %v1186, %v1246
    %v1249 = vadd.f32 %v1243, %v1248
    %v1250 = vpack.c.bf16 %v1249, %v1249
    %1252 = vrot.lane.b32.xlu0 %v1250, 96
    %v1253 = vpop.permute.xlu0 %1252
    %v1255 = vsel %vm245, %v1253, 0
    %1257 = vmatprep.subr.bf16.mxu0 0
    %1258 = vmatpush1.bf16.msra.mxu0 0
    %1259 = vmatprep.subr.bf16.mxu0 0
    %1260 = vmatpush1.bf16.msra.mxu0 0
    %1261 = vmatprep.subr.bf16.mxu0 0
    %1262 = vmatpush1.bf16.msra.mxu0 0
    %1263 = vmatprep.subr.bf16.mxu0 0
    %1264 = vmatpush1.bf16.msra.mxu0 0
    %1265 = vmatprep.subr.bf16.mxu0 0
    %1266 = vmatpush1.bf16.msra.mxu0 0
    %1267 = vmatprep.subr.bf16.mxu0 0
    %1268 = vmatpush1.bf16.msra.mxu0 0
    %1269 = vmatprep.subr.bf16.mxu0 0
    %1270 = vmatpush1.bf16.msra.mxu0 %v384
    %1271 = vmatprep.subr.bf16.mxu0 0
    %1272 = vmatpush1.bf16.msra.mxu0 %v383
    %1273 = vmatprep.subr.bf16.mxu0 0
    %1274 = vmatpush2.bf16.msra.mxu0 0
    %1275 = vmatprep.subr.bf16.mxu0 0
    %1276 = vmatpush2.bf16.msra.mxu0 0
    %1277 = vmatprep.subr.bf16.mxu0 0
    %1278 = vmatpush2.bf16.msra.mxu0 0
    %1279 = vmatprep.subr.bf16.mxu0 0
    %1280 = vmatpush2.bf16.msra.mxu0 0
    %1281 = vmatprep.subr.bf16.mxu0 0
    %1282 = vmatpush2.bf16.msra.mxu0 0
    %1283 = vmatprep.subr.bf16.mxu0 0
    %1284 = vmatpush2.bf16.msra.mxu0 0
    %1285 = vmatprep.subr.bf16.mxu0 0
    %1286 = vmatpush2.bf16.msra.mxu0 0
    %1287 = vmatprep.subr.bf16.mxu0 0
    %1288 = vmatpush2.bf16.msra.mxu0 0
    %1289 = vmatprep.mubr.bf16.mxu0 0
    %1290 = vmatmul.mubr.bf16.gmra.mxu0 %v1255
    %v1291 = vpop.f32.mrf.mxu0
    %v1292 = vadd.f32 %v97, %v1291
    %v1293 = vpop.f32.mrf.mxu0
    %v1294 = vpop.f32.mrf.mxu0
    %v1295 = vpop.f32.mrf.mxu0
    %1296 = vdwg.mxu0
    %s1297 = smul.f32 %s84, 0.375
    %v1298 = vstv %s1297
    %v1299 = vadd.f32 %v1292, %v1298
    %vm1300 = vcmp.ge.f32.partialorder %v1299, 0.0
    %vm1301 = vcmp.eq.f32.partialorder %v1020, -1.0
    %vm1302 = vmand %vm1300, %vm1301
    %v1303 = vsel %vm1302, 1, 0
    %1304 = vset.pattern.permute.xlu0 4
    %1305 = vperm.xlu0 %1304, %v1303
    %v1306 = vpop.permute.xlu0 %1305
    %vm1307 = vcmp.eq.s32.totalorder %v1306, 1
    %v1308 = vsel %vm1307, %v1292, %v1019
    %v1309 = vsel %vm1302, 4.0, %v1020
    %s1310 = scalar_lea.vmem [#allocation3], 32
    %v1311 = vld [vmem:[%s1310] sm:$0xff]
    %vm1312 = vcmp.ne.f32.partialorder %v1311, 0.0
    %v1313 = vsel %vm1312, 1, 0
    %v1314 = vcvt.s32.f32 %v1313
    %v1315 = vmul.f32 %v1314, %v1311
    %v1316 = vadd.f32 %v1027, %v1315
    %v1317 = vadd.f32 %v1028, %v1314
    %vm1318 = vcmp.gt.f32.partialorder %v1317, 0.0
    %v1319 = vsel %vm1318, %v1317, 1.0
    %v1320 = vrcp.pop %v1319
    %v1321 = vmul.f32 %v1316, %v1320
    %v1322 = vsel %vm1318, %v1321, 0.0
    %1324 = vrot.lane.b32.xlu0 %v1249, 96
    %v1325 = vpop.permute.xlu0 %1324
    %v1327 = vmul.f32 %v111, %v1325
    %v1328 = vsub.f32 1.0, %v1314
    %v1329 = vmul.f32 %v1328, %v1041
    %v1330 = vadd.f32 %v1315, %v1329
    %v1331 = vmul.f32 %v104, %v1330
    %v1332 = vmul.f32 %v113, %v1322
    %v1333 = vadd.f32 %v1331, %v1332
    %v1334 = vmul.f32 %v1328, %v1333
    %v1335 = vadd.f32 %v1315, %v1334
    %v1336 = vpack.c.bf16 %v1335, %v1335
    %v1337 = vpack.c.bf16 %v1314, %v1314
    %v1339 = vsel %vm137, %v1337, 0
    %1341 = vmatprep.subr.bf16.mxu0 0
    %1342 = vmatpush1.bf16.msra.mxu0 0
    %1343 = vmatprep.subr.bf16.mxu0 0
    %1344 = vmatpush1.bf16.msra.mxu0 0
    %1345 = vmatprep.subr.bf16.mxu0 0
    %1346 = vmatpush1.bf16.msra.mxu0 0
    %1347 = vmatprep.subr.bf16.mxu0 0
    %1348 = vmatpush1.bf16.msra.mxu0 0
    %1349 = vmatprep.subr.bf16.mxu0 0
    %1350 = vmatpush1.bf16.msra.mxu0 0
    %1351 = vmatprep.subr.bf16.mxu0 0
    %1352 = vmatpush1.bf16.msra.mxu0 0
    %1353 = vmatprep.subr.bf16.mxu0 0
    %1354 = vmatpush1.bf16.msra.mxu0 0
    %1355 = vmatprep.subr.bf16.mxu0 0
    %1356 = vmatpush1.bf16.msra.mxu0 %v143
    %1357 = vmatprep.subr.bf16.mxu0 0
    %1358 = vmatpush2.bf16.msra.mxu0 0
    %1359 = vmatprep.subr.bf16.mxu0 0
    %1360 = vmatpush2.bf16.msra.mxu0 0
    %1361 = vmatprep.subr.bf16.mxu0 0
    %1362 = vmatpush2.bf16.msra.mxu0 0
    %1363 = vmatprep.subr.bf16.mxu0 0
    %1364 = vmatpush2.bf16.msra.mxu0 0
    %1365 = vmatprep.subr.bf16.mxu0 0
    %1366 = vmatpush2.bf16.msra.mxu0 0
    %1367 = vmatprep.subr.bf16.mxu0 0
    %1368 = vmatpush2.bf16.msra.mxu0 0
    %1369 = vmatprep.subr.bf16.mxu0 0
    %1370 = vmatpush2.bf16.msra.mxu0 0
    %1371 = vmatprep.subr.bf16.mxu0 0
    %1372 = vmatpush2.bf16.msra.mxu0 0
    %1373 = vmatprep.mubr.bf16.mxu0 0
    %1374 = vmatmul.mubr.bf16.gmra.mxu0 %v1339
    %v1375 = vpop.f32.mrf.mxu0
    %v1376 = vadd.f32 0.0, %v1375
    %v1377 = vpop.f32.mrf.mxu0
    %v1378 = vpop.f32.mrf.mxu0
    %v1379 = vpop.f32.mrf.mxu0
    %1380 = vdwg.mxu0
    %v1382 = vsel %vm137, %v1336, 0
    %1384 = vmatprep.subr.bf16.mxu0 0
    %1385 = vmatpush1.bf16.msra.mxu0 0
    %1386 = vmatprep.subr.bf16.mxu0 0
    %1387 = vmatpush1.bf16.msra.mxu0 0
    %1388 = vmatprep.subr.bf16.mxu0 0
    %1389 = vmatpush1.bf16.msra.mxu0 0
    %1390 = vmatprep.subr.bf16.mxu0 0
    %1391 = vmatpush1.bf16.msra.mxu0 0
    %1392 = vmatprep.subr.bf16.mxu0 0
    %1393 = vmatpush1.bf16.msra.mxu0 0
    %1394 = vmatprep.subr.bf16.mxu0 0
    %1395 = vmatpush1.bf16.msra.mxu0 0
    %1396 = vmatprep.subr.bf16.mxu0 0
    %1397 = vmatpush1.bf16.msra.mxu0 0
    %1398 = vmatprep.subr.bf16.mxu0 0
    %1399 = vmatpush1.bf16.msra.mxu0 %v189
    %1400 = vmatprep.subr.bf16.mxu0 0
    %1401 = vmatpush2.bf16.msra.mxu0 0
    %1402 = vmatprep.subr.bf16.mxu0 0
    %1403 = vmatpush2.bf16.msra.mxu0 0
    %1404 = vmatprep.subr.bf16.mxu0 0
    %1405 = vmatpush2.bf16.msra.mxu0 0
    %1406 = vmatprep.subr.bf16.mxu0 0
    %1407 = vmatpush2.bf16.msra.mxu0 0
    %1408 = vmatprep.subr.bf16.mxu0 0
    %1409 = vmatpush2.bf16.msra.mxu0 0
    %1410 = vmatprep.subr.bf16.mxu0 0
    %1411 = vmatpush2.bf16.msra.mxu0 0
    %1412 = vmatprep.subr.bf16.mxu0 0
    %1413 = vmatpush2.bf16.msra.mxu0 0
    %1414 = vmatprep.subr.bf16.mxu0 0
    %1415 = vmatpush2.bf16.msra.mxu0 0
    %1416 = vmatprep.mubr.bf16.mxu0 0
    %1417 = vmatmul.mubr.bf16.gmra.mxu0 %v1382
    %v1418 = vpop.f32.mrf.mxu0
    %v1419 = vadd.f32 %v1376, %v1418
    %v1420 = vpop.f32.mrf.mxu0
    %v1421 = vpop.f32.mrf.mxu0
    %v1422 = vpop.f32.mrf.mxu0
    %1423 = vdwg.mxu0
    %v1424 = vadd.f32 %v1419, %v90
    %v1425 = vpack.c.bf16 %v1327, %v1327
    %v1427 = vsel %vm245, %v1425, 0
    %1429 = vmatprep.subr.bf16.mxu0 0
    %1430 = vmatpush1.bf16.msra.mxu0 0
    %1431 = vmatprep.subr.bf16.mxu0 0
    %1432 = vmatpush1.bf16.msra.mxu0 0
    %1433 = vmatprep.subr.bf16.mxu0 0
    %1434 = vmatpush1.bf16.msra.mxu0 0
    %1435 = vmatprep.subr.bf16.mxu0 0
    %1436 = vmatpush1.bf16.msra.mxu0 0
    %1437 = vmatprep.subr.bf16.mxu0 0
    %1438 = vmatpush1.bf16.msra.mxu0 0
    %1439 = vmatprep.subr.bf16.mxu0 0
    %1440 = vmatpush1.bf16.msra.mxu0 0
    %1441 = vmatprep.subr.bf16.mxu0 0
    %1442 = vmatpush1.bf16.msra.mxu0 %v242
    %1443 = vmatprep.subr.bf16.mxu0 0
    %1444 = vmatpush1.bf16.msra.mxu0 %v241
    %1445 = vmatprep.subr.bf16.mxu0 0
    %1446 = vmatpush2.bf16.msra.mxu0 0
    %1447 = vmatprep.subr.bf16.mxu0 0
    %1448 = vmatpush2.bf16.msra.mxu0 0
    %1449 = vmatprep.subr.bf16.mxu0 0
    %1450 = vmatpush2.bf16.msra.mxu0 0
    %1451 = vmatprep.subr.bf16.mxu0 0
    %1452 = vmatpush2.bf16.msra.mxu0 0
    %1453 = vmatprep.subr.bf16.mxu0 0
    %1454 = vmatpush2.bf16.msra.mxu0 0
    %1455 = vmatprep.subr.bf16.mxu0 0
    %1456 = vmatpush2.bf16.msra.mxu0 0
    %1457 = vmatprep.subr.bf16.mxu0 0
    %1458 = vmatpush2.bf16.msra.mxu0 0
    %1459 = vmatprep.subr.bf16.mxu0 0
    %1460 = vmatpush2.bf16.msra.mxu0 0
    %1461 = vmatprep.mubr.bf16.mxu0 0
    %1462 = vmatmul.mubr.bf16.gmra.mxu0 %v1427
    %v1463 = vpop.f32.mrf.mxu0
    %v1464 = vadd.f32 0.0, %v1463
    %v1465 = vpop.f32.mrf.mxu0
    %v1466 = vpop.f32.mrf.mxu0
    %v1467 = vpop.f32.mrf.mxu0
    %1468 = vdwg.mxu0
    %v1469 = vadd.f32 %v1424, %v1464
    %v1470 = vxor.u32 %v1469, 2147483648
    %v1471 = vmul.f32 %v1470, 1.442695
    %v1472 = vpow.pop %v1471
    %v1473 = vadd.f32 %v1472, 1.0
    %v1474 = vrcp.pop %v1473
    %v1475 = vmul.f32 1.0, %v1474
    %v1476 = vmul.f32 %v1475, %v1327
    %v1477 = vpack.c.bf16 %v1476, %v1476
    %v1479 = vsel %vm245, %v1477, 0
    %1481 = vmatprep.subr.bf16.mxu0 0
    %1482 = vmatpush1.bf16.msra.mxu0 0
    %1483 = vmatprep.subr.bf16.mxu0 0
    %1484 = vmatpush1.bf16.msra.mxu0 0
    %1485 = vmatprep.subr.bf16.mxu0 0
    %1486 = vmatpush1.bf16.msra.mxu0 0
    %1487 = vmatprep.subr.bf16.mxu0 0
    %1488 = vmatpush1.bf16.msra.mxu0 0
    %1489 = vmatprep.subr.bf16.mxu0 0
    %1490 = vmatpush1.bf16.msra.mxu0 0
    %1491 = vmatprep.subr.bf16.mxu0 0
    %1492 = vmatpush1.bf16.msra.mxu0 0
    %1493 = vmatprep.subr.bf16.mxu0 0
    %1494 = vmatpush1.bf16.msra.mxu0 %v307
    %1495 = vmatprep.subr.bf16.mxu0 0
    %1496 = vmatpush1.bf16.msra.mxu0 %v306
    %1497 = vmatprep.subr.bf16.mxu0 0
    %1498 = vmatpush2.bf16.msra.mxu0 0
    %1499 = vmatprep.subr.bf16.mxu0 0
    %1500 = vmatpush2.bf16.msra.mxu0 0
    %1501 = vmatprep.subr.bf16.mxu0 0
    %1502 = vmatpush2.bf16.msra.mxu0 0
    %1503 = vmatprep.subr.bf16.mxu0 0
    %1504 = vmatpush2.bf16.msra.mxu0 0
    %1505 = vmatprep.subr.bf16.mxu0 0
    %1506 = vmatpush2.bf16.msra.mxu0 0
    %1507 = vmatprep.subr.bf16.mxu0 0
    %1508 = vmatpush2.bf16.msra.mxu0 0
    %1509 = vmatprep.subr.bf16.mxu0 0
    %1510 = vmatpush2.bf16.msra.mxu0 0
    %1511 = vmatprep.subr.bf16.mxu0 0
    %1512 = vmatpush2.bf16.msra.mxu0 0
    %1513 = vmatprep.mubr.bf16.mxu0 0
    %1514 = vmatmul.mubr.bf16.gmra.mxu0 %v1479
    %v1515 = vpop.f32.mrf.mxu0
    %v1516 = vadd.f32 0.0, %v1515
    %v1517 = vpop.f32.mrf.mxu0
    %v1518 = vpop.f32.mrf.mxu0
    %v1519 = vpop.f32.mrf.mxu0
    %1520 = vdwg.mxu0
    %1522 = vrot.lane.b32.xlu0 %v1516, 64
    %v1523 = vpop.permute.xlu0 %1522
    %v1525 = vadd.f32 %v1424, %v1523
    %v1526 = vtanh.pop %v1525
    %v1527 = vsub.f32 1.0, %v1475
    %1529 = vrot.lane.b32.xlu0 %v1327, 32
    %v1530 = vpop.permute.xlu0 %1529
    %v1532 = vmul.f32 %v1527, %v1530
    %1534 = vrot.lane.b32.xlu0 %v1526, 96
    %v1535 = vpop.permute.xlu0 %1534
    %v1537 = vmul.f32 %v1475, %v1535
    %v1538 = vadd.f32 %v1532, %v1537
    %v1539 = vpack.c.bf16 %v1538, %v1538
    %1541 = vrot.lane.b32.xlu0 %v1539, 96
    %v1542 = vpop.permute.xlu0 %1541
    %v1544 = vsel %vm245, %v1542, 0
    %1546 = vmatprep.subr.bf16.mxu0 0
    %1547 = vmatpush1.bf16.msra.mxu0 0
    %1548 = vmatprep.subr.bf16.mxu0 0
    %1549 = vmatpush1.bf16.msra.mxu0 0
    %1550 = vmatprep.subr.bf16.mxu0 0
    %1551 = vmatpush1.bf16.msra.mxu0 0
    %1552 = vmatprep.subr.bf16.mxu0 0
    %1553 = vmatpush1.bf16.msra.mxu0 0
    %1554 = vmatprep.subr.bf16.mxu0 0
    %1555 = vmatpush1.bf16.msra.mxu0 0
    %1556 = vmatprep.subr.bf16.mxu0 0
    %1557 = vmatpush1.bf16.msra.mxu0 0
    %1558 = vmatprep.subr.bf16.mxu0 0
    %1559 = vmatpush1.bf16.msra.mxu0 %v384
    %1560 = vmatprep.subr.bf16.mxu0 0
    %1561 = vmatpush1.bf16.msra.mxu0 %v383
    %1562 = vmatprep.subr.bf16.mxu0 0
    %1563 = vmatpush2.bf16.msra.mxu0 0
    %1564 = vmatprep.subr.bf16.mxu0 0
    %1565 = vmatpush2.bf16.msra.mxu0 0
    %1566 = vmatprep.subr.bf16.mxu0 0
    %1567 = vmatpush2.bf16.msra.mxu0 0
    %1568 = vmatprep.subr.bf16.mxu0 0
    %1569 = vmatpush2.bf16.msra.mxu0 0
    %1570 = vmatprep.subr.bf16.mxu0 0
    %1571 = vmatpush2.bf16.msra.mxu0 0
    %1572 = vmatprep.subr.bf16.mxu0 0
    %1573 = vmatpush2.bf16.msra.mxu0 0
    %1574 = vmatprep.subr.bf16.mxu0 0
    %1575 = vmatpush2.bf16.msra.mxu0 0
    %1576 = vmatprep.subr.bf16.mxu0 0
    %1577 = vmatpush2.bf16.msra.mxu0 0
    %1578 = vmatprep.mubr.bf16.mxu0 0
    %1579 = vmatmul.mubr.bf16.gmra.mxu0 %v1544
    %v1580 = vpop.f32.mrf.mxu0
    %v1581 = vadd.f32 %v97, %v1580
    %v1582 = vpop.f32.mrf.mxu0
    %v1583 = vpop.f32.mrf.mxu0
    %v1584 = vpop.f32.mrf.mxu0
    %1585 = vdwg.mxu0
    %s1586 = smul.f32 %s84, 0.5
    %v1587 = vstv %s1586
    %v1588 = vadd.f32 %v1581, %v1587
    %vm1589 = vcmp.ge.f32.partialorder %v1588, 0.0
    %vm1590 = vcmp.eq.f32.partialorder %v1309, -1.0
    %vm1591 = vmand %vm1589, %vm1590
    %v1592 = vsel %vm1591, 1, 0
    %1593 = vset.pattern.permute.xlu0 4
    %1594 = vperm.xlu0 %1593, %v1592
    %v1595 = vpop.permute.xlu0 %1594
    %vm1596 = vcmp.eq.s32.totalorder %v1595, 1
    %v1597 = vsel %vm1596, %v1581, %v1308
    %v1598 = vsel %vm1591, 5.0, %v1309
    %s1599 = scalar_lea.vmem [#allocation3], 40
    %v1600 = vld [vmem:[%s1599] sm:$0xff]
    %vm1601 = vcmp.ne.f32.partialorder %v1600, 0.0
    %v1602 = vsel %vm1601, 1, 0
    %v1603 = vcvt.s32.f32 %v1602
    %v1604 = vmul.f32 %v1603, %v1600
    %v1605 = vadd.f32 %v1316, %v1604
    %v1606 = vadd.f32 %v1317, %v1603
    %vm1607 = vcmp.gt.f32.partialorder %v1606, 0.0
    %v1608 = vsel %vm1607, %v1606, 1.0
    %v1609 = vrcp.pop %v1608
    %v1610 = vmul.f32 %v1605, %v1609
    %v1611 = vsel %vm1607, %v1610, 0.0
    %1613 = vrot.lane.b32.xlu0 %v1538, 96
    %v1614 = vpop.permute.xlu0 %1613
    %v1616 = vmul.f32 %v111, %v1614
    %v1617 = vsub.f32 1.0, %v1603
    %v1618 = vmul.f32 %v1617, %v1330
    %v1619 = vadd.f32 %v1604, %v1618
    %v1620 = vmul.f32 %v104, %v1619
    %v1621 = vmul.f32 %v113, %v1611
    %v1622 = vadd.f32 %v1620, %v1621
    %v1623 = vmul.f32 %v1617, %v1622
    %v1624 = vadd.f32 %v1604, %v1623
    %v1625 = vpack.c.bf16 %v1624, %v1624
    %v1626 = vpack.c.bf16 %v1603, %v1603
    %v1628 = vsel %vm137, %v1626, 0
    %1630 = vmatprep.subr.bf16.mxu0 0
    %1631 = vmatpush1.bf16.msra.mxu0 0
    %1632 = vmatprep.subr.bf16.mxu0 0
    %1633 = vmatpush1.bf16.msra.mxu0 0
    %1634 = vmatprep.subr.bf16.mxu0 0
    %1635 = vmatpush1.bf16.msra.mxu0 0
    %1636 = vmatprep.subr.bf16.mxu0 0
    %1637 = vmatpush1.bf16.msra.mxu0 0
    %1638 = vmatprep.subr.bf16.mxu0 0
    %1639 = vmatpush1.bf16.msra.mxu0 0
    %1640 = vmatprep.subr.bf16.mxu0 0
    %1641 = vmatpush1.bf16.msra.mxu0 0
    %1642 = vmatprep.subr.bf16.mxu0 0
    %1643 = vmatpush1.bf16.msra.mxu0 0
    %1644 = vmatprep.subr.bf16.mxu0 0
    %1645 = vmatpush1.bf16.msra.mxu0 %v143
    %1646 = vmatprep.subr.bf16.mxu0 0
    %1647 = vmatpush2.bf16.msra.mxu0 0
    %1648 = vmatprep.subr.bf16.mxu0 0
    %1649 = vmatpush2.bf16.msra.mxu0 0
    %1650 = vmatprep.subr.bf16.mxu0 0
    %1651 = vmatpush2.bf16.msra.mxu0 0
    %1652 = vmatprep.subr.bf16.mxu0 0
    %1653 = vmatpush2.bf16.msra.mxu0 0
    %1654 = vmatprep.subr.bf16.mxu0 0
    %1655 = vmatpush2.bf16.msra.mxu0 0
    %1656 = vmatprep.subr.bf16.mxu0 0
    %1657 = vmatpush2.bf16.msra.mxu0 0
    %1658 = vmatprep.subr.bf16.mxu0 0
    %1659 = vmatpush2.bf16.msra.mxu0 0
    %1660 = vmatprep.subr.bf16.mxu0 0
    %1661 = vmatpush2.bf16.msra.mxu0 0
    %1662 = vmatprep.mubr.bf16.mxu0 0
    %1663 = vmatmul.mubr.bf16.gmra.mxu0 %v1628
    %v1664 = vpop.f32.mrf.mxu0
    %v1665 = vadd.f32 0.0, %v1664
    %v1666 = vpop.f32.mrf.mxu0
    %v1667 = vpop.f32.mrf.mxu0
    %v1668 = vpop.f32.mrf.mxu0
    %1669 = vdwg.mxu0
    %v1671 = vsel %vm137, %v1625, 0
    %1673 = vmatprep.subr.bf16.mxu0 0
    %1674 = vmatpush1.bf16.msra.mxu0 0
    %1675 = vmatprep.subr.bf16.mxu0 0
    %1676 = vmatpush1.bf16.msra.mxu0 0
    %1677 = vmatprep.subr.bf16.mxu0 0
    %1678 = vmatpush1.bf16.msra.mxu0 0
    %1679 = vmatprep.subr.bf16.mxu0 0
    %1680 = vmatpush1.bf16.msra.mxu0 0
    %1681 = vmatprep.subr.bf16.mxu0 0
    %1682 = vmatpush1.bf16.msra.mxu0 0
    %1683 = vmatprep.subr.bf16.mxu0 0
    %1684 = vmatpush1.bf16.msra.mxu0 0
    %1685 = vmatprep.subr.bf16.mxu0 0
    %1686 = vmatpush1.bf16.msra.mxu0 0
    %1687 = vmatprep.subr.bf16.mxu0 0
    %1688 = vmatpush1.bf16.msra.mxu0 %v189
    %1689 = vmatprep.subr.bf16.mxu0 0
    %1690 = vmatpush2.bf16.msra.mxu0 0
    %1691 = vmatprep.subr.bf16.mxu0 0
    %1692 = vmatpush2.bf16.msra.mxu0 0
    %1693 = vmatprep.subr.bf16.mxu0 0
    %1694 = vmatpush2.bf16.msra.mxu0 0
    %1695 = vmatprep.subr.bf16.mxu0 0
    %1696 = vmatpush2.bf16.msra.mxu0 0
    %1697 = vmatprep.subr.bf16.mxu0 0
    %1698 = vmatpush2.bf16.msra.mxu0 0
    %1699 = vmatprep.subr.bf16.mxu0 0
    %1700 = vmatpush2.bf16.msra.mxu0 0
    %1701 = vmatprep.subr.bf16.mxu0 0
    %1702 = vmatpush2.bf16.msra.mxu0 0
    %1703 = vmatprep.subr.bf16.mxu0 0
    %1704 = vmatpush2.bf16.msra.mxu0 0
    %1705 = vmatprep.mubr.bf16.mxu0 0
    %1706 = vmatmul.mubr.bf16.gmra.mxu0 %v1671
    %v1707 = vpop.f32.mrf.mxu0
    %v1708 = vadd.f32 %v1665, %v1707
    %v1709 = vpop.f32.mrf.mxu0
    %v1710 = vpop.f32.mrf.mxu0
    %v1711 = vpop.f32.mrf.mxu0
    %1712 = vdwg.mxu0
    %v1713 = vadd.f32 %v1708, %v90
    %v1714 = vpack.c.bf16 %v1616, %v1616
    %v1716 = vsel %vm245, %v1714, 0
    %1718 = vmatprep.subr.bf16.mxu0 0
    %1719 = vmatpush1.bf16.msra.mxu0 0
    %1720 = vmatprep.subr.bf16.mxu0 0
    %1721 = vmatpush1.bf16.msra.mxu0 0
    %1722 = vmatprep.subr.bf16.mxu0 0
    %1723 = vmatpush1.bf16.msra.mxu0 0
    %1724 = vmatprep.subr.bf16.mxu0 0
    %1725 = vmatpush1.bf16.msra.mxu0 0
    %1726 = vmatprep.subr.bf16.mxu0 0
    %1727 = vmatpush1.bf16.msra.mxu0 0
    %1728 = vmatprep.subr.bf16.mxu0 0
    %1729 = vmatpush1.bf16.msra.mxu0 0
    %1730 = vmatprep.subr.bf16.mxu0 0
    %1731 = vmatpush1.bf16.msra.mxu0 %v242
    %1732 = vmatprep.subr.bf16.mxu0 0
    %1733 = vmatpush1.bf16.msra.mxu0 %v241
    %1734 = vmatprep.subr.bf16.mxu0 0
    %1735 = vmatpush2.bf16.msra.mxu0 0
    %1736 = vmatprep.subr.bf16.mxu0 0
    %1737 = vmatpush2.bf16.msra.mxu0 0
    %1738 = vmatprep.subr.bf16.mxu0 0
    %1739 = vmatpush2.bf16.msra.mxu0 0
    %1740 = vmatprep.subr.bf16.mxu0 0
    %1741 = vmatpush2.bf16.msra.mxu0 0
    %1742 = vmatprep.subr.bf16.mxu0 0
    %1743 = vmatpush2.bf16.msra.mxu0 0
    %1744 = vmatprep.subr.bf16.mxu0 0
    %1745 = vmatpush2.bf16.msra.mxu0 0
    %1746 = vmatprep.subr.bf16.mxu0 0
    %1747 = vmatpush2.bf16.msra.mxu0 0
    %1748 = vmatprep.subr.bf16.mxu0 0
    %1749 = vmatpush2.bf16.msra.mxu0 0
    %1750 = vmatprep.mubr.bf16.mxu0 0
    %1751 = vmatmul.mubr.bf16.gmra.mxu0 %v1716
    %v1752 = vpop.f32.mrf.mxu0
    %v1753 = vadd.f32 0.0, %v1752
    %v1754 = vpop.f32.mrf.mxu0
    %v1755 = vpop.f32.mrf.mxu0
    %v1756 = vpop.f32.mrf.mxu0
    %1757 = vdwg.mxu0
    %v1758 = vadd.f32 %v1713, %v1753
    %v1759 = vxor.u32 %v1758, 2147483648
    %v1760 = vmul.f32 %v1759, 1.442695
    %v1761 = vpow.pop %v1760
    %v1762 = vadd.f32 %v1761, 1.0
    %v1763 = vrcp.pop %v1762
    %v1764 = vmul.f32 1.0, %v1763
    %v1765 = vmul.f32 %v1764, %v1616
    %v1766 = vpack.c.bf16 %v1765, %v1765
    %v1768 = vsel %vm245, %v1766, 0
    %1770 = vmatprep.subr.bf16.mxu0 0
    %1771 = vmatpush1.bf16.msra.mxu0 0
    %1772 = vmatprep.subr.bf16.mxu0 0
    %1773 = vmatpush1.bf16.msra.mxu0 0
    %1774 = vmatprep.subr.bf16.mxu0 0
    %1775 = vmatpush1.bf16.msra.mxu0 0
    %1776 = vmatprep.subr.bf16.mxu0 0
    %1777 = vmatpush1.bf16.msra.mxu0 0
    %1778 = vmatprep.subr.bf16.mxu0 0
    %1779 = vmatpush1.bf16.msra.mxu0 0
    %1780 = vmatprep.subr.bf16.mxu0 0
    %1781 = vmatpush1.bf16.msra.mxu0 0
    %1782 = vmatprep.subr.bf16.mxu0 0
    %1783 = vmatpush1.bf16.msra.mxu0 %v307
    %1784 = vmatprep.subr.bf16.mxu0 0
    %1785 = vmatpush1.bf16.msra.mxu0 %v306
    %1786 = vmatprep.subr.bf16.mxu0 0
    %1787 = vmatpush2.bf16.msra.mxu0 0
    %1788 = vmatprep.subr.bf16.mxu0 0
    %1789 = vmatpush2.bf16.msra.mxu0 0
    %1790 = vmatprep.subr.bf16.mxu0 0
    %1791 = vmatpush2.bf16.msra.mxu0 0
    %1792 = vmatprep.subr.bf16.mxu0 0
    %1793 = vmatpush2.bf16.msra.mxu0 0
    %1794 = vmatprep.subr.bf16.mxu0 0
    %1795 = vmatpush2.bf16.msra.mxu0 0
    %1796 = vmatprep.subr.bf16.mxu0 0
    %1797 = vmatpush2.bf16.msra.mxu0 0
    %1798 = vmatprep.subr.bf16.mxu0 0
    %1799 = vmatpush2.bf16.msra.mxu0 0
    %1800 = vmatprep.subr.bf16.mxu0 0
    %1801 = vmatpush2.bf16.msra.mxu0 0
    %1802 = vmatprep.mubr.bf16.mxu0 0
    %1803 = vmatmul.mubr.bf16.gmra.mxu0 %v1768
    %v1804 = vpop.f32.mrf.mxu0
    %v1805 = vadd.f32 0.0, %v1804
    %v1806 = vpop.f32.mrf.mxu0
    %v1807 = vpop.f32.mrf.mxu0
    %v1808 = vpop.f32.mrf.mxu0
    %1809 = vdwg.mxu0
    %1811 = vrot.lane.b32.xlu0 %v1805, 64
    %v1812 = vpop.permute.xlu0 %1811
    %v1814 = vadd.f32 %v1713, %v1812
    %v1815 = vtanh.pop %v1814
    %v1816 = vsub.f32 1.0, %v1764
    %1818 = vrot.lane.b32.xlu0 %v1616, 32
    %v1819 = vpop.permute.xlu0 %1818
    %v1821 = vmul.f32 %v1816, %v1819
    %1823 = vrot.lane.b32.xlu0 %v1815, 96
    %v1824 = vpop.permute.xlu0 %1823
    %v1826 = vmul.f32 %v1764, %v1824
    %v1827 = vadd.f32 %v1821, %v1826
    %v1828 = vpack.c.bf16 %v1827, %v1827
    %1830 = vrot.lane.b32.xlu0 %v1828, 96
    %v1831 = vpop.permute.xlu0 %1830
    %v1833 = vsel %vm245, %v1831, 0
    %1835 = vmatprep.subr.bf16.mxu0 0
    %1836 = vmatpush1.bf16.msra.mxu0 0
    %1837 = vmatprep.subr.bf16.mxu0 0
    %1838 = vmatpush1.bf16.msra.mxu0 0
    %1839 = vmatprep.subr.bf16.mxu0 0
    %1840 = vmatpush1.bf16.msra.mxu0 0
    %1841 = vmatprep.subr.bf16.mxu0 0
    %1842 = vmatpush1.bf16.msra.mxu0 0
    %1843 = vmatprep.subr.bf16.mxu0 0
    %1844 = vmatpush1.bf16.msra.mxu0 0
    %1845 = vmatprep.subr.bf16.mxu0 0
    %1846 = vmatpush1.bf16.msra.mxu0 0
    %1847 = vmatprep.subr.bf16.mxu0 0
    %1848 = vmatpush1.bf16.msra.mxu0 %v384
    %1849 = vmatprep.subr.bf16.mxu0 0
    %1850 = vmatpush1.bf16.msra.mxu0 %v383
    %1851 = vmatprep.subr.bf16.mxu0 0
    %1852 = vmatpush2.bf16.msra.mxu0 0
    %1853 = vmatprep.subr.bf16.mxu0 0
    %1854 = vmatpush2.bf16.msra.mxu0 0
    %1855 = vmatprep.subr.bf16.mxu0 0
    %1856 = vmatpush2.bf16.msra.mxu0 0
    %1857 = vmatprep.subr.bf16.mxu0 0
    %1858 = vmatpush2.bf16.msra.mxu0 0
    %1859 = vmatprep.subr.bf16.mxu0 0
    %1860 = vmatpush2.bf16.msra.mxu0 0
    %1861 = vmatprep.subr.bf16.mxu0 0
    %1862 = vmatpush2.bf16.msra.mxu0 0
    %1863 = vmatprep.subr.bf16.mxu0 0
    %1864 = vmatpush2.bf16.msra.mxu0 0
    %1865 = vmatprep.subr.bf16.mxu0 0
    %1866 = vmatpush2.bf16.msra.mxu0 0
    %1867 = vmatprep.mubr.bf16.mxu0 0
    %1868 = vmatmul.mubr.bf16.gmra.mxu0 %v1833
    %v1869 = vpop.f32.mrf.mxu0
    %v1870 = vadd.f32 %v97, %v1869
    %v1871 = vpop.f32.mrf.mxu0
    %v1872 = vpop.f32.mrf.mxu0
    %v1873 = vpop.f32.mrf.mxu0
    %1874 = vdwg.mxu0
    %s1875 = smul.f32 %s84, 0.625
    %v1876 = vstv %s1875
    %v1877 = vadd.f32 %v1870, %v1876
    %vm1878 = vcmp.ge.f32.partialorder %v1877, 0.0
    %vm1879 = vcmp.eq.f32.partialorder %v1598, -1.0
    %vm1880 = vmand %vm1878, %vm1879
    %v1881 = vsel %vm1880, 1, 0
    %1882 = vset.pattern.permute.xlu0 4
    %1883 = vperm.xlu0 %1882, %v1881
    %v1884 = vpop.permute.xlu0 %1883
    %vm1885 = vcmp.eq.s32.totalorder %v1884, 1
    %v1886 = vsel %vm1885, %v1870, %v1597
    %v1887 = vsel %vm1880, 6.0, %v1598
    %s1888 = scalar_lea.vmem [#allocation3], 48
    %v1889 = vld [vmem:[%s1888] sm:$0xff]
    %vm1890 = vcmp.ne.f32.partialorder %v1889, 0.0
    %v1891 = vsel %vm1890, 1, 0
    %v1892 = vcvt.s32.f32 %v1891
    %v1893 = vmul.f32 %v1892, %v1889
    %v1894 = vadd.f32 %v1605, %v1893
    %v1895 = vadd.f32 %v1606, %v1892
    %vm1896 = vcmp.gt.f32.partialorder %v1895, 0.0
    %v1897 = vsel %vm1896, %v1895, 1.0
    %v1898 = vrcp.pop %v1897
    %v1899 = vmul.f32 %v1894, %v1898
    %v1900 = vsel %vm1896, %v1899, 0.0
    %1902 = vrot.lane.b32.xlu0 %v1827, 96
    %v1903 = vpop.permute.xlu0 %1902
    %v1905 = vmul.f32 %v111, %v1903
    %v1906 = vsub.f32 1.0, %v1892
    %v1907 = vmul.f32 %v1906, %v1619
    %v1908 = vadd.f32 %v1893, %v1907
    %v1909 = vmul.f32 %v104, %v1908
    %v1910 = vmul.f32 %v113, %v1900
    %v1911 = vadd.f32 %v1909, %v1910
    %v1912 = vmul.f32 %v1906, %v1911
    %v1913 = vadd.f32 %v1893, %v1912
    %v1914 = vpack.c.bf16 %v1913, %v1913
    %v1915 = vpack.c.bf16 %v1892, %v1892
    %v1917 = vsel %vm137, %v1915, 0
    %1919 = vmatprep.subr.bf16.mxu0 0
    %1920 = vmatpush1.bf16.msra.mxu0 0
    %1921 = vmatprep.subr.bf16.mxu0 0
    %1922 = vmatpush1.bf16.msra.mxu0 0
    %1923 = vmatprep.subr.bf16.mxu0 0
    %1924 = vmatpush1.bf16.msra.mxu0 0
    %1925 = vmatprep.subr.bf16.mxu0 0
    %1926 = vmatpush1.bf16.msra.mxu0 0
    %1927 = vmatprep.subr.bf16.mxu0 0
    %1928 = vmatpush1.bf16.msra.mxu0 0
    %1929 = vmatprep.subr.bf16.mxu0 0
    %1930 = vmatpush1.bf16.msra.mxu0 0
    %1931 = vmatprep.subr.bf16.mxu0 0
    %1932 = vmatpush1.bf16.msra.mxu0 0
    %1933 = vmatprep.subr.bf16.mxu0 0
    %1934 = vmatpush1.bf16.msra.mxu0 %v143
    %1935 = vmatprep.subr.bf16.mxu0 0
    %1936 = vmatpush2.bf16.msra.mxu0 0
    %1937 = vmatprep.subr.bf16.mxu0 0
    %1938 = vmatpush2.bf16.msra.mxu0 0
    %1939 = vmatprep.subr.bf16.mxu0 0
    %1940 = vmatpush2.bf16.msra.mxu0 0
    %1941 = vmatprep.subr.bf16.mxu0 0
    %1942 = vmatpush2.bf16.msra.mxu0 0
    %1943 = vmatprep.subr.bf16.mxu0 0
    %1944 = vmatpush2.bf16.msra.mxu0 0
    %1945 = vmatprep.subr.bf16.mxu0 0
    %1946 = vmatpush2.bf16.msra.mxu0 0
    %1947 = vmatprep.subr.bf16.mxu0 0
    %1948 = vmatpush2.bf16.msra.mxu0 0
    %1949 = vmatprep.subr.bf16.mxu0 0
    %1950 = vmatpush2.bf16.msra.mxu0 0
    %1951 = vmatprep.mubr.bf16.mxu0 0
    %1952 = vmatmul.mubr.bf16.gmra.mxu0 %v1917
    %v1953 = vpop.f32.mrf.mxu0
    %v1954 = vadd.f32 0.0, %v1953
    %v1955 = vpop.f32.mrf.mxu0
    %v1956 = vpop.f32.mrf.mxu0
    %v1957 = vpop.f32.mrf.mxu0
    %1958 = vdwg.mxu0
    %v1960 = vsel %vm137, %v1914, 0
    %1962 = vmatprep.subr.bf16.mxu0 0
    %1963 = vmatpush1.bf16.msra.mxu0 0
    %1964 = vmatprep.subr.bf16.mxu0 0
    %1965 = vmatpush1.bf16.msra.mxu0 0
    %1966 = vmatprep.subr.bf16.mxu0 0
    %1967 = vmatpush1.bf16.msra.mxu0 0
    %1968 = vmatprep.subr.bf16.mxu0 0
    %1969 = vmatpush1.bf16.msra.mxu0 0
    %1970 = vmatprep.subr.bf16.mxu0 0
    %1971 = vmatpush1.bf16.msra.mxu0 0
    %1972 = vmatprep.subr.bf16.mxu0 0
    %1973 = vmatpush1.bf16.msra.mxu0 0
    %1974 = vmatprep.subr.bf16.mxu0 0
    %1975 = vmatpush1.bf16.msra.mxu0 0
    %1976 = vmatprep.subr.bf16.mxu0 0
    %1977 = vmatpush1.bf16.msra.mxu0 %v189
    %1978 = vmatprep.subr.bf16.mxu0 0
    %1979 = vmatpush2.bf16.msra.mxu0 0
    %1980 = vmatprep.subr.bf16.mxu0 0
    %1981 = vmatpush2.bf16.msra.mxu0 0
    %1982 = vmatprep.subr.bf16.mxu0 0
    %1983 = vmatpush2.bf16.msra.mxu0 0
    %1984 = vmatprep.subr.bf16.mxu0 0
    %1985 = vmatpush2.bf16.msra.mxu0 0
    %1986 = vmatprep.subr.bf16.mxu0 0
    %1987 = vmatpush2.bf16.msra.mxu0 0
    %1988 = vmatprep.subr.bf16.mxu0 0
    %1989 = vmatpush2.bf16.msra.mxu0 0
    %1990 = vmatprep.subr.bf16.mxu0 0
    %1991 = vmatpush2.bf16.msra.mxu0 0
    %1992 = vmatprep.subr.bf16.mxu0 0
    %1993 = vmatpush2.bf16.msra.mxu0 0
    %1994 = vmatprep.mubr.bf16.mxu0 0
    %1995 = vmatmul.mubr.bf16.gmra.mxu0 %v1960
    %v1996 = vpop.f32.mrf.mxu0
    %v1997 = vadd.f32 %v1954, %v1996
    %v1998 = vpop.f32.mrf.mxu0
    %v1999 = vpop.f32.mrf.mxu0
    %v2000 = vpop.f32.mrf.mxu0
    %2001 = vdwg.mxu0
    %v2002 = vadd.f32 %v1997, %v90
    %v2003 = vpack.c.bf16 %v1905, %v1905
    %v2005 = vsel %vm245, %v2003, 0
    %2007 = vmatprep.subr.bf16.mxu0 0
    %2008 = vmatpush1.bf16.msra.mxu0 0
    %2009 = vmatprep.subr.bf16.mxu0 0
    %2010 = vmatpush1.bf16.msra.mxu0 0
    %2011 = vmatprep.subr.bf16.mxu0 0
    %2012 = vmatpush1.bf16.msra.mxu0 0
    %2013 = vmatprep.subr.bf16.mxu0 0
    %2014 = vmatpush1.bf16.msra.mxu0 0
    %2015 = vmatprep.subr.bf16.mxu0 0
    %2016 = vmatpush1.bf16.msra.mxu0 0
    %2017 = vmatprep.subr.bf16.mxu0 0
    %2018 = vmatpush1.bf16.msra.mxu0 0
    %2019 = vmatprep.subr.bf16.mxu0 0
    %2020 = vmatpush1.bf16.msra.mxu0 %v242
    %2021 = vmatprep.subr.bf16.mxu0 0
    %2022 = vmatpush1.bf16.msra.mxu0 %v241
    %2023 = vmatprep.subr.bf16.mxu0 0
    %2024 = vmatpush2.bf16.msra.mxu0 0
    %2025 = vmatprep.subr.bf16.mxu0 0
    %2026 = vmatpush2.bf16.msra.mxu0 0
    %2027 = vmatprep.subr.bf16.mxu0 0
    %2028 = vmatpush2.bf16.msra.mxu0 0
    %2029 = vmatprep.subr.bf16.mxu0 0
    %2030 = vmatpush2.bf16.msra.mxu0 0
    %2031 = vmatprep.subr.bf16.mxu0 0
    %2032 = vmatpush2.bf16.msra.mxu0 0
    %2033 = vmatprep.subr.bf16.mxu0 0
    %2034 = vmatpush2.bf16.msra.mxu0 0
    %2035 = vmatprep.subr.bf16.mxu0 0
    %2036 = vmatpush2.bf16.msra.mxu0 0
    %2037 = vmatprep.subr.bf16.mxu0 0
    %2038 = vmatpush2.bf16.msra.mxu0 0
    %2039 = vmatprep.mubr.bf16.mxu0 0
    %2040 = vmatmul.mubr.bf16.gmra.mxu0 %v2005
    %v2041 = vpop.f32.mrf.mxu0
    %v2042 = vadd.f32 0.0, %v2041
    %v2043 = vpop.f32.mrf.mxu0
    %v2044 = vpop.f32.mrf.mxu0
    %v2045 = vpop.f32.mrf.mxu0
    %2046 = vdwg.mxu0
    %v2047 = vadd.f32 %v2002, %v2042
    %v2048 = vxor.u32 %v2047, 2147483648
    %v2049 = vmul.f32 %v2048, 1.442695
    %v2050 = vpow.pop %v2049
    %v2051 = vadd.f32 %v2050, 1.0
    %v2052 = vrcp.pop %v2051
    %v2053 = vmul.f32 1.0, %v2052
    %v2054 = vmul.f32 %v2053, %v1905
    %v2055 = vpack.c.bf16 %v2054, %v2054
    %v2057 = vsel %vm245, %v2055, 0
    %2059 = vmatprep.subr.bf16.mxu0 0
    %2060 = vmatpush1.bf16.msra.mxu0 0
    %2061 = vmatprep.subr.bf16.mxu0 0
    %2062 = vmatpush1.bf16.msra.mxu0 0
    %2063 = vmatprep.subr.bf16.mxu0 0
    %2064 = vmatpush1.bf16.msra.mxu0 0
    %2065 = vmatprep.subr.bf16.mxu0 0
    %2066 = vmatpush1.bf16.msra.mxu0 0
    %2067 = vmatprep.subr.bf16.mxu0 0
    %2068 = vmatpush1.bf16.msra.mxu0 0
    %2069 = vmatprep.subr.bf16.mxu0 0
    %2070 = vmatpush1.bf16.msra.mxu0 0
    %2071 = vmatprep.subr.bf16.mxu0 0
    %2072 = vmatpush1.bf16.msra.mxu0 %v307
    %2073 = vmatprep.subr.bf16.mxu0 0
    %2074 = vmatpush1.bf16.msra.mxu0 %v306
    %2075 = vmatprep.subr.bf16.mxu0 0
    %2076 = vmatpush2.bf16.msra.mxu0 0
    %2077 = vmatprep.subr.bf16.mxu0 0
    %2078 = vmatpush2.bf16.msra.mxu0 0
    %2079 = vmatprep.subr.bf16.mxu0 0
    %2080 = vmatpush2.bf16.msra.mxu0 0
    %2081 = vmatprep.subr.bf16.mxu0 0
    %2082 = vmatpush2.bf16.msra.mxu0 0
    %2083 = vmatprep.subr.bf16.mxu0 0
    %2084 = vmatpush2.bf16.msra.mxu0 0
    %2085 = vmatprep.subr.bf16.mxu0 0
    %2086 = vmatpush2.bf16.msra.mxu0 0
    %2087 = vmatprep.subr.bf16.mxu0 0
    %2088 = vmatpush2.bf16.msra.mxu0 0
    %2089 = vmatprep.subr.bf16.mxu0 0
    %2090 = vmatpush2.bf16.msra.mxu0 0
    %2091 = vmatprep.mubr.bf16.mxu0 0
    %2092 = vmatmul.mubr.bf16.gmra.mxu0 %v2057
    %v2093 = vpop.f32.mrf.mxu0
    %v2094 = vadd.f32 0.0, %v2093
    %v2095 = vpop.f32.mrf.mxu0
    %v2096 = vpop.f32.mrf.mxu0
    %v2097 = vpop.f32.mrf.mxu0
    %2098 = vdwg.mxu0
    %2100 = vrot.lane.b32.xlu0 %v2094, 64
    %v2101 = vpop.permute.xlu0 %2100
    %v2103 = vadd.f32 %v2002, %v2101
    %v2104 = vtanh.pop %v2103
    %v2105 = vsub.f32 1.0, %v2053
    %2107 = vrot.lane.b32.xlu0 %v1905, 32
    %v2108 = vpop.permute.xlu0 %2107
    %v2110 = vmul.f32 %v2105, %v2108
    %2112 = vrot.lane.b32.xlu0 %v2104, 96
    %v2113 = vpop.permute.xlu0 %2112
    %v2115 = vmul.f32 %v2053, %v2113
    %v2116 = vadd.f32 %v2110, %v2115
    %v2117 = vpack.c.bf16 %v2116, %v2116
    %2119 = vrot.lane.b32.xlu0 %v2117, 96
    %v2120 = vpop.permute.xlu0 %2119
    %v2122 = vsel %vm245, %v2120, 0
    %2124 = vmatprep.subr.bf16.mxu0 0
    %2125 = vmatpush1.bf16.msra.mxu0 0
    %2126 = vmatprep.subr.bf16.mxu0 0
    %2127 = vmatpush1.bf16.msra.mxu0 0
    %2128 = vmatprep.subr.bf16.mxu0 0
    %2129 = vmatpush1.bf16.msra.mxu0 0
    %2130 = vmatprep.subr.bf16.mxu0 0
    %2131 = vmatpush1.bf16.msra.mxu0 0
    %2132 = vmatprep.subr.bf16.mxu0 0
    %2133 = vmatpush1.bf16.msra.mxu0 0
    %2134 = vmatprep.subr.bf16.mxu0 0
    %2135 = vmatpush1.bf16.msra.mxu0 0
    %2136 = vmatprep.subr.bf16.mxu0 0
    %2137 = vmatpush1.bf16.msra.mxu0 %v384
    %2138 = vmatprep.subr.bf16.mxu0 0
    %2139 = vmatpush1.bf16.msra.mxu0 %v383
    %2140 = vmatprep.subr.bf16.mxu0 0
    %2141 = vmatpush2.bf16.msra.mxu0 0
    %2142 = vmatprep.subr.bf16.mxu0 0
    %2143 = vmatpush2.bf16.msra.mxu0 0
    %2144 = vmatprep.subr.bf16.mxu0 0
    %2145 = vmatpush2.bf16.msra.mxu0 0
    %2146 = vmatprep.subr.bf16.mxu0 0
    %2147 = vmatpush2.bf16.msra.mxu0 0
    %2148 = vmatprep.subr.bf16.mxu0 0
    %2149 = vmatpush2.bf16.msra.mxu0 0
    %2150 = vmatprep.subr.bf16.mxu0 0
    %2151 = vmatpush2.bf16.msra.mxu0 0
    %2152 = vmatprep.subr.bf16.mxu0 0
    %2153 = vmatpush2.bf16.msra.mxu0 0
    %2154 = vmatprep.subr.bf16.mxu0 0
    %2155 = vmatpush2.bf16.msra.mxu0 0
    %2156 = vmatprep.mubr.bf16.mxu0 0
    %2157 = vmatmul.mubr.bf16.gmra.mxu0 %v2122
    %v2158 = vpop.f32.mrf.mxu0
    %v2159 = vadd.f32 %v97, %v2158
    %v2160 = vpop.f32.mrf.mxu0
    %v2161 = vpop.f32.mrf.mxu0
    %v2162 = vpop.f32.mrf.mxu0
    %2163 = vdwg.mxu0
    %s2164 = smul.f32 %s84, 0.75
    %v2165 = vstv %s2164
    %v2166 = vadd.f32 %v2159, %v2165
    %vm2167 = vcmp.ge.f32.partialorder %v2166, 0.0
    %vm2168 = vcmp.eq.f32.partialorder %v1887, -1.0
    %vm2169 = vmand %vm2167, %vm2168
    %v2170 = vsel %vm2169, 1, 0
    %2171 = vset.pattern.permute.xlu0 4
    %2172 = vperm.xlu0 %2171, %v2170
    %v2173 = vpop.permute.xlu0 %2172
    %vm2174 = vcmp.eq.s32.totalorder %v2173, 1
    %v2175 = vsel %vm2174, %v2159, %v1886
    %v2176 = vsel %vm2169, 7.0, %v1887
    %s2177 = scalar_lea.vmem [#allocation3], 56
    %v2178 = vld [vmem:[%s2177] sm:$0xff]
    %vm2179 = vcmp.ne.f32.partialorder %v2178, 0.0
    %v2180 = vsel %vm2179, 1, 0
    %v2181 = vcvt.s32.f32 %v2180
    %v2182 = vmul.f32 %v2181, %v2178
    %v2183 = vadd.f32 %v1894, %v2182
    %v2184 = vadd.f32 %v1895, %v2181
    %vm2185 = vcmp.gt.f32.partialorder %v2184, 0.0
    %v2186 = vsel %vm2185, %v2184, 1.0
    %v2187 = vrcp.pop %v2186
    %v2188 = vmul.f32 %v2183, %v2187
    %v2189 = vsel %vm2185, %v2188, 0.0
    %2191 = vrot.lane.b32.xlu0 %v2116, 96
    %v2192 = vpop.permute.xlu0 %2191
    %v2194 = vmul.f32 %v111, %v2192
    %v2195 = vsub.f32 1.0, %v2181
    %v2196 = vmul.f32 %v2195, %v1908
    %v2197 = vadd.f32 %v2182, %v2196
    %v2198 = vmul.f32 %v104, %v2197
    %v2199 = vmul.f32 %v113, %v2189
    %v2200 = vadd.f32 %v2198, %v2199
    %v2201 = vmul.f32 %v2195, %v2200
    %v2202 = vadd.f32 %v2182, %v2201
    %v2203 = vpack.c.bf16 %v2202, %v2202
    %v2204 = vpack.c.bf16 %v2181, %v2181
    %v2206 = vsel %vm137, %v2204, 0
    %2208 = vmatprep.subr.bf16.mxu0 0
    %2209 = vmatpush1.bf16.msra.mxu0 0
    %2210 = vmatprep.subr.bf16.mxu0 0
    %2211 = vmatpush1.bf16.msra.mxu0 0
    %2212 = vmatprep.subr.bf16.mxu0 0
    %2213 = vmatpush1.bf16.msra.mxu0 0
    %2214 = vmatprep.subr.bf16.mxu0 0
    %2215 = vmatpush1.bf16.msra.mxu0 0
    %2216 = vmatprep.subr.bf16.mxu0 0
    %2217 = vmatpush1.bf16.msra.mxu0 0
    %2218 = vmatprep.subr.bf16.mxu0 0
    %2219 = vmatpush1.bf16.msra.mxu0 0
    %2220 = vmatprep.subr.bf16.mxu0 0
    %2221 = vmatpush1.bf16.msra.mxu0 0
    %2222 = vmatprep.subr.bf16.mxu0 0
    %2223 = vmatpush1.bf16.msra.mxu0 %v143
    %2224 = vmatprep.subr.bf16.mxu0 0
    %2225 = vmatpush2.bf16.msra.mxu0 0
    %2226 = vmatprep.subr.bf16.mxu0 0
    %2227 = vmatpush2.bf16.msra.mxu0 0
    %2228 = vmatprep.subr.bf16.mxu0 0
    %2229 = vmatpush2.bf16.msra.mxu0 0
    %2230 = vmatprep.subr.bf16.mxu0 0
    %2231 = vmatpush2.bf16.msra.mxu0 0
    %2232 = vmatprep.subr.bf16.mxu0 0
    %2233 = vmatpush2.bf16.msra.mxu0 0
    %2234 = vmatprep.subr.bf16.mxu0 0
    %2235 = vmatpush2.bf16.msra.mxu0 0
    %2236 = vmatprep.subr.bf16.mxu0 0
    %2237 = vmatpush2.bf16.msra.mxu0 0
    %2238 = vmatprep.subr.bf16.mxu0 0
    %2239 = vmatpush2.bf16.msra.mxu0 0
    %2240 = vmatprep.mubr.bf16.mxu0 0
    %2241 = vmatmul.mubr.bf16.gmra.mxu0 %v2206
    %v2242 = vpop.f32.mrf.mxu0
    %v2243 = vadd.f32 0.0, %v2242
    %v2244 = vpop.f32.mrf.mxu0
    %v2245 = vpop.f32.mrf.mxu0
    %v2246 = vpop.f32.mrf.mxu0
    %2247 = vdwg.mxu0
    %v2249 = vsel %vm137, %v2203, 0
    %2251 = vmatprep.subr.bf16.mxu0 0
    %2252 = vmatpush1.bf16.msra.mxu0 0
    %2253 = vmatprep.subr.bf16.mxu0 0
    %2254 = vmatpush1.bf16.msra.mxu0 0
    %2255 = vmatprep.subr.bf16.mxu0 0
    %2256 = vmatpush1.bf16.msra.mxu0 0
    %2257 = vmatprep.subr.bf16.mxu0 0
    %2258 = vmatpush1.bf16.msra.mxu0 0
    %2259 = vmatprep.subr.bf16.mxu0 0
    %2260 = vmatpush1.bf16.msra.mxu0 0
    %2261 = vmatprep.subr.bf16.mxu0 0
    %2262 = vmatpush1.bf16.msra.mxu0 0
    %2263 = vmatprep.subr.bf16.mxu0 0
    %2264 = vmatpush1.bf16.msra.mxu0 0
    %2265 = vmatprep.subr.bf16.mxu0 0
    %2266 = vmatpush1.bf16.msra.mxu0 %v189
    %2267 = vmatprep.subr.bf16.mxu0 0
    %2268 = vmatpush2.bf16.msra.mxu0 0
    %2269 = vmatprep.subr.bf16.mxu0 0
    %2270 = vmatpush2.bf16.msra.mxu0 0
    %2271 = vmatprep.subr.bf16.mxu0 0
    %2272 = vmatpush2.bf16.msra.mxu0 0
    %2273 = vmatprep.subr.bf16.mxu0 0
    %2274 = vmatpush2.bf16.msra.mxu0 0
    %2275 = vmatprep.subr.bf16.mxu0 0
    %2276 = vmatpush2.bf16.msra.mxu0 0
    %2277 = vmatprep.subr.bf16.mxu0 0
    %2278 = vmatpush2.bf16.msra.mxu0 0
    %2279 = vmatprep.subr.bf16.mxu0 0
    %2280 = vmatpush2.bf16.msra.mxu0 0
    %2281 = vmatprep.subr.bf16.mxu0 0
    %2282 = vmatpush2.bf16.msra.mxu0 0
    %2283 = vmatprep.mubr.bf16.mxu0 0
    %2284 = vmatmul.mubr.bf16.gmra.mxu0 %v2249
    %v2285 = vpop.f32.mrf.mxu0
    %v2286 = vadd.f32 %v2243, %v2285
    %v2287 = vpop.f32.mrf.mxu0
    %v2288 = vpop.f32.mrf.mxu0
    %v2289 = vpop.f32.mrf.mxu0
    %2290 = vdwg.mxu0
    %v2291 = vadd.f32 %v2286, %v90
    %v2292 = vpack.c.bf16 %v2194, %v2194
    %v2294 = vsel %vm245, %v2292, 0
    %2296 = vmatprep.subr.bf16.mxu0 0
    %2297 = vmatpush1.bf16.msra.mxu0 0
    %2298 = vmatprep.subr.bf16.mxu0 0
    %2299 = vmatpush1.bf16.msra.mxu0 0
    %2300 = vmatprep.subr.bf16.mxu0 0
    %2301 = vmatpush1.bf16.msra.mxu0 0
    %2302 = vmatprep.subr.bf16.mxu0 0
    %2303 = vmatpush1.bf16.msra.mxu0 0
    %2304 = vmatprep.subr.bf16.mxu0 0
    %2305 = vmatpush1.bf16.msra.mxu0 0
    %2306 = vmatprep.subr.bf16.mxu0 0
    %2307 = vmatpush1.bf16.msra.mxu0 0
    %2308 = vmatprep.subr.bf16.mxu0 0
    %2309 = vmatpush1.bf16.msra.mxu0 %v242
    %2310 = vmatprep.subr.bf16.mxu0 0
    %2311 = vmatpush1.bf16.msra.mxu0 %v241
    %2312 = vmatprep.subr.bf16.mxu0 0
    %2313 = vmatpush2.bf16.msra.mxu0 0
    %2314 = vmatprep.subr.bf16.mxu0 0
    %2315 = vmatpush2.bf16.msra.mxu0 0
    %2316 = vmatprep.subr.bf16.mxu0 0
    %2317 = vmatpush2.bf16.msra.mxu0 0
    %2318 = vmatprep.subr.bf16.mxu0 0
    %2319 = vmatpush2.bf16.msra.mxu0 0
    %2320 = vmatprep.subr.bf16.mxu0 0
    %2321 = vmatpush2.bf16.msra.mxu0 0
    %2322 = vmatprep.subr.bf16.mxu0 0
    %2323 = vmatpush2.bf16.msra.mxu0 0
    %2324 = vmatprep.subr.bf16.mxu0 0
    %2325 = vmatpush2.bf16.msra.mxu0 0
    %2326 = vmatprep.subr.bf16.mxu0 0
    %2327 = vmatpush2.bf16.msra.mxu0 0
    %2328 = vmatprep.mubr.bf16.mxu0 0
    %2329 = vmatmul.mubr.bf16.gmra.mxu0 %v2294
    %v2330 = vpop.f32.mrf.mxu0
    %v2331 = vadd.f32 0.0, %v2330
    %v2332 = vpop.f32.mrf.mxu0
    %v2333 = vpop.f32.mrf.mxu0
    %v2334 = vpop.f32.mrf.mxu0
    %2335 = vdwg.mxu0
    %v2336 = vadd.f32 %v2291, %v2331
    %v2337 = vxor.u32 %v2336, 2147483648
    %v2338 = vmul.f32 %v2337, 1.442695
    %v2339 = vpow.pop %v2338
    %v2340 = vadd.f32 %v2339, 1.0
    %v2341 = vrcp.pop %v2340
    %v2342 = vmul.f32 1.0, %v2341
    %v2343 = vmul.f32 %v2342, %v2194
    %v2344 = vpack.c.bf16 %v2343, %v2343
    %v2346 = vsel %vm245, %v2344, 0
    %2348 = vmatprep.subr.bf16.mxu0 0
    %2349 = vmatpush1.bf16.msra.mxu0 0
    %2350 = vmatprep.subr.bf16.mxu0 0
    %2351 = vmatpush1.bf16.msra.mxu0 0
    %2352 = vmatprep.subr.bf16.mxu0 0
    %2353 = vmatpush1.bf16.msra.mxu0 0
    %2354 = vmatprep.subr.bf16.mxu0 0
    %2355 = vmatpush1.bf16.msra.mxu0 0
    %2356 = vmatprep.subr.bf16.mxu0 0
    %2357 = vmatpush1.bf16.msra.mxu0 0
    %2358 = vmatprep.subr.bf16.mxu0 0
    %2359 = vmatpush1.bf16.msra.mxu0 0
    %2360 = vmatprep.subr.bf16.mxu0 0
    %2361 = vmatpush1.bf16.msra.mxu0 %v307
    %2362 = vmatprep.subr.bf16.mxu0 0
    %2363 = vmatpush1.bf16.msra.mxu0 %v306
    %2364 = vmatprep.subr.bf16.mxu0 0
    %2365 = vmatpush2.bf16.msra.mxu0 0
    %2366 = vmatprep.subr.bf16.mxu0 0
    %2367 = vmatpush2.bf16.msra.mxu0 0
    %2368 = vmatprep.subr.bf16.mxu0 0
    %2369 = vmatpush2.bf16.msra.mxu0 0
    %2370 = vmatprep.subr.bf16.mxu0 0
    %2371 = vmatpush2.bf16.msra.mxu0 0
    %2372 = vmatprep.subr.bf16.mxu0 0
    %2373 = vmatpush2.bf16.msra.mxu0 0
    %2374 = vmatprep.subr.bf16.mxu0 0
    %2375 = vmatpush2.bf16.msra.mxu0 0
    %2376 = vmatprep.subr.bf16.mxu0 0
    %2377 = vmatpush2.bf16.msra.mxu0 0
    %2378 = vmatprep.subr.bf16.mxu0 0
    %2379 = vmatpush2.bf16.msra.mxu0 0
    %2380 = vmatprep.mubr.bf16.mxu0 0
    %2381 = vmatmul.mubr.bf16.gmra.mxu0 %v2346
    %v2382 = vpop.f32.mrf.mxu0
    %v2383 = vadd.f32 0.0, %v2382
    %v2384 = vpop.f32.mrf.mxu0
    %v2385 = vpop.f32.mrf.mxu0
    %v2386 = vpop.f32.mrf.mxu0
    %2387 = vdwg.mxu0
    %2389 = vrot.lane.b32.xlu0 %v2383, 64
    %v2390 = vpop.permute.xlu0 %2389
    %v2392 = vadd.f32 %v2291, %v2390
    %v2393 = vtanh.pop %v2392
    %v2394 = vsub.f32 1.0, %v2342
    %2396 = vrot.lane.b32.xlu0 %v2194, 32
    %v2397 = vpop.permute.xlu0 %2396
    %v2399 = vmul.f32 %v2394, %v2397
    %2401 = vrot.lane.b32.xlu0 %v2393, 96
    %v2402 = vpop.permute.xlu0 %2401
    %v2404 = vmul.f32 %v2342, %v2402
    %v2405 = vadd.f32 %v2399, %v2404
    %v2406 = vpack.c.bf16 %v2405, %v2405
    %2408 = vrot.lane.b32.xlu0 %v2406, 96
    %v2409 = vpop.permute.xlu0 %2408
    %v2411 = vsel %vm245, %v2409, 0
    %2413 = vmatprep.subr.bf16.mxu0 0
    %2414 = vmatpush1.bf16.msra.mxu0 0
    %2415 = vmatprep.subr.bf16.mxu0 0
    %2416 = vmatpush1.bf16.msra.mxu0 0
    %2417 = vmatprep.subr.bf16.mxu0 0
    %2418 = vmatpush1.bf16.msra.mxu0 0
    %2419 = vmatprep.subr.bf16.mxu0 0
    %2420 = vmatpush1.bf16.msra.mxu0 0
    %2421 = vmatprep.subr.bf16.mxu0 0
    %2422 = vmatpush1.bf16.msra.mxu0 0
    %2423 = vmatprep.subr.bf16.mxu0 0
    %2424 = vmatpush1.bf16.msra.mxu0 0
    %2425 = vmatprep.subr.bf16.mxu0 0
    %2426 = vmatpush1.bf16.msra.mxu0 %v384
    %2427 = vmatprep.subr.bf16.mxu0 0
    %2428 = vmatpush1.bf16.msra.mxu0 %v383
    %2429 = vmatprep.subr.bf16.mxu0 0
    %2430 = vmatpush2.bf16.msra.mxu0 0
    %2431 = vmatprep.subr.bf16.mxu0 0
    %2432 = vmatpush2.bf16.msra.mxu0 0
    %2433 = vmatprep.subr.bf16.mxu0 0
    %2434 = vmatpush2.bf16.msra.mxu0 0
    %2435 = vmatprep.subr.bf16.mxu0 0
    %2436 = vmatpush2.bf16.msra.mxu0 0
    %2437 = vmatprep.subr.bf16.mxu0 0
    %2438 = vmatpush2.bf16.msra.mxu0 0
    %2439 = vmatprep.subr.bf16.mxu0 0
    %2440 = vmatpush2.bf16.msra.mxu0 0
    %2441 = vmatprep.subr.bf16.mxu0 0
    %2442 = vmatpush2.bf16.msra.mxu0 0
    %2443 = vmatprep.subr.bf16.mxu0 0
    %2444 = vmatpush2.bf16.msra.mxu0 0
    %2445 = vmatprep.mubr.bf16.mxu0 0
    %2446 = vmatmul.mubr.bf16.gmra.mxu0 %v2411
    %v2447 = vpop.f32.mrf.mxu0
    %v2448 = vadd.f32 %v97, %v2447
    %v2449 = vpop.f32.mrf.mxu0
    %v2450 = vpop.f32.mrf.mxu0
    %v2451 = vpop.f32.mrf.mxu0
    %2452 = vdwg.mxu0
    %s2453 = smul.f32 %s84, 0.875
    %v2454 = vstv %s2453
    %v2455 = vadd.f32 %v2448, %v2454
    %vm2456 = vcmp.ge.f32.partialorder %v2455, 0.0
    %vm2457 = vcmp.eq.f32.partialorder %v2176, -1.0
    %vm2458 = vmand %vm2456, %vm2457
    %v2459 = vsel %vm2458, 1, 0
    %2460 = vset.pattern.permute.xlu0 4
    %2461 = vperm.xlu0 %2460, %v2459
    %v2462 = vpop.permute.xlu0 %2461
    %vm2463 = vcmp.eq.s32.totalorder %v2462, 1
    %v2464 = vsel %vm2463, %v2448, %v2175
    %v2465 = vsel %vm2458, 8.0, %v2176
    %vm2466 = vcmp.eq.f32.partialorder %v2465, -1.0
    %v2467 = vsel %vm2466, 1, 0
    %2468 = vset.pattern.permute.xlu0 4
    %2469 = vperm.xlu0 %2468, %v2467
    %v2470 = vpop.permute.xlu0 %2469
    %vm2471 = vcmp.eq.s32.totalorder %v2470, 1
    %v2472 = vsel %vm2471, %v2448, %v2464
    %vm2473 = vcmask 31744
    %2474 = vst.msk [vmem:[%s11] sm:$0xff] %vm2473, %v2472
    %v2475 = vsel %vm2466, 8.0, %v2465
    %2477 = vrot.lane.b32.xlu0 %v2475, 124
    %v2478 = vpop.permute.xlu0 %2477
    %vm2480 = vcmask 7168
    %2481 = vst.msk [vmem:[%s12] sm:$0xff] %vm2480, %v2478
    // Predicated region
    $region54: #{tpu_custom_call.1} parent=1 // pred_check
      _
    $region55: #{tpu_custom_call.1} parent=1 // pred_check_branch
      %2483 = sbr.rel (0) target = $region57
    $region56: #{tpu_custom_call.1} parent=1 // pred_region
      _
    $region57: #{tpu_custom_call.1} parent=1 // pred_fallthru
      _
    // Predicated region
    $region58: #{tpu_custom_call.1} parent=1 // pred_check
      _
    $region59: #{tpu_custom_call.1} parent=1 // pred_check_branch
      %2485 = sbr.rel (0) target = $region61
    $region60: #{tpu_custom_call.1} parent=1 // pred_region
      _
    $region61: #{tpu_custom_call.1} parent=1 // pred_fallthru
      _
    // Predicated region
    $region62: #{tpu_custom_call.1} parent=1 // pred_check
      _
    $region63: #{tpu_custom_call.1} parent=1 // pred_check_branch
      %2487 = sbr.rel (0) target = $region65
    $region64: #{tpu_custom_call.1} parent=1 // pred_region
      _
    $region65: #{tpu_custom_call.1} parent=1 // pred_fallthru
      _
    // Predicated region
    $region66: #{tpu_custom_call.1} parent=1 // pred_check
      _
    $region67: #{tpu_custom_call.1} parent=1 // pred_check_branch
      %2489 = sbr.rel (0) target = $region69
    $region68: #{tpu_custom_call.1} parent=1 // pred_region
      _
    $region69: #{tpu_custom_call.1} parent=1 // pred_fallthru
      _
    %2490 = vsyncpa [#allocation4], 1
    %2491 = vsyncpa [#allocation6], 1

</llo_original>
